<compile_context>
chip_gen: v6e
topology: v6e:2x2x1
jax: 0.10.0
libtpu: 0.0.40
codegen_flags: <defaults>
</compile_context>

<pallas_src>
import functools

import jax
import jax.numpy as jnp
from jax import lax
from jax.experimental import pallas as pl
from jax.experimental.pallas import tpu as pltpu


_NEG_BIG = -1e30  # "minus infinity" that stays finite under arithmetic


def _attention_kernel(h_ref, w1_ref, b1_ref, w2t_ref, b2_ref, wct_ref, bc_ref,
                      logits_ref, yhat_ref, scores_ref,
                      m_ref, l_ref, acc_ref,
                      *, n_valid, tile_n, ragged):
    n = pl.program_id(0)

    @pl.when(n == 0)
    def _init():
        m_ref[...] = jnp.full_like(m_ref, _NEG_BIG)
        l_ref[...] = jnp.zeros_like(l_ref)
        acc_ref[...] = jnp.zeros_like(acc_ref)

    # H streams in its native dtype (no wrapper-side cast/pad pre-pass).  One bf16 cast
    # of the tile in VMEM feeds both MXU matmuls.
    hb = h_ref[...].astype(jnp.bfloat16)                         # (TILE_N, L) bf16
    if ragged:
        # Rows past n_valid in the last tile are undefined VMEM; zero them so NaN/Inf
        # garbage can never reach the matmuls (p == 0 alone is not enough).
        rows = lax.broadcasted_iota(jnp.int32, (tile_n, 1), 0)
        hb = jnp.where(n * tile_n + rows < n_valid, hb, jnp.zeros_like(hb))

    # attention MLP: tanh(H @ W1 + b1) — bf16 MXU matmul, f32 accumulation.
    z = jnp.tanh(
        jnp.dot(hb, w1_ref[...], preferred_element_type=jnp.float32)
        + b1_ref[...])                                           # (TILE_N, D) f32

    # lane-major scores  s[k, n] = sum_d z[n, d] * W2[d, k] + b2[k]  -> (K, TILE_N)
    # single bf16 MXU pass (no HIGHEST hi/lo decomposition of the whole z tile).
    s = lax.dot_general(
        w2t_ref[...], z.astype(jnp.bfloat16),
        dimension_numbers=(((1,), (1,)), ((), ())),
        preferred_element_type=jnp.float32) + b2_ref[0]          # (1, TILE_N) f32

    if ragged:
        # mask padded instances so they contribute nothing to softmax / M
        col = lax.broadcasted_iota(jnp.int32, s.shape, 1)
        s = jnp.where(n * tile_n + col < n_valid, s, _NEG_BIG)
    scores_ref[...] = s                                          # raw scores, lane-dense

    # online (flash-style) softmax accumulation across the N tiles
    m_prev = m_ref[...]                                          # (1, 1)
    m_new = jnp.maximum(m_prev, jnp.max(s, axis=1, keepdims=True))
    alpha = jnp.exp(m_prev - m_new)                              # rescale on max update
    p = jnp.exp(s - m_new)                                       # (1, TILE_N) f32
    l_ref[...] = alpha * l_ref[...] + jnp.sum(p, axis=1, keepdims=True)

    # acc += p @ H with p kept at ~f32 precision via a manual hi/lo bf16 split of the
    # tiny (1, TILE_N) row; H stays bf16 — no full-tile f32 cast, no HIGHEST.
    p_hi = p.astype(jnp.bfloat16)
    p_lo = (p - p_hi.astype(jnp.float32)).astype(jnp.bfloat16)
    contrib = (jnp.dot(p_hi, hb, preferred_element_type=jnp.float32)
               + jnp.dot(p_lo, hb, preferred_element_type=jnp.float32))
    acc_ref[...] = alpha * acc_ref[...] + contrib                # (1, L)
    m_ref[...] = m_new

    # epilogue on the last tile: M = acc / l, classifier, threshold.
    @pl.when(n == pl.num_programs(0) - 1)
    def _finish():
        m_vec = acc_ref[...] / l_ref[...]                        # (1, L)  == M
        # classifier Linear(L*K -> 1) as VPU multiply + lane reduce (no MXU needed).
        logit = (jnp.sum(m_vec * wct_ref[...], axis=1, keepdims=True)
                 + bc_ref[0])                                    # (1, 1)
        logits_ref[...] = logit
        # sigmoid(x) >= 0.5  <=>  x >= 0
        yhat_ref[...] = (logit >= 0.0).astype(jnp.float32)


def _round_up(x, m):
    return ((x + m - 1) // m) * m


def attention_forward(H, params, *, block_n=512):
    """ADMIL attention pooling. Returns (logits, Y_hat, A) like the torch module.

    H: (N, L) bag of instance features, streamed in its native dtype (f32 or bf16).
    params = (w1, b1, w2, b2, wc, bc) with weights stored as (in_features, out_features)
    — i.e. torch weights transposed.
    """
    w1, b1, w2, b2, wc, bc = params
    N, L = H.shape
    D = w1.shape[1]
    K = w2.shape[1]
    C = wc.shape[1]
    # TODO(synk): K > 1 attention heads and the n_classes > 1 (torch.topk) branch are
    # not implemented; the module defaults (K=1, n_classes=1) are supported.
    assert K == 1 and C == 1, "kernel supports K=1, n_classes=1"

    # Tile the instance axis.  Multi-tile path uses a lane-dense tile (multiple of 128);
    # a single-tile small bag rounds to 16 sublanes (bf16 vreg packing).
    if N <= block_n:
        tile_n = _round_up(max(N, 16), 16)
    else:
        tile_n = _round_up(block_n, 128)
    num_tiles = -(-N // tile_n)
    n_cover = num_tiles * tile_n
    ragged = (n_cover != N)

    # Small resident operands; H itself is NOT touched on the host.
    w1_bf16 = w1.astype(jnp.bfloat16)
    b1_row = b1.reshape(1, D).astype(jnp.float32)
    w2t = jnp.transpose(w2).astype(jnp.bfloat16)        # (K, D)
    b2_vec = b2.reshape(K).astype(jnp.float32)
    wct = jnp.transpose(wc).astype(jnp.float32)         # (C, L*K)
    bc_vec = bc.reshape(C).astype(jnp.float32)

    # Explicit scoped-VMEM budget (double-buffered H tile + temporaries + headroom);
    # matters when block_n is raised on v5e (16 MiB scoped default) / v7x (64 MiB VMEM).
    h_tile_bytes = tile_n * L * H.dtype.itemsize
    vmem_limit = int(min(max(4 * h_tile_bytes + (8 << 20), 16 << 20), 48 << 20))

    kernel = functools.partial(_attention_kernel, n_valid=N, tile_n=tile_n, ragged=ragged)
    const = lambda n: (0, 0)

    # TODO(synk): on v7x, split the N tiles across the two TensorCores (per-core
    # (m, l, acc) partials merged in the wrapper) instead of this single "arbitrary" axis.
    logits, yhat, scores = pl.pallas_call(
        kernel,
        grid=(num_tiles,),
        in_specs=[
            # H streamed in native dtype; add pipeline_mode=pl.Buffered(3) if profiling
            # shows exposed DMA at the chosen tile.
            pl.BlockSpec((tile_n, L), lambda n: (n, 0)),            # H (streamed)
            pl.BlockSpec((L, D), const),                            # W1 (resident, bf16)
            pl.BlockSpec((1, D), const),                            # b1
            pl.BlockSpec((K, D), const),                            # W2^T (bf16)
            pl.BlockSpec(memory_space=pltpu.MemorySpace.SMEM),      # b2 (scalar)
            pl.BlockSpec((C, L * K), const),                        # Wc^T
            pl.BlockSpec(memory_space=pltpu.MemorySpace.SMEM),      # bc (scalar)
        ],
        out_specs=(
            pl.BlockSpec((K, C), const),                            # logits
            pl.BlockSpec((K, C), const),                            # Y_hat
            pl.BlockSpec((K, tile_n), lambda n: (0, n)),            # raw scores (lane-dense)
        ),
        out_shape=(
            jax.ShapeDtypeStruct((K, C), jnp.float32),
            jax.ShapeDtypeStruct((K, C), jnp.float32),
            jax.ShapeDtypeStruct((K, n_cover), jnp.float32),
        ),
        scratch_shapes=[
            pltpu.VMEM((K, 1), jnp.float32),    # running max
            pltpu.VMEM((K, 1), jnp.float32),    # running softmax denominator
            pltpu.VMEM((K, L), jnp.float32),    # running weighted sum (-> M)
        ],
        compiler_params=pltpu.CompilerParams(
            dimension_semantics=("arbitrary",),   # online-softmax carry over N tiles
            vmem_limit_bytes=vmem_limit,
        ),
    )(H, w1_bf16, b1_row, w2t, b2_vec, wct, bc_vec)

    # Exact softmax of the raw scores over valid instances (tiny (K, N) op); this
    # matches F.softmax(A^T, dim=1) and is already in torch's (K, N) layout.
    A = jax.nn.softmax(scores[:, :N], axis=1)
    return logits, yhat, A


if __name__ == "__main__":
    import numpy as np

    # Module defaults L=384, D=128, K=1, n_classes=1; multi-tile bag with a ragged tail
    # (1200 = 2 full 512-row tiles + one partial) to exercise the streaming + masking.
    N, L, D, K, C = 1200, 384, 128, 1, 1

    key = jax.random.PRNGKey(0)
    k_h, k_w1, k_b1, k_w2, k_b2, k_wc, k_bc = jax.random.split(key, 7)

    def uinit(k, shape, fan_in):
        bound = 1.0 / (fan_in ** 0.5)
        return jax.random.uniform(k, shape, jnp.float32, -bound, bound)

    H = jax.random.normal(k_h, (N, L), jnp.float32)
    w1 = uinit(k_w1, (L, D), L)
    b1 = uinit(k_b1, (D,), L)
    w2 = uinit(k_w2, (D, K), D)
    b2 = uinit(k_b2, (K,), D)
    wc = uinit(k_wc, (L * K, C), L * K)
    bc = uinit(k_bc, (C,), L * K)

    logits, yhat, A = attention_forward(H, (w1, b1, w2, b2, wc, bc))
    jax.block_until_ready((logits, yhat, A))

    # float64 torch-math reference on the bf16-rounded operands the kernel feeds to the
    # MXU (H, W1, W2); accumulation in the kernel is f32 so the comparison stays tight.
    f64 = lambda x: np.asarray(x, dtype=np.float64)
    rb16 = lambda x: np.asarray(jnp.asarray(x).astype(jnp.bfloat16).astype(jnp.float32),
                                dtype=np.float64)
    Hb, W1b, W2b = rb16(H), rb16(w1), rb16(w2)
    Z_r = np.tanh(Hb @ W1b + f64(b1))                    # (N, D)
    s_r = (Z_r @ W2b + f64(b2)).T                        # (K, N)
    e_r = np.exp(s_r - s_r.max(axis=1, keepdims=True))
    A_r = e_r / e_r.sum(axis=1, keepdims=True)           # (K, N)
    M_r = A_r @ Hb                                       # (K, L)
    lg_r = M_r @ f64(wc) + f64(bc)                       # (K, C)

    np.testing.assert_allclose(np.asarray(logits), lg_r, atol=5e-4, rtol=1e-3)
    np.testing.assert_allclose(np.asarray(A), A_r, atol=5e-5, rtol=2e-3)
    # sigmoid(x) >= 0.5  <=>  x >= 0 — Y_hat must be consistent with the kernel's logits.
    assert np.array_equal(np.asarray(yhat),
                          (np.asarray(logits) >= 0.0).astype(np.float32)), "Y_hat mismatch"
    print("KERNEL_OK")
</pallas_src>

<mosaic_0001>
module attributes {stable_mosaic.version = 11 : i64} {
  func.func @_attention_kernel(%arg0: i32, %arg1: memref<512x384xf32, #tpu.memory_space<vmem>>, %arg2: memref<384x128xbf16, #tpu.memory_space<vmem>>, %arg3: memref<1x128xf32, #tpu.memory_space<vmem>>, %arg4: memref<1x128xbf16, #tpu.memory_space<vmem>>, %arg5: memref<1xf32, #tpu.memory_space<smem>>, %arg6: memref<1x384xf32, #tpu.memory_space<vmem>>, %arg7: memref<1xf32, #tpu.memory_space<smem>>, %arg8: memref<1x1xf32, #tpu.memory_space<vmem>>, %arg9: memref<1x1xf32, #tpu.memory_space<vmem>>, %arg10: memref<1x512xf32, #tpu.memory_space<vmem>>, %arg11: memref<1x1xf32, #tpu.memory_space<vmem>>, %arg12: memref<1x1xf32, #tpu.memory_space<vmem>>, %arg13: memref<1x384xf32, #tpu.memory_space<vmem>>) attributes {dimension_semantics = [#tpu.dimension_semantics<arbitrary>], iteration_bounds = array<i64: 3>, scalar_prefetch = 0 : i64, scratch_operands = 3 : i64, tpu.core_type = #tpu.core_type<tc>, window_params = [{transform_indices = @transform_0, window_bounds = array<i64: 512, 384>}, {pipeline_mode = #tpu.pipeline_mode<synchronous>, transform_indices = @transform_1, window_bounds = array<i64: 384, 128>}, {pipeline_mode = #tpu.pipeline_mode<synchronous>, transform_indices = @transform_2, window_bounds = array<i64: 1, 128>}, {pipeline_mode = #tpu.pipeline_mode<synchronous>, transform_indices = @transform_3, window_bounds = array<i64: 1, 128>}, {transform_indices = @transform_4, window_bounds = array<i64: 1>}, {pipeline_mode = #tpu.pipeline_mode<synchronous>, transform_indices = @transform_5, window_bounds = array<i64: 1, 384>}, {transform_indices = @transform_6, window_bounds = array<i64: 1>}, {pipeline_mode = #tpu.pipeline_mode<synchronous>, transform_indices = @transform_7, window_bounds = array<i64: 1, 1>}, {pipeline_mode = #tpu.pipeline_mode<synchronous>, transform_indices = @transform_8, window_bounds = array<i64: 1, 1>}, {transform_indices = @transform_9, window_bounds = array<i64: 1, 512>}]} {
    %c0_i32 = arith.constant 0 : i32
    %0 = arith.cmpi eq, %arg0, %c0_i32 : i32
    %1 = arith.extui %0 : i1 to i32
    %c0_i32_0 = arith.constant 0 : i32
    %2 = arith.cmpi ne, %1, %c0_i32_0 : i32
    scf.if %2 {
      %cst_33 = arith.constant -1.000000e+30 : f32
      %67 = vector.broadcast %cst_33 : f32 to vector<1x1xf32>
      %c0_34 = arith.constant 0 : index
      %c0_35 = arith.constant 0 : index
      %68 = vector.load %arg11[%c0_34, %c0_35] : memref<1x1xf32, #tpu.memory_space<vmem>>, vector<1x1xf32>
      tpu.vector_store %arg11[%c0_34, %c0_35], %67 {strides = array<i32>} : memref<1x1xf32, #tpu.memory_space<vmem>>, vector<1x1xf32>,
      %cst_36 = arith.constant 0.000000e+00 : f32
      %69 = vector.broadcast %cst_36 : f32 to vector<1x1xf32>
      %c0_37 = arith.constant 0 : index
      %c0_38 = arith.constant 0 : index
      %70 = vector.load %arg12[%c0_37, %c0_38] : memref<1x1xf32, #tpu.memory_space<vmem>>, vector<1x1xf32>
      tpu.vector_store %arg12[%c0_37, %c0_38], %69 {strides = array<i32>} : memref<1x1xf32, #tpu.memory_space<vmem>>, vector<1x1xf32>,
      %cst_39 = arith.constant 0.000000e+00 : f32
      %71 = vector.broadcast %cst_39 : f32 to vector<1x384xf32>
      %c0_40 = arith.constant 0 : index
      %c0_41 = arith.constant 0 : index
      %72 = vector.load %arg13[%c0_40, %c0_41] : memref<1x384xf32, #tpu.memory_space<vmem>>, vector<1x384xf32>
      tpu.vector_store %arg13[%c0_40, %c0_41], %71 {strides = array<i32>} : memref<1x384xf32, #tpu.memory_space<vmem>>, vector<1x384xf32>,
    } else {
    }
    %c0 = arith.constant 0 : index
    %c0_1 = arith.constant 0 : index
    %3 = vector.load %arg1[%c0, %c0_1] : memref<512x384xf32, #tpu.memory_space<vmem>>, vector<512x384xf32>
    %4 = arith.truncf %3 : vector<512x384xf32> to vector<512x384xbf16>
    %5 = tpu.iota {dimensions = array<i32: 0>} : vector<512x1xi32>
    %c512_i32 = arith.constant 512 : i32
    %6 = arith.muli %arg0, %c512_i32 : i32
    %7 = vector.broadcast %6 : i32 to vector<512x1xi32>
    %8 = arith.addi %7, %5 : vector<512x1xi32>
    %c1200_i32 = arith.constant 1200 : i32
    %9 = vector.broadcast %c1200_i32 : i32 to vector<512x1xi32>
    %10 = arith.cmpi slt, %8, %9 : vector<512x1xi32>
    %cst = arith.constant 0.000000e+00 : bf16
    %11 = vector.broadcast %cst : bf16 to vector<512x384xbf16>
    %12 = vector.shape_cast %10 : vector<512x1xi1> to vector<512x1xi1>
    %13 = vector.broadcast %12 : vector<512x1xi1> to vector<512x384xi1>
    %14 = arith.select %13, %4, %11 : vector<512x384xi1>, vector<512x384xbf16>
    %c0_2 = arith.constant 0 : index
    %c0_3 = arith.constant 0 : index
    %15 = vector.load %arg2[%c0_2, %c0_3] : memref<384x128xbf16, #tpu.memory_space<vmem>>, vector<384x128xbf16>
    %cst_4 = arith.constant dense<0.000000e+00> : vector<512x128xf32>
    %16 = tpu.matmul %14, %15, %cst_4 {dimension_numbers = #tpu.dot_dimension_numbers<[1], [0], [0], [1], [0, 0, 1, 1], [], []>} : vector<512x384xbf16>, vector<384x128xbf16>, vector<512x128xf32> -> vector<512x128xf32>
    %c0_5 = arith.constant 0 : index
    %c0_6 = arith.constant 0 : index
    %17 = vector.load %arg3[%c0_5, %c0_6] : memref<1x128xf32, #tpu.memory_space<vmem>>, vector<1x128xf32>
    %18 = vector.broadcast %17 : vector<1x128xf32> to vector<512x128xf32>
    %19 = arith.addf %16, %18 : vector<512x128xf32>
    %20 = math.tanh %19 : vector<512x128xf32>
    %c0_7 = arith.constant 0 : index
    %c0_8 = arith.constant 0 : index
    %21 = vector.load %arg4[%c0_7, %c0_8] : memref<1x128xbf16, #tpu.memory_space<vmem>>, vector<1x128xbf16>
    %22 = arith.truncf %20 : vector<512x128xf32> to vector<512x128xbf16>
    %cst_9 = arith.constant dense<0.000000e+00> : vector<1x512xf32>
    %23 = tpu.matmul %21, %22, %cst_9 {dimension_numbers = #tpu.dot_dimension_numbers<[1], [1], [0], [0], [0, 0, 1, 0], [], []>} : vector<1x128xbf16>, vector<512x128xbf16>, vector<1x512xf32> -> vector<1x512xf32>
    %c0_10 = arith.constant 0 : index
    %24 = memref.load %arg5[%c0_10] : memref<1xf32, #tpu.memory_space<smem>>
    %25 = vector.broadcast %24 : f32 to vector<1x512xf32>
    %26 = arith.addf %23, %25 : vector<1x512xf32>
    %27 = tpu.iota {dimensions = array<i32: 1>} : vector<1x512xi32>
    %c512_i32_11 = arith.constant 512 : i32
    %28 = arith.muli %arg0, %c512_i32_11 : i32
    %29 = vector.broadcast %28 : i32 to vector<1x512xi32>
    %30 = arith.addi %29, %27 : vector<1x512xi32>
    %c1200_i32_12 = arith.constant 1200 : i32
    %31 = vector.broadcast %c1200_i32_12 : i32 to vector<1x512xi32>
    %32 = arith.cmpi slt, %30, %31 : vector<1x512xi32>
    %cst_13 = arith.constant -1.000000e+30 : f32
    %33 = vector.broadcast %cst_13 : f32 to vector<1x512xf32>
    %34 = arith.select %32, %26, %33 : vector<1x512xi1>, vector<1x512xf32>
    %c0_14 = arith.constant 0 : index
    %c0_15 = arith.constant 0 : index
    %35 = vector.load %arg10[%c0_14, %c0_15] : memref<1x512xf32, #tpu.memory_space<vmem>>, vector<1x512xf32>
    tpu.vector_store %arg10[%c0_14, %c0_15], %34 {strides = array<i32>} : memref<1x512xf32, #tpu.memory_space<vmem>>, vector<1x512xf32>,
    %c0_16 = arith.constant 0 : index
    %c0_17 = arith.constant 0 : index
    %36 = vector.load %arg11[%c0_16, %c0_17] : memref<1x1xf32, #tpu.memory_space<vmem>>, vector<1x1xf32>
    %cst_18 = arith.constant dense<0xFF800000> : vector<1xf32>
    %37 = vector.multi_reduction <maximumf>, %34, %cst_18 [1] : vector<1x512xf32> to vector<1xf32>
    %38 = vector.shape_cast %37 : vector<1xf32> to vector<1x1xf32>
    %39 = arith.maximumf %36, %38 : vector<1x1xf32>
    %40 = arith.subf %36, %39 : vector<1x1xf32>
    %41 = math.exp %40 : vector<1x1xf32>
    %42 = vector.broadcast %39 : vector<1x1xf32> to vector<1x512xf32>
    %43 = arith.subf %34, %42 : vector<1x512xf32>
    %44 = math.exp %43 : vector<1x512xf32>
    %c0_19 = arith.constant 0 : index
    %c0_20 = arith.constant 0 : index
    %45 = vector.load %arg12[%c0_19, %c0_20] : memref<1x1xf32, #tpu.memory_space<vmem>>, vector<1x1xf32>
    %46 = arith.mulf %41, %45 : vector<1x1xf32>
    %cst_21 = arith.constant dense<0.000000e+00> : vector<1xf32>
    %47 = vector.multi_reduction <add>, %44, %cst_21 [1] : vector<1x512xf32> to vector<1xf32>
    %48 = vector.shape_cast %47 : vector<1xf32> to vector<1x1xf32>
    %49 = arith.addf %46, %48 : vector<1x1xf32>
    %c0_22 = arith.constant 0 : index
    %c0_23 = arith.constant 0 : index
    %50 = vector.load %arg12[%c0_22, %c0_23] : memref<1x1xf32, #tpu.memory_space<vmem>>, vector<1x1xf32>
    tpu.vector_store %arg12[%c0_22, %c0_23], %49 {strides = array<i32>} : memref<1x1xf32, #tpu.memory_space<vmem>>, vector<1x1xf32>,
    %51 = arith.truncf %44 : vector<1x512xf32> to vector<1x512xbf16>
    %52 = arith.extf %51 : vector<1x512xbf16> to vector<1x512xf32>
    %53 = arith.subf %44, %52 : vector<1x512xf32>
    %54 = arith.truncf %53 : vector<1x512xf32> to vector<1x512xbf16>
    %cst_24 = arith.constant dense<0.000000e+00> : vector<1x384xf32>
    %55 = tpu.matmul %51, %14, %cst_24 {dimension_numbers = #tpu.dot_dimension_numbers<[1], [0], [0], [1], [0, 0, 1, 1], [], []>} : vector<1x512xbf16>, vector<512x384xbf16>, vector<1x384xf32> -> vector<1x384xf32>
    %cst_25 = arith.constant dense<0.000000e+00> : vector<1x384xf32>
    %56 = tpu.matmul %54, %14, %cst_25 {dimension_numbers = #tpu.dot_dimension_numbers<[1], [0], [0], [1], [0, 0, 1, 1], [], []>} : vector<1x512xbf16>, vector<512x384xbf16>, vector<1x384xf32> -> vector<1x384xf32>
    %57 = arith.addf %55, %56 : vector<1x384xf32>
    %c0_26 = arith.constant 0 : index
    %c0_27 = arith.constant 0 : index
    %58 = vector.load %arg13[%c0_26, %c0_27] : memref<1x384xf32, #tpu.memory_space<vmem>>, vector<1x384xf32>
    %59 = vector.broadcast %41 : vector<1x1xf32> to vector<1x384xf32>
    %60 = arith.mulf %59, %58 : vector<1x384xf32>
    %61 = arith.addf %60, %57 : vector<1x384xf32>
    %c0_28 = arith.constant 0 : index
    %c0_29 = arith.constant 0 : index
    %62 = vector.load %arg13[%c0_28, %c0_29] : memref<1x384xf32, #tpu.memory_space<vmem>>, vector<1x384xf32>
    tpu.vector_store %arg13[%c0_28, %c0_29], %61 {strides = array<i32>} : memref<1x384xf32, #tpu.memory_space<vmem>>, vector<1x384xf32>,
    %c0_30 = arith.constant 0 : index
    %c0_31 = arith.constant 0 : index
    %63 = vector.load %arg11[%c0_30, %c0_31] : memref<1x1xf32, #tpu.memory_space<vmem>>, vector<1x1xf32>
    tpu.vector_store %arg11[%c0_30, %c0_31], %39 {strides = array<i32>} : memref<1x1xf32, #tpu.memory_space<vmem>>, vector<1x1xf32>,
    %c2_i32 = arith.constant 2 : i32
    %64 = arith.cmpi eq, %arg0, %c2_i32 : i32
    %65 = arith.extui %64 : i1 to i32
    %c0_i32_32 = arith.constant 0 : i32
    %66 = arith.cmpi ne, %65, %c0_i32_32 : i32
    scf.if %66 {
      %c0_33 = arith.constant 0 : index
      %c0_34 = arith.constant 0 : index
      %67 = vector.load %arg13[%c0_33, %c0_34] : memref<1x384xf32, #tpu.memory_space<vmem>>, vector<1x384xf32>
      %c0_35 = arith.constant 0 : index
      %c0_36 = arith.constant 0 : index
      %68 = vector.load %arg12[%c0_35, %c0_36] : memref<1x1xf32, #tpu.memory_space<vmem>>, vector<1x1xf32>
      %69 = vector.broadcast %68 : vector<1x1xf32> to vector<1x384xf32>
      %70 = arith.divf %67, %69 : vector<1x384xf32>
      %c0_37 = arith.constant 0 : index
      %c0_38 = arith.constant 0 : index
      %71 = vector.load %arg6[%c0_37, %c0_38] : memref<1x384xf32, #tpu.memory_space<vmem>>, vector<1x384xf32>
      %72 = arith.mulf %70, %71 : vector<1x384xf32>
      %cst_39 = arith.constant dense<0.000000e+00> : vector<1xf32>
      %73 = vector.multi_reduction <add>, %72, %cst_39 [1] : vector<1x384xf32> to vector<1xf32>
      %74 = vector.shape_cast %73 : vector<1xf32> to vector<1x1xf32>
      %c0_40 = arith.constant 0 : index
      %75 = memref.load %arg7[%c0_40] : memref<1xf32, #tpu.memory_space<smem>>
      %76 = vector.broadcast %75 : f32 to vector<1x1xf32>
      %77 = arith.addf %74, %76 : vector<1x1xf32>
      %c0_41 = arith.constant 0 : index
      %c0_42 = arith.constant 0 : index
      %78 = vector.load %arg8[%c0_41, %c0_42] : memref<1x1xf32, #tpu.memory_space<vmem>>, vector<1x1xf32>
      tpu.vector_store %arg8[%c0_41, %c0_42], %77 {strides = array<i32>} : memref<1x1xf32, #tpu.memory_space<vmem>>, vector<1x1xf32>,
      %cst_43 = arith.constant 0.000000e+00 : f32
      %79 = vector.broadcast %cst_43 : f32 to vector<1x1xf32>
      %80 = arith.cmpf oge, %77, %79 : vector<1x1xf32>
      %81 = arith.extui %80 : vector<1x1xi1> to vector<1x1xi32>
      %82 = arith.sitofp %81 : vector<1x1xi32> to vector<1x1xf32>
      %c0_44 = arith.constant 0 : index
      %c0_45 = arith.constant 0 : index
      %83 = vector.load %arg9[%c0_44, %c0_45] : memref<1x1xf32, #tpu.memory_space<vmem>>, vector<1x1xf32>
      tpu.vector_store %arg9[%c0_44, %c0_45], %82 {strides = array<i32>} : memref<1x1xf32, #tpu.memory_space<vmem>>, vector<1x1xf32>,
    } else {
    }
    return
  }
  func.func @transform_0(%arg0: i32) -> (i32, i32) {
    %c0_i32 = arith.constant 0 : i32
    %c0_i32_0 = arith.constant 0 : i32
    return %arg0, %c0_i32 : i32, i32
  }
  func.func @transform_1(%arg0: i32) -> (i32, i32) {
    %c0_i32 = arith.constant 0 : i32
    %c0_i32_0 = arith.constant 0 : i32
    %c0_i32_1 = arith.constant 0 : i32
    return %c0_i32, %c0_i32_0 : i32, i32
  }
  func.func @transform_2(%arg0: i32) -> (i32, i32) {
    %c0_i32 = arith.constant 0 : i32
    %c0_i32_0 = arith.constant 0 : i32
    %c0_i32_1 = arith.constant 0 : i32
    return %c0_i32, %c0_i32_0 : i32, i32
  }
  func.func @transform_3(%arg0: i32) -> (i32, i32) {
    %c0_i32 = arith.constant 0 : i32
    %c0_i32_0 = arith.constant 0 : i32
    %c0_i32_1 = arith.constant 0 : i32
    return %c0_i32, %c0_i32_0 : i32, i32
  }
  func.func @transform_4(%arg0: i32) -> i32 {
    %c0_i32 = arith.constant 0 : i32
    %c0_i32_0 = arith.constant 0 : i32
    return %c0_i32 : i32
  }
  func.func @transform_5(%arg0: i32) -> (i32, i32) {
    %c0_i32 = arith.constant 0 : i32
    %c0_i32_0 = arith.constant 0 : i32
    %c0_i32_1 = arith.constant 0 : i32
    return %c0_i32, %c0_i32_0 : i32, i32
  }
  func.func @transform_6(%arg0: i32) -> i32 {
    %c0_i32 = arith.constant 0 : i32
    %c0_i32_0 = arith.constant 0 : i32
    return %c0_i32 : i32
  }
  func.func @transform_7(%arg0: i32) -> (i32, i32) {
    %c0_i32 = arith.constant 0 : i32
    %c0_i32_0 = arith.constant 0 : i32
    %c0_i32_1 = arith.constant 0 : i32
    return %c0_i32, %c0_i32_0 : i32, i32
  }
  func.func @transform_8(%arg0: i32) -> (i32, i32) {
    %c0_i32 = arith.constant 0 : i32
    %c0_i32_0 = arith.constant 0 : i32
    %c0_i32_1 = arith.constant 0 : i32
    return %c0_i32, %c0_i32_0 : i32, i32
  }
  func.func @transform_9(%arg0: i32) -> (i32, i32) {
    %c0_i32 = arith.constant 0 : i32
    %c0_i32_0 = arith.constant 0 : i32
    return %c0_i32, %arg0 : i32, i32
  }
}

</mosaic_0001>

<llo_original>
// kernel: tpu_custom_call.1
$region0: #{tpu_custom_call.1}
  #allocation0 [shape = 'u32[]', space=smem, size = 0x4, offset = 0x4, fixed_abs, tag = 'smem constant byte address 0x4 - core index']
  #allocation1 [shape = 'u32[144,128]{1,0:T(1,128)}', space=vmem, size = 0x12000, scoped, tag = 'internal scratch']
  #allocation2 [shape = 'f32[1,1]{1,0:T(1,128)}', space=vmem, size = 0x200, scoped, tag = 'scratch operand']
  #allocation3 [shape = 'f32[1,1]{1,0:T(1,128)}', space=vmem, size = 0x200, scoped, tag = 'scratch operand']
  #allocation4 [shape = 'f32[1,384]{1,0:T(1,128)}', space=vmem, size = 0x600, scoped, tag = 'scratch operand']
  #allocation5 [shape = 'f32[1]{0:T(128)S(6)}', space=smem, size = 0x200, scoped, tag = 'scoped memory for tpu_custom_call.1']
  #allocation6 [shape = 'f32[1]{0:T(128)S(6)}', space=smem, size = 0x200, scoped, tag = 'scoped memory for tpu_custom_call.1']
  %s0 = inlined_call_operand.hbm [shape: f32[1200,384], index: 0, kind: input, shape index: {}]
  %s1 = inlined_call_operand.hbm [shape: bf16[384,128], index: 1, kind: input, shape index: {}]
  %s2 = inlined_call_operand.hbm [shape: f32[1,128], index: 2, kind: input, shape index: {}]
  %s3 = inlined_call_operand.hbm [shape: bf16[1,128], index: 3, kind: input, shape index: {}]
  %s4 = inlined_call_operand.<no memory space> [shape: f32[1], index: 4, kind: input, shape index: {}]
  %s5 = inlined_call_operand.hbm [shape: f32[1,384], index: 5, kind: input, shape index: {}]
  %s6 = inlined_call_operand.<no memory space> [shape: f32[1], index: 6, kind: input, shape index: {}]
  %s7 = inlined_call_operand.hbm [shape: f32[1,1], index: 7, kind: output, shape index: {0}]
  %s8 = inlined_call_operand.hbm [shape: f32[1,1], index: 8, kind: output, shape index: {1}]
  %s9 = inlined_call_operand.hbm [shape: f32[1,1536], index: 9, kind: output, shape index: {2}]
  %10 = xla_tuple %s7, %s8, %s9
  %s11 = sld [smem:[#allocation0]]
  $region105: #{tpu_custom_call.1} parent=0
    _
  %s13 = ssub.s32 1, %s11
  %s14 = scalar_select 0, %s13, %s11
  %15 = sst [smem:[#allocation5]] %s4
  %16 = sst [smem:[#allocation6]] %s6
  $region1: #{tpu_custom_call.1} parent=0
    #allocation7 [shape = 'u8[1572864]{0}', space=vmem, size = 0x180000, scoped, tag = 'input window, operand 0']
    #allocation8 [shape = 's32[2]{0}', space=sflag, size = 0x8, scoped, tag = 'scoped memory for tpu_custom_call.1']
    #allocation9 [shape = 's32[2]{0}', space=sflag, size = 0x8, scoped, tag = 'scoped memory for tpu_custom_call.1']
    #allocation10 [shape = 'u8[98304]{0}', space=vmem, size = 0x18000, scoped, tag = 'input window, operand 1, single buffered']
    #allocation11 [shape = 's32[1]{0}', space=sflag, size = 0x4, scoped, tag = 'scoped memory for tpu_custom_call.1']
    #allocation12 [shape = 'u8[512]{0}', space=vmem, size = 0x400, scoped, tag = 'input window, operand 2, single buffered']
    #allocation13 [shape = 'u8[512]{0}', space=vmem, size = 0x400, scoped, tag = 'input window, operand 3, single buffered']
    #allocation14 [shape = 's32[1]{0}', space=sflag, size = 0x4, scoped, tag = 'scoped memory for tpu_custom_call.1']
    #allocation15 [shape = 'u8[1536]{0}', space=vmem, size = 0x800, scoped, tag = 'input window, operand 5, single buffered']
    #allocation16 [shape = 'u8[512]{0}', space=vmem, size = 0x400, scoped, tag = 'output window, operand 0, single buffered']
    #allocation17 [shape = 'u8[512]{0}', space=vmem, size = 0x400, scoped, tag = 'output window, operand 1, single buffered']
    #allocation18 [shape = 's32[1]{0}', space=sflag, size = 0x4, scoped, tag = 'scoped memory for tpu_custom_call.1']
    #allocation19 [shape = 'u8[4096]{0}', space=vmem, size = 0x1000, scoped, tag = 'output window, operand 2']
    %17 = vsyncpa [#allocation8], 0
    %s18 = scalar_lea.sflag [#allocation8], 1
    %19 = vsyncpa %s18, 0
    %20 = vsyncpa [#allocation11], 0
    %21 = vsyncpa [#allocation14], 0
    %22 = vsyncpa [#allocation9], 0
    %23 = vsyncpa [#allocation18], 0
    loop: start=0, step=1, limit=5
    $region2: #{tpu_custom_call.1} parent=1 // loop_pre_header
      _
    $region3: #{tpu_custom_call.1} parent=1 // loop_header
      %s25 = sphi 0, %s29
      %p26 = scmp.ge.s32.totalorder %s25, 5
      %s35 = sphi 0, %s37
      %s38 = sphi 0, %s35
      %s39 = sphi 0, %s38
      %s55 = sphi 0, %s39
      %s59 = sphi 0, %s59
      %s61 = sphi 0, %s59
      %s62 = sphi 0, %s61
      %s76 = sphi 0, %s62
      %s80 = sphi 0, %s80
      %s82 = sphi 0, %s80
      %s83 = sphi 0, %s82
      %s97 = sphi 0, %s83
      %s101 = sphi 0, %s101
      %s103 = sphi 0, %s101
      %s104 = sphi 0, %s103
      %s118 = sphi 0, %s104
      %s122 = sphi 0, %s122
      %s124 = sphi 0, %s122
      %s125 = sphi 0, %s124
      %s139 = sphi 0, %s125
      %s143 = sphi 0, %s143
      %s145 = sphi 0, %s143
      %s146 = sphi 0, %s145
      %s160 = sphi 0, %s146
      %s164 = sphi 0, %s164
      %s166 = sphi 0, %s164
      %s167 = sphi 0, %s166
      %s181 = sphi 0, %s167
      %s185 = sphi 0, %s185
      %s187 = sphi 0, %s185
      %s188 = sphi 0, %s187
      %s202 = sphi 0, %s188
      %s206 = sphi 0, %s206
      %s208 = sphi 0, %s206
      %s209 = sphi 0, %s208
      %s223 = sphi 0, %s209
      %s229 = sphi 0, %s231
      %s232 = sphi 0, %s229
      %s233 = sphi 0, %s232
      %s249 = sphi 0, %s233
    $region4: #{tpu_custom_call.1} parent=1 // loop_header_branch
      %28 = sbr.rel (%p26) target = $region8
    $region5: #{tpu_custom_call.1} parent=1 // loop_body
      %s30 = ssub.s32 %s25, 1
      %s31 = ssub.s32 %s25, 2
      %s32 = sadd.s32 %s25, 1
      %s33 = ssub.s32 %s25, %s32
      %p34 = scmp.eq.s32.totalorder %s33, 0
      %s36 = sadd.s32 %s35, 1
      %s37 = scalar_select %p34, %s35, %s36
      %p40 = pneg %p34
      %p41 = scmp.eq.s32.totalorder %s25, 2
      %p42 = por %p40, %p41
      %p43 = scmp.ne.s32.totalorder %s35, %s38
      %p44 = scmp.eq.s32.totalorder %s25, 0
      %p45 = por %p43, %p44
      %p46 = scmp.ne.s32.totalorder %s35, %s38
      %p47 = scmp.eq.s32.totalorder %s30, 2
      %p48 = por %p46, %p47
      %p49 = scmp.ne.s32.totalorder %s38, %s39
      %p50 = scmp.eq.s32.totalorder %s30, 0
      %p51 = por %p49, %p50
      %p52 = scmp.ne.s32.totalorder %s38, %s39
      %p53 = scmp.eq.s32.totalorder %s31, 2
      %p54 = por %p52, %p53
      %p56 = scmp.ne.s32.totalorder %s39, %s55
      %p57 = scmp.eq.s32.totalorder %s31, 0
      %p58 = por %p56, %p57
      %s60 = sadd.s32 %s59, 1
      %p63 = scmp.eq.s32.totalorder %s25, 2
      %p64 = scmp.ne.s32.totalorder %s59, %s61
      %p65 = scmp.eq.s32.totalorder %s25, 0
      %p66 = por %p64, %p65
      %p67 = scmp.ne.s32.totalorder %s59, %s61
      %p68 = scmp.eq.s32.totalorder %s30, 2
      %p69 = por %p67, %p68
      %p70 = scmp.ne.s32.totalorder %s61, %s62
      %p71 = scmp.eq.s32.totalorder %s30, 0
      %p72 = por %p70, %p71
      %p73 = scmp.ne.s32.totalorder %s61, %s62
      %p74 = scmp.eq.s32.totalorder %s31, 2
      %p75 = por %p73, %p74
      %p77 = scmp.ne.s32.totalorder %s62, %s76
      %p78 = scmp.eq.s32.totalorder %s31, 0
      %p79 = por %p77, %p78
      %s81 = sadd.s32 %s80, 1
      %p84 = scmp.eq.s32.totalorder %s25, 2
      %p85 = scmp.ne.s32.totalorder %s80, %s82
      %p86 = scmp.eq.s32.totalorder %s25, 0
      %p87 = por %p85, %p86
      %p88 = scmp.ne.s32.totalorder %s80, %s82
      %p89 = scmp.eq.s32.totalorder %s30, 2
      %p90 = por %p88, %p89
      %p91 = scmp.ne.s32.totalorder %s82, %s83
      %p92 = scmp.eq.s32.totalorder %s30, 0
      %p93 = por %p91, %p92
      %p94 = scmp.ne.s32.totalorder %s82, %s83
      %p95 = scmp.eq.s32.totalorder %s31, 2
      %p96 = por %p94, %p95
      %p98 = scmp.ne.s32.totalorder %s83, %s97
      %p99 = scmp.eq.s32.totalorder %s31, 0
      %p100 = por %p98, %p99
      %s102 = sadd.s32 %s101, 1
      %p105 = scmp.eq.s32.totalorder %s25, 2
      %p106 = scmp.ne.s32.totalorder %s101, %s103
      %p107 = scmp.eq.s32.totalorder %s25, 0
      %p108 = por %p106, %p107
      %p109 = scmp.ne.s32.totalorder %s101, %s103
      %p110 = scmp.eq.s32.totalorder %s30, 2
      %p111 = por %p109, %p110
      %p112 = scmp.ne.s32.totalorder %s103, %s104
      %p113 = scmp.eq.s32.totalorder %s30, 0
      %p114 = por %p112, %p113
      %p115 = scmp.ne.s32.totalorder %s103, %s104
      %p116 = scmp.eq.s32.totalorder %s31, 2
      %p117 = por %p115, %p116
      %p119 = scmp.ne.s32.totalorder %s104, %s118
      %p120 = scmp.eq.s32.totalorder %s31, 0
      %p121 = por %p119, %p120
      %s123 = sadd.s32 %s122, 1
      %p126 = scmp.eq.s32.totalorder %s25, 2
      %p127 = scmp.ne.s32.totalorder %s122, %s124
      %p128 = scmp.eq.s32.totalorder %s25, 0
      %p129 = por %p127, %p128
      %p130 = scmp.ne.s32.totalorder %s122, %s124
      %p131 = scmp.eq.s32.totalorder %s30, 2
      %p132 = por %p130, %p131
      %p133 = scmp.ne.s32.totalorder %s124, %s125
      %p134 = scmp.eq.s32.totalorder %s30, 0
      %p135 = por %p133, %p134
      %p136 = scmp.ne.s32.totalorder %s124, %s125
      %p137 = scmp.eq.s32.totalorder %s31, 2
      %p138 = por %p136, %p137
      %p140 = scmp.ne.s32.totalorder %s125, %s139
      %p141 = scmp.eq.s32.totalorder %s31, 0
      %p142 = por %p140, %p141
      %s144 = sadd.s32 %s143, 1
      %p147 = scmp.eq.s32.totalorder %s25, 2
      %p148 = scmp.ne.s32.totalorder %s143, %s145
      %p149 = scmp.eq.s32.totalorder %s25, 0
      %p150 = por %p148, %p149
      %p151 = scmp.ne.s32.totalorder %s143, %s145
      %p152 = scmp.eq.s32.totalorder %s30, 2
      %p153 = por %p151, %p152
      %p154 = scmp.ne.s32.totalorder %s145, %s146
      %p155 = scmp.eq.s32.totalorder %s30, 0
      %p156 = por %p154, %p155
      %p157 = scmp.ne.s32.totalorder %s145, %s146
      %p158 = scmp.eq.s32.totalorder %s31, 2
      %p159 = por %p157, %p158
      %p161 = scmp.ne.s32.totalorder %s146, %s160
      %p162 = scmp.eq.s32.totalorder %s31, 0
      %p163 = por %p161, %p162
      %s165 = sadd.s32 %s164, 1
      %p168 = scmp.eq.s32.totalorder %s25, 2
      %p169 = scmp.ne.s32.totalorder %s164, %s166
      %p170 = scmp.eq.s32.totalorder %s25, 0
      %p171 = por %p169, %p170
      %p172 = scmp.ne.s32.totalorder %s164, %s166
      %p173 = scmp.eq.s32.totalorder %s30, 2
      %p174 = por %p172, %p173
      %p175 = scmp.ne.s32.totalorder %s166, %s167
      %p176 = scmp.eq.s32.totalorder %s30, 0
      %p177 = por %p175, %p176
      %p178 = scmp.ne.s32.totalorder %s166, %s167
      %p179 = scmp.eq.s32.totalorder %s31, 2
      %p180 = por %p178, %p179
      %p182 = scmp.ne.s32.totalorder %s167, %s181
      %p183 = scmp.eq.s32.totalorder %s31, 0
      %p184 = por %p182, %p183
      %s186 = sadd.s32 %s185, 1
      %p189 = scmp.eq.s32.totalorder %s25, 2
      %p190 = scmp.ne.s32.totalorder %s185, %s187
      %p191 = scmp.eq.s32.totalorder %s25, 0
      %p192 = por %p190, %p191
      %p193 = scmp.ne.s32.totalorder %s185, %s187
      %p194 = scmp.eq.s32.totalorder %s30, 2
      %p195 = por %p193, %p194
      %p196 = scmp.ne.s32.totalorder %s187, %s188
      %p197 = scmp.eq.s32.totalorder %s30, 0
      %p198 = por %p196, %p197
      %p199 = scmp.ne.s32.totalorder %s187, %s188
      %p200 = scmp.eq.s32.totalorder %s31, 2
      %p201 = por %p199, %p200
      %p203 = scmp.ne.s32.totalorder %s188, %s202
      %p204 = scmp.eq.s32.totalorder %s31, 0
      %p205 = por %p203, %p204
      %s207 = sadd.s32 %s206, 1
      %p210 = scmp.eq.s32.totalorder %s25, 2
      %p211 = scmp.ne.s32.totalorder %s206, %s208
      %p212 = scmp.eq.s32.totalorder %s25, 0
      %p213 = por %p211, %p212
      %p214 = scmp.ne.s32.totalorder %s206, %s208
      %p215 = scmp.eq.s32.totalorder %s30, 2
      %p216 = por %p214, %p215
      %p217 = scmp.ne.s32.totalorder %s208, %s209
      %p218 = scmp.eq.s32.totalorder %s30, 0
      %p219 = por %p217, %p218
      %p220 = scmp.ne.s32.totalorder %s208, %s209
      %p221 = scmp.eq.s32.totalorder %s31, 2
      %p222 = por %p220, %p221
      %p224 = scmp.ne.s32.totalorder %s209, %s223
      %p225 = scmp.eq.s32.totalorder %s31, 0
      %p226 = por %p224, %p225
      %s227 = ssub.s32 %s25, %s32
      %p228 = scmp.eq.s32.totalorder %s227, 0
      %s230 = sadd.s32 %s229, 1
      %s231 = scalar_select %p228, %s229, %s230
      %p234 = pneg %p228
      %p235 = scmp.eq.s32.totalorder %s25, 2
      %p236 = por %p234, %p235
      %p237 = scmp.ne.s32.totalorder %s229, %s232
      %p238 = scmp.eq.s32.totalorder %s25, 0
      %p239 = por %p237, %p238
      %p240 = scmp.ne.s32.totalorder %s229, %s232
      %p241 = scmp.eq.s32.totalorder %s30, 2
      %p242 = por %p240, %p241
      %p243 = scmp.ne.s32.totalorder %s232, %s233
      %p244 = scmp.eq.s32.totalorder %s30, 0
      %p245 = por %p243, %p244
      %p246 = scmp.ne.s32.totalorder %s232, %s233
      %p247 = scmp.eq.s32.totalorder %s31, 2
      %p248 = por %p246, %p247
      %p250 = scmp.ne.s32.totalorder %s233, %s249
      %p251 = scmp.eq.s32.totalorder %s31, 0
      %p252 = por %p250, %p251
      %p253 = scmp.le.s32.totalorder 1, %s25
      %p254 = scmp.lt.s32.totalorder %s25, 4
      %p255 = pnand %p253, %p254
      %p256 = pneg %p255
      // Predicated region
      $region9: #{tpu_custom_call.1} parent=5 // pred_check
        _
      $region10: #{tpu_custom_call.1} parent=5 // pred_check_branch
        %258 = sbr.rel (%p255) target = $region12
      $region11: #{tpu_custom_call.1} parent=5 // pred_region
        %s259 = ssub.s32 %s25, 1
        // Predicated region
        $region13: #{tpu_custom_call.1} parent=11 // pred_check
          %p260 = pneg %p72
        $region14: #{tpu_custom_call.1} parent=11 // pred_check_branch
          %262 = sbr.rel (%p260) target = $region16
        $region15: #{tpu_custom_call.1} parent=11 // pred_region
          %s264 = ssub.s32 3072, 3072
          %265 = vsyncadd [#allocation11], %s264
          %s266 = sshll.u32 [#allocation10], 4
          %s267 = int_to_ptr.vmem [resolvable:$true] %s266
          %272 = dma.hbm_to_vmem [thread:$0]  %s1, 3072, %s267, [#allocation11], 64, 64, 4
        $region16: #{tpu_custom_call.1} parent=11 // pred_fallthru
          _
        // Predicated region
        $region17: #{tpu_custom_call.1} parent=11 // pred_check
          %p273 = pneg %p93
        $region18: #{tpu_custom_call.1} parent=11 // pred_check_branch
          %275 = sbr.rel (%p273) target = $region20
        $region19: #{tpu_custom_call.1} parent=11 // pred_region
          %s277 = ssub.s32 16, 16
          %278 = vsyncadd [#allocation11], %s277
          %s280 = sshll.u32 [#allocation12], 4
          %s281 = int_to_ptr.vmem [resolvable:$true] %s280
          %283 = dma.hbm_to_vmem [thread:$0]  %s2, 16, %s281, [#allocation11]
        $region20: #{tpu_custom_call.1} parent=11 // pred_fallthru
          _
        // Predicated region
        $region21: #{tpu_custom_call.1} parent=11 // pred_check
          %p284 = pneg %p114
        $region22: #{tpu_custom_call.1} parent=11 // pred_check_branch
          %286 = sbr.rel (%p284) target = $region24
        $region23: #{tpu_custom_call.1} parent=11 // pred_region
          %s288 = ssub.s32 16, 16
          %289 = vsyncadd [#allocation14], %s288
          %s291 = sshll.u32 [#allocation13], 4
          %s292 = int_to_ptr.vmem [resolvable:$true] %s291
          %294 = dma.hbm_to_vmem [thread:$0]  %s3, 16, %s292, [#allocation14]
        $region24: #{tpu_custom_call.1} parent=11 // pred_fallthru
          _
        // Predicated region
        $region25: #{tpu_custom_call.1} parent=11 // pred_check
          %p295 = pneg %p135
        $region26: #{tpu_custom_call.1} parent=11 // pred_check_branch
          %297 = sbr.rel (%p295) target = $region28
        $region27: #{tpu_custom_call.1} parent=11 // pred_region
          _
        $region28: #{tpu_custom_call.1} parent=11 // pred_fallthru
          _
        // Predicated region
        $region29: #{tpu_custom_call.1} parent=11 // pred_check
          %p298 = pneg %p156
        $region30: #{tpu_custom_call.1} parent=11 // pred_check_branch
          %300 = sbr.rel (%p298) target = $region32
        $region31: #{tpu_custom_call.1} parent=11 // pred_region
          %s302 = ssub.s32 48, 48
          %303 = vsyncadd [#allocation14], %s302
          %s305 = sshll.u32 [#allocation15], 4
          %s306 = int_to_ptr.vmem [resolvable:$true] %s305
          %308 = dma.hbm_to_vmem [thread:$0]  %s5, 48, %s306, [#allocation14]
        $region32: #{tpu_custom_call.1} parent=11 // pred_fallthru
          _
        // Predicated region
        $region33: #{tpu_custom_call.1} parent=11 // pred_check
          %p309 = pneg %p177
        $region34: #{tpu_custom_call.1} parent=11 // pred_check_branch
          %311 = sbr.rel (%p309) target = $region36
        $region35: #{tpu_custom_call.1} parent=11 // pred_region
          _
        $region36: #{tpu_custom_call.1} parent=11 // pred_fallthru
          _
      $region12: #{tpu_custom_call.1} parent=5 // pred_fallthru
        _
      %p312 = scmp.lt.s32.totalorder %s25, 3
      // Predicated region
      $region37: #{tpu_custom_call.1} parent=5 // pred_check
        %p313 = pneg %p312
      $region38: #{tpu_custom_call.1} parent=5 // pred_check_branch
        %315 = sbr.rel (%p313) target = $region40
      $region39: #{tpu_custom_call.1} parent=5 // pred_region
        // Predicated region
        $region41: #{tpu_custom_call.1} parent=39 // pred_check
          %p316 = pneg %p45
        $region42: #{tpu_custom_call.1} parent=39 // pred_check_branch
          %318 = sbr.rel (%p316) target = $region44
        $region43: #{tpu_custom_call.1} parent=39 // pred_region
          %s319 = sand.u32 %s35, 1
          %s320 = scalar_lea.sflag [#allocation8], %s319
          %s321 = sand.u32 %s35, 1
          %s322 = smul.addr %s321, 1536
          %s323 = scalar_lea.vmem [#allocation7], %s322
          %s324 = smul.u32 64, %s25
          %s325 = ssub.s32 150, %s324
          %p326 = scmp.lt.s32.totalorder %s325, 64
          %s327 = scalar_select %p326, %s325, 64
          %s328 = smul.u32 128, %s327
          %s329 = smul.u32 %s328, 3
          %s331 = ssub.s32 24576, %s329
          %332 = vsyncadd %s320, %s331
          %p333 = scmp.ne.s32.totalorder 0, %s329
          %s334 = smul.addr %s324, 3
          %s335 = smul.addr %s334, 128
          %s336 = scalar_lea.hbm %s0, %s335
          %s337 = smul.u32 24, %s327
          %s338 = sshll.u32 %s323, 4
          %s339 = int_to_ptr.vmem [resolvable:$true] %s338
          %s340 = sshll.u32 %s337, 4
          %344 = dma.hbm_to_vmem [thread:$0]  (%p333), %s336, %s340, %s339, %s320, 384, 384, 24
        $region44: #{tpu_custom_call.1} parent=39 // pred_fallthru
          _
      $region40: #{tpu_custom_call.1} parent=5 // pred_fallthru
        _
      %p345 = scmp.le.s32.totalorder 1, %s25
      %p346 = scmp.lt.s32.totalorder %s25, 4
      %p347 = pnand %p345, %p346
      %p348 = pneg %p347
      // Predicated region
      $region45: #{tpu_custom_call.1} parent=5 // pred_check
        _
      $region46: #{tpu_custom_call.1} parent=5 // pred_check_branch
        %350 = sbr.rel (%p347) target = $region48
      $region47: #{tpu_custom_call.1} parent=5 // pred_region
        %s351 = ssub.s32 %s25, 1
        %s352 = sand.u32 %s38, 1
        %s353 = scalar_lea.sflag [#allocation8], %s352
        %s354 = sand.u32 %s38, 1
        %s355 = smul.addr %s354, 1536
        %s356 = scalar_lea.vmem [#allocation7], %s355
        // Predicated region
        $region49: #{tpu_custom_call.1} parent=47 // pred_check
          %p357 = pneg %p51
        $region50: #{tpu_custom_call.1} parent=47 // pred_check_branch
          %359 = sbr.rel (%p357) target = $region52
        $region51: #{tpu_custom_call.1} parent=47 // pred_region
          %360 = dma.done %s353, 24576
        $region52: #{tpu_custom_call.1} parent=47 // pred_fallthru
          _
        // Predicated region
        $region53: #{tpu_custom_call.1} parent=47 // pred_check
          %p361 = pneg %p72
        $region54: #{tpu_custom_call.1} parent=47 // pred_check_branch
          %363 = sbr.rel (%p361) target = $region56
        $region55: #{tpu_custom_call.1} parent=47 // pred_region
          %364 = dma.done [#allocation11], 3072
        $region56: #{tpu_custom_call.1} parent=47 // pred_fallthru
          _
        // Predicated region
        $region57: #{tpu_custom_call.1} parent=47 // pred_check
          %p365 = pneg %p93
        $region58: #{tpu_custom_call.1} parent=47 // pred_check_branch
          %367 = sbr.rel (%p365) target = $region60
        $region59: #{tpu_custom_call.1} parent=47 // pred_region
          %368 = dma.done [#allocation11], 16
        $region60: #{tpu_custom_call.1} parent=47 // pred_fallthru
          _
        // Predicated region
        $region61: #{tpu_custom_call.1} parent=47 // pred_check
          %p369 = pneg %p114
        $region62: #{tpu_custom_call.1} parent=47 // pred_check_branch
          %371 = sbr.rel (%p369) target = $region64
        $region63: #{tpu_custom_call.1} parent=47 // pred_region
          %372 = dma.done [#allocation14], 16
        $region64: #{tpu_custom_call.1} parent=47 // pred_fallthru
          _
        // Predicated region
        $region65: #{tpu_custom_call.1} parent=47 // pred_check
          %p373 = pneg %p156
        $region66: #{tpu_custom_call.1} parent=47 // pred_check_branch
          %375 = sbr.rel (%p373) target = $region68
        $region67: #{tpu_custom_call.1} parent=47 // pred_region
          %376 = dma.done [#allocation14], 48
        $region68: #{tpu_custom_call.1} parent=47 // pred_fallthru
          _
        %s377 = sand.u32 %s38, 1
        %s378 = scalar_lea.sflag [#allocation8], %s377
        %s379 = sand.u32 %s38, 1
        %s380 = smul.addr %s379, 1536
        %s381 = scalar_lea.vmem [#allocation7], %s380
        %p382 = pneg %p51
        %p383 = pneg %p48
        %p384 = pneg %p72
        %p385 = pneg %p69
        %p386 = pneg %p93
        %p387 = pneg %p90
        %p388 = pneg %p114
        %p389 = pneg %p111
        %p390 = pneg %p135
        %p391 = pneg %p132
        %p392 = pneg %p156
        %p393 = pneg %p153
        %p394 = pneg %p177
        %p395 = pneg %p174
        %p396 = pneg %p198
        %p397 = pneg %p195
        %p398 = pneg %p219
        %p399 = pneg %p216
        %p400 = pneg %p245
        %p401 = pneg %p242
        %s402 = sand.u32 %s30, 1
        %s403 = scalar_lea.sflag [#allocation9], %s402
        %s404 = sand.u32 %s232, 1
        %s405 = smul.addr %s404, 4
        %s406 = scalar_lea.vmem [#allocation19], %s405
        %s407 = smul.u32 64, %s30
        %s408 = ssub.s32 150, %s407
        %p409 = scmp.lt.s32.totalorder %s408, 64
        %s410 = scalar_select %p409, %s408, 64
        %s411 = smul.u32 128, %s410
        %s412 = smul.u32 %s411, 3
        %s413 = smul.u32 4, %s30
        %p417 = scmp.eq.s32.totalorder %s30, 0
        // Predicated region
        $region69: #{tpu_custom_call.1} parent=47 // pred_check
          %p418 = pneg %p417
        $region70: #{tpu_custom_call.1} parent=47 // pred_check_branch
          %420 = sbr.rel (%p418) target = $region72
        $region71: #{tpu_custom_call.1} parent=47 // pred_region
          %vm421 = vcmask 0
          %422 = vst.msk [vmem:[#allocation2] sm:$0x1] %vm421, -1e+30
          %423 = vst.msk [vmem:[#allocation3] sm:$0x1] %vm421, 0.0
          %v424 = vlaneseq
          %vm425 = vcmp.ge.s32.totalorder %v424, 0
          %vm426 = vcmp.lt.s32.totalorder %v424, 384
          %vm427 = vmand %vm425, %vm426
          %428 = vst.msk [vmem:[#allocation4] sm:$0x7] %vm427, 0.0
        $region72: #{tpu_custom_call.1} parent=47 // pred_fallthru
          _
        %v429 = vld [vmem:[%s356] sm:$0xff]
        %v430 = vld [vmem:[%s356 + $0x8] sm:$0xff]
        %v431 = vld [vmem:[%s356 + $0x10] sm:$0xff]
        %v432 = vld [vmem:[%s356 + $0x18] sm:$0xff]
        %v433 = vld [vmem:[%s356 + $0x20] sm:$0xff]
        %v434 = vld [vmem:[%s356 + $0x28] sm:$0xff]
        %v435 = vld [vmem:[%s356 + $0x30] sm:$0xff]
        %v436 = vld [vmem:[%s356 + $0x38] sm:$0xff]
        %v437 = vld [vmem:[%s356 + $0x40] sm:$0xff]
        %v438 = vld [vmem:[%s356 + $0x48] sm:$0xff]
        %v439 = vld [vmem:[%s356 + $0x50] sm:$0xff]
        %v440 = vld [vmem:[%s356 + $0x58] sm:$0xff]
        %v441 = vld [vmem:[%s356 + $0x60] sm:$0xff]
        %v442 = vld [vmem:[%s356 + $0x68] sm:$0xff]
        %v443 = vld [vmem:[%s356 + $0x70] sm:$0xff]
        %v444 = vld [vmem:[%s356 + $0x78] sm:$0xff]
        %v445 = vld [vmem:[%s356 + $0x80] sm:$0xff]
        %v446 = vld [vmem:[%s356 + $0x88] sm:$0xff]
        %v447 = vld [vmem:[%s356 + $0x90] sm:$0xff]
        %v448 = vld [vmem:[%s356 + $0x98] sm:$0xff]
        %v449 = vld [vmem:[%s356 + $0xa0] sm:$0xff]
        %v450 = vld [vmem:[%s356 + $0xa8] sm:$0xff]
        %v451 = vld [vmem:[%s356 + $0xb0] sm:$0xff]
        %v452 = vld [vmem:[%s356 + $0xb8] sm:$0xff]
        %v453 = vld [vmem:[%s356 + $0xc0] sm:$0xff]
        %v454 = vld [vmem:[%s356 + $0xc8] sm:$0xff]
        %v455 = vld [vmem:[%s356 + $0xd0] sm:$0xff]
        %v456 = vld [vmem:[%s356 + $0xd8] sm:$0xff]
        %v457 = vld [vmem:[%s356 + $0xe0] sm:$0xff]
        %v458 = vld [vmem:[%s356 + $0xe8] sm:$0xff]
        %v459 = vld [vmem:[%s356 + $0xf0] sm:$0xff]
        %v460 = vld [vmem:[%s356 + $0xf8] sm:$0xff]
        %v461 = vld [vmem:[%s356 + $0x100] sm:$0xff]
        %v462 = vld [vmem:[%s356 + $0x108] sm:$0xff]
        %v463 = vld [vmem:[%s356 + $0x110] sm:$0xff]
        %v464 = vld [vmem:[%s356 + $0x118] sm:$0xff]
        %v465 = vld [vmem:[%s356 + $0x120] sm:$0xff]
        %v466 = vld [vmem:[%s356 + $0x128] sm:$0xff]
        %v467 = vld [vmem:[%s356 + $0x130] sm:$0xff]
        %v468 = vld [vmem:[%s356 + $0x138] sm:$0xff]
        %v469 = vld [vmem:[%s356 + $0x140] sm:$0xff]
        %v470 = vld [vmem:[%s356 + $0x148] sm:$0xff]
        %v471 = vld [vmem:[%s356 + $0x150] sm:$0xff]
        %v472 = vld [vmem:[%s356 + $0x158] sm:$0xff]
        %v473 = vld [vmem:[%s356 + $0x160] sm:$0xff]
        %v474 = vld [vmem:[%s356 + $0x168] sm:$0xff]
        %v475 = vld [vmem:[%s356 + $0x170] sm:$0xff]
        %v476 = vld [vmem:[%s356 + $0x178] sm:$0xff]
        %v477 = vld [vmem:[%s356 + $0x180] sm:$0xff]
        %v478 = vld [vmem:[%s356 + $0x188] sm:$0xff]
        %v479 = vld [vmem:[%s356 + $0x190] sm:$0xff]
        %v480 = vld [vmem:[%s356 + $0x198] sm:$0xff]
        %v481 = vld [vmem:[%s356 + $0x1a0] sm:$0xff]
        %v482 = vld [vmem:[%s356 + $0x1a8] sm:$0xff]
        %v483 = vld [vmem:[%s356 + $0x1b0] sm:$0xff]
        %v484 = vld [vmem:[%s356 + $0x1b8] sm:$0xff]
        %v485 = vld [vmem:[%s356 + $0x1c0] sm:$0xff]
        %v486 = vld [vmem:[%s356 + $0x1c8] sm:$0xff]
        %v487 = vld [vmem:[%s356 + $0x1d0] sm:$0xff]
        %v488 = vld [vmem:[%s356 + $0x1d8] sm:$0xff]
        %v489 = vld [vmem:[%s356 + $0x1e0] sm:$0xff]
        %v490 = vld [vmem:[%s356 + $0x1e8] sm:$0xff]
        %v491 = vld [vmem:[%s356 + $0x1f0] sm:$0xff]
        %v492 = vld [vmem:[%s356 + $0x1f8] sm:$0xff]
        %v493 = vld [vmem:[%s356 + $0x200] sm:$0xff]
        %v494 = vld [vmem:[%s356 + $0x208] sm:$0xff]
        %v495 = vld [vmem:[%s356 + $0x210] sm:$0xff]
        %v496 = vld [vmem:[%s356 + $0x218] sm:$0xff]
        %v497 = vld [vmem:[%s356 + $0x220] sm:$0xff]
        %v498 = vld [vmem:[%s356 + $0x228] sm:$0xff]
        %v499 = vld [vmem:[%s356 + $0x230] sm:$0xff]
        %v500 = vld [vmem:[%s356 + $0x238] sm:$0xff]
        %v501 = vld [vmem:[%s356 + $0x240] sm:$0xff]
        %v502 = vld [vmem:[%s356 + $0x248] sm:$0xff]
        %v503 = vld [vmem:[%s356 + $0x250] sm:$0xff]
        %v504 = vld [vmem:[%s356 + $0x258] sm:$0xff]
        %v505 = vld [vmem:[%s356 + $0x260] sm:$0xff]
        %v506 = vld [vmem:[%s356 + $0x268] sm:$0xff]
        %v507 = vld [vmem:[%s356 + $0x270] sm:$0xff]
        %v508 = vld [vmem:[%s356 + $0x278] sm:$0xff]
        %v509 = vld [vmem:[%s356 + $0x280] sm:$0xff]
        %v510 = vld [vmem:[%s356 + $0x288] sm:$0xff]
        %v511 = vld [vmem:[%s356 + $0x290] sm:$0xff]
        %v512 = vld [vmem:[%s356 + $0x298] sm:$0xff]
        %v513 = vld [vmem:[%s356 + $0x2a0] sm:$0xff]
        %v514 = vld [vmem:[%s356 + $0x2a8] sm:$0xff]
        %v515 = vld [vmem:[%s356 + $0x2b0] sm:$0xff]
        %v516 = vld [vmem:[%s356 + $0x2b8] sm:$0xff]
        %v517 = vld [vmem:[%s356 + $0x2c0] sm:$0xff]
        %v518 = vld [vmem:[%s356 + $0x2c8] sm:$0xff]
        %v519 = vld [vmem:[%s356 + $0x2d0] sm:$0xff]
        %v520 = vld [vmem:[%s356 + $0x2d8] sm:$0xff]
        %v521 = vld [vmem:[%s356 + $0x2e0] sm:$0xff]
        %v522 = vld [vmem:[%s356 + $0x2e8] sm:$0xff]
        %v523 = vld [vmem:[%s356 + $0x2f0] sm:$0xff]
        %v524 = vld [vmem:[%s356 + $0x2f8] sm:$0xff]
        %v525 = vld [vmem:[%s356 + $0x300] sm:$0xff]
        %v526 = vld [vmem:[%s356 + $0x308] sm:$0xff]
        %v527 = vld [vmem:[%s356 + $0x310] sm:$0xff]
        %v528 = vld [vmem:[%s356 + $0x318] sm:$0xff]
        %v529 = vld [vmem:[%s356 + $0x320] sm:$0xff]
        %v530 = vld [vmem:[%s356 + $0x328] sm:$0xff]
        %v531 = vld [vmem:[%s356 + $0x330] sm:$0xff]
        %v532 = vld [vmem:[%s356 + $0x338] sm:$0xff]
        %v533 = vld [vmem:[%s356 + $0x340] sm:$0xff]
        %v534 = vld [vmem:[%s356 + $0x348] sm:$0xff]
        %v535 = vld [vmem:[%s356 + $0x350] sm:$0xff]
        %v536 = vld [vmem:[%s356 + $0x358] sm:$0xff]
        %v537 = vld [vmem:[%s356 + $0x360] sm:$0xff]
        %v538 = vld [vmem:[%s356 + $0x368] sm:$0xff]
        %v539 = vld [vmem:[%s356 + $0x370] sm:$0xff]
        %v540 = vld [vmem:[%s356 + $0x378] sm:$0xff]
        %v541 = vld [vmem:[%s356 + $0x380] sm:$0xff]
        %v542 = vld [vmem:[%s356 + $0x388] sm:$0xff]
        %v543 = vld [vmem:[%s356 + $0x390] sm:$0xff]
        %v544 = vld [vmem:[%s356 + $0x398] sm:$0xff]
        %v545 = vld [vmem:[%s356 + $0x3a0] sm:$0xff]
        %v546 = vld [vmem:[%s356 + $0x3a8] sm:$0xff]
        %v547 = vld [vmem:[%s356 + $0x3b0] sm:$0xff]
        %v548 = vld [vmem:[%s356 + $0x3b8] sm:$0xff]
        %v549 = vld [vmem:[%s356 + $0x3c0] sm:$0xff]
        %v550 = vld [vmem:[%s356 + $0x3c8] sm:$0xff]
        %v551 = vld [vmem:[%s356 + $0x3d0] sm:$0xff]
        %v552 = vld [vmem:[%s356 + $0x3d8] sm:$0xff]
        %v553 = vld [vmem:[%s356 + $0x3e0] sm:$0xff]
        %v554 = vld [vmem:[%s356 + $0x3e8] sm:$0xff]
        %v555 = vld [vmem:[%s356 + $0x3f0] sm:$0xff]
        %v556 = vld [vmem:[%s356 + $0x3f8] sm:$0xff]
        %v557 = vld [vmem:[%s356 + $0x400] sm:$0xff]
        %v558 = vld [vmem:[%s356 + $0x408] sm:$0xff]
        %v559 = vld [vmem:[%s356 + $0x410] sm:$0xff]
        %v560 = vld [vmem:[%s356 + $0x418] sm:$0xff]
        %v561 = vld [vmem:[%s356 + $0x420] sm:$0xff]
        %v562 = vld [vmem:[%s356 + $0x428] sm:$0xff]
        %v563 = vld [vmem:[%s356 + $0x430] sm:$0xff]
        %v564 = vld [vmem:[%s356 + $0x438] sm:$0xff]
        %v565 = vld [vmem:[%s356 + $0x440] sm:$0xff]
        %v566 = vld [vmem:[%s356 + $0x448] sm:$0xff]
        %v567 = vld [vmem:[%s356 + $0x450] sm:$0xff]
        %v568 = vld [vmem:[%s356 + $0x458] sm:$0xff]
        %v569 = vld [vmem:[%s356 + $0x460] sm:$0xff]
        %v570 = vld [vmem:[%s356 + $0x468] sm:$0xff]
        %v571 = vld [vmem:[%s356 + $0x470] sm:$0xff]
        %v572 = vld [vmem:[%s356 + $0x478] sm:$0xff]
        %v573 = vld [vmem:[%s356 + $0x480] sm:$0xff]
        %v574 = vld [vmem:[%s356 + $0x488] sm:$0xff]
        %v575 = vld [vmem:[%s356 + $0x490] sm:$0xff]
        %v576 = vld [vmem:[%s356 + $0x498] sm:$0xff]
        %v577 = vld [vmem:[%s356 + $0x4a0] sm:$0xff]
        %v578 = vld [vmem:[%s356 + $0x4a8] sm:$0xff]
        %v579 = vld [vmem:[%s356 + $0x4b0] sm:$0xff]
        %v580 = vld [vmem:[%s356 + $0x4b8] sm:$0xff]
        %v581 = vld [vmem:[%s356 + $0x4c0] sm:$0xff]
        %v582 = vld [vmem:[%s356 + $0x4c8] sm:$0xff]
        %v583 = vld [vmem:[%s356 + $0x4d0] sm:$0xff]
        %v584 = vld [vmem:[%s356 + $0x4d8] sm:$0xff]
        %v585 = vld [vmem:[%s356 + $0x4e0] sm:$0xff]
        %v586 = vld [vmem:[%s356 + $0x4e8] sm:$0xff]
        %v587 = vld [vmem:[%s356 + $0x4f0] sm:$0xff]
        %v588 = vld [vmem:[%s356 + $0x4f8] sm:$0xff]
        %v589 = vld [vmem:[%s356 + $0x500] sm:$0xff]
        %v590 = vld [vmem:[%s356 + $0x508] sm:$0xff]
        %v591 = vld [vmem:[%s356 + $0x510] sm:$0xff]
        %v592 = vld [vmem:[%s356 + $0x518] sm:$0xff]
        %v593 = vld [vmem:[%s356 + $0x520] sm:$0xff]
        %v594 = vld [vmem:[%s356 + $0x528] sm:$0xff]
        %v595 = vld [vmem:[%s356 + $0x530] sm:$0xff]
        %v596 = vld [vmem:[%s356 + $0x538] sm:$0xff]
        %v597 = vld [vmem:[%s356 + $0x540] sm:$0xff]
        %v598 = vld [vmem:[%s356 + $0x548] sm:$0xff]
        %v599 = vld [vmem:[%s356 + $0x550] sm:$0xff]
        %v600 = vld [vmem:[%s356 + $0x558] sm:$0xff]
        %v601 = vld [vmem:[%s356 + $0x560] sm:$0xff]
        %v602 = vld [vmem:[%s356 + $0x568] sm:$0xff]
        %v603 = vld [vmem:[%s356 + $0x570] sm:$0xff]
        %v604 = vld [vmem:[%s356 + $0x578] sm:$0xff]
        %v605 = vld [vmem:[%s356 + $0x580] sm:$0xff]
        %v606 = vld [vmem:[%s356 + $0x588] sm:$0xff]
        %v607 = vld [vmem:[%s356 + $0x590] sm:$0xff]
        %v608 = vld [vmem:[%s356 + $0x598] sm:$0xff]
        %v609 = vld [vmem:[%s356 + $0x5a0] sm:$0xff]
        %v610 = vld [vmem:[%s356 + $0x5a8] sm:$0xff]
        %v611 = vld [vmem:[%s356 + $0x5b0] sm:$0xff]
        %v612 = vld [vmem:[%s356 + $0x5b8] sm:$0xff]
        %v613 = vld [vmem:[%s356 + $0x5c0] sm:$0xff]
        %v614 = vld [vmem:[%s356 + $0x5c8] sm:$0xff]
        %v615 = vld [vmem:[%s356 + $0x5d0] sm:$0xff]
        %v616 = vld [vmem:[%s356 + $0x5d8] sm:$0xff]
        %v617 = vld [vmem:[%s356 + $0x5e0] sm:$0xff]
        %v618 = vld [vmem:[%s356 + $0x5e8] sm:$0xff]
        %v619 = vld [vmem:[%s356 + $0x5f0] sm:$0xff]
        %v620 = vld [vmem:[%s356 + $0x5f8] sm:$0xff]
        %v621 = vpack.c.bf16 %v432, %v429
        %v622 = vpack.c.bf16 %v433, %v430
        %v623 = vpack.c.bf16 %v434, %v431
        %v624 = vpack.c.bf16 %v438, %v435
        %v625 = vpack.c.bf16 %v439, %v436
        %v626 = vpack.c.bf16 %v440, %v437
        %v627 = vpack.c.bf16 %v444, %v441
        %v628 = vpack.c.bf16 %v445, %v442
        %v629 = vpack.c.bf16 %v446, %v443
        %v630 = vpack.c.bf16 %v450, %v447
        %v631 = vpack.c.bf16 %v451, %v448
        %v632 = vpack.c.bf16 %v452, %v449
        %v633 = vpack.c.bf16 %v456, %v453
        %v634 = vpack.c.bf16 %v457, %v454
        %v635 = vpack.c.bf16 %v458, %v455
        %v636 = vpack.c.bf16 %v462, %v459
        %v637 = vpack.c.bf16 %v463, %v460
        %v638 = vpack.c.bf16 %v464, %v461
        %v639 = vpack.c.bf16 %v468, %v465
        %v640 = vpack.c.bf16 %v469, %v466
        %v641 = vpack.c.bf16 %v470, %v467
        %v642 = vpack.c.bf16 %v474, %v471
        %v643 = vpack.c.bf16 %v475, %v472
        %v644 = vpack.c.bf16 %v476, %v473
        %v645 = vpack.c.bf16 %v480, %v477
        %v646 = vpack.c.bf16 %v481, %v478
        %v647 = vpack.c.bf16 %v482, %v479
        %v648 = vpack.c.bf16 %v486, %v483
        %v649 = vpack.c.bf16 %v487, %v484
        %v650 = vpack.c.bf16 %v488, %v485
        %v651 = vpack.c.bf16 %v492, %v489
        %v652 = vpack.c.bf16 %v493, %v490
        %v653 = vpack.c.bf16 %v494, %v491
        %v654 = vpack.c.bf16 %v498, %v495
        %v655 = vpack.c.bf16 %v499, %v496
        %v656 = vpack.c.bf16 %v500, %v497
        %v657 = vpack.c.bf16 %v504, %v501
        %v658 = vpack.c.bf16 %v505, %v502
        %v659 = vpack.c.bf16 %v506, %v503
        %v660 = vpack.c.bf16 %v510, %v507
        %v661 = vpack.c.bf16 %v511, %v508
        %v662 = vpack.c.bf16 %v512, %v509
        %v663 = vpack.c.bf16 %v516, %v513
        %v664 = vpack.c.bf16 %v517, %v514
        %v665 = vpack.c.bf16 %v518, %v515
        %v666 = vpack.c.bf16 %v522, %v519
        %v667 = vpack.c.bf16 %v523, %v520
        %v668 = vpack.c.bf16 %v524, %v521
        %v669 = vpack.c.bf16 %v528, %v525
        %v670 = vpack.c.bf16 %v529, %v526
        %v671 = vpack.c.bf16 %v530, %v527
        %v672 = vpack.c.bf16 %v534, %v531
        %v673 = vpack.c.bf16 %v535, %v532
        %v674 = vpack.c.bf16 %v536, %v533
        %v675 = vpack.c.bf16 %v540, %v537
        %v676 = vpack.c.bf16 %v541, %v538
        %v677 = vpack.c.bf16 %v542, %v539
        %v678 = vpack.c.bf16 %v546, %v543
        %v679 = vpack.c.bf16 %v547, %v544
        %v680 = vpack.c.bf16 %v548, %v545
        %v681 = vpack.c.bf16 %v552, %v549
        %v682 = vpack.c.bf16 %v553, %v550
        %v683 = vpack.c.bf16 %v554, %v551
        %v684 = vpack.c.bf16 %v558, %v555
        %v685 = vpack.c.bf16 %v559, %v556
        %v686 = vpack.c.bf16 %v560, %v557
        %v687 = vpack.c.bf16 %v564, %v561
        %v688 = vpack.c.bf16 %v565, %v562
        %v689 = vpack.c.bf16 %v566, %v563
        %v690 = vpack.c.bf16 %v570, %v567
        %v691 = vpack.c.bf16 %v571, %v568
        %v692 = vpack.c.bf16 %v572, %v569
        %v693 = vpack.c.bf16 %v576, %v573
        %v694 = vpack.c.bf16 %v577, %v574
        %v695 = vpack.c.bf16 %v578, %v575
        %v696 = vpack.c.bf16 %v582, %v579
        %v697 = vpack.c.bf16 %v583, %v580
        %v698 = vpack.c.bf16 %v584, %v581
        %v699 = vpack.c.bf16 %v588, %v585
        %v700 = vpack.c.bf16 %v589, %v586
        %v701 = vpack.c.bf16 %v590, %v587
        %v702 = vpack.c.bf16 %v594, %v591
        %v703 = vpack.c.bf16 %v595, %v592
        %v704 = vpack.c.bf16 %v596, %v593
        %v705 = vpack.c.bf16 %v600, %v597
        %v706 = vpack.c.bf16 %v601, %v598
        %v707 = vpack.c.bf16 %v602, %v599
        %v708 = vpack.c.bf16 %v606, %v603
        %v709 = vpack.c.bf16 %v607, %v604
        %v710 = vpack.c.bf16 %v608, %v605
        %v711 = vpack.c.bf16 %v612, %v609
        %v712 = vpack.c.bf16 %v613, %v610
        %v713 = vpack.c.bf16 %v614, %v611
        %v714 = vpack.c.bf16 %v618, %v615
        %v715 = vpack.c.bf16 %v619, %v616
        %v716 = vpack.c.bf16 %v620, %v617
        %v717 = vlaneseq
        %v718 = vshrl.u32 %v717, 7
        %v719 = vadd.s32 %v718, 8
        %v720 = vadd.s32 %v718, 16
        %v721 = vadd.s32 %v718, 24
        %v722 = vadd.s32 %v718, 32
        %v723 = vadd.s32 %v718, 40
        %v724 = vadd.s32 %v718, 48
        %v725 = vadd.s32 %v718, 56
        %v726 = vadd.s32 %v718, 64
        %v727 = vadd.s32 %v718, 72
        %v728 = vadd.s32 %v718, 80
        %v729 = vadd.s32 %v718, 88
        %v730 = vadd.s32 %v718, 96
        %v731 = vadd.s32 %v718, 104
        %v732 = vadd.s32 %v718, 112
        %v733 = vadd.s32 %v718, 120
        %v734 = vadd.s32 %v718, 128
        %v735 = vadd.s32 %v718, 136
        %v736 = vadd.s32 %v718, 144
        %v737 = vadd.s32 %v718, 152
        %v738 = vadd.s32 %v718, 160
        %v739 = vadd.s32 %v718, 168
        %v740 = vadd.s32 %v718, 176
        %v741 = vadd.s32 %v718, 184
        %v742 = vadd.s32 %v718, 192
        %v743 = vadd.s32 %v718, 200
        %v744 = vadd.s32 %v718, 208
        %v745 = vadd.s32 %v718, 216
        %v746 = vadd.s32 %v718, 224
        %v747 = vadd.s32 %v718, 232
        %v748 = vadd.s32 %v718, 240
        %v749 = vadd.s32 %v718, 248
        %v750 = vadd.s32 %v718, 256
        %v751 = vadd.s32 %v718, 264
        %v752 = vadd.s32 %v718, 272
        %v753 = vadd.s32 %v718, 280
        %v754 = vadd.s32 %v718, 288
        %v755 = vadd.s32 %v718, 296
        %v756 = vadd.s32 %v718, 304
        %v757 = vadd.s32 %v718, 312
        %v758 = vadd.s32 %v718, 320
        %v759 = vadd.s32 %v718, 328
        %v760 = vadd.s32 %v718, 336
        %v761 = vadd.s32 %v718, 344
        %v762 = vadd.s32 %v718, 352
        %v763 = vadd.s32 %v718, 360
        %v764 = vadd.s32 %v718, 368
        %v765 = vadd.s32 %v718, 376
        %v766 = vadd.s32 %v718, 384
        %v767 = vadd.s32 %v718, 392
        %v768 = vadd.s32 %v718, 400
        %v769 = vadd.s32 %v718, 408
        %v770 = vadd.s32 %v718, 416
        %v771 = vadd.s32 %v718, 424
        %v772 = vadd.s32 %v718, 432
        %v773 = vadd.s32 %v718, 440
        %v774 = vadd.s32 %v718, 448
        %v775 = vadd.s32 %v718, 456
        %v776 = vadd.s32 %v718, 464
        %v777 = vadd.s32 %v718, 472
        %v778 = vadd.s32 %v718, 480
        %v779 = vadd.s32 %v718, 488
        %v780 = vadd.s32 %v718, 496
        %v781 = vadd.s32 %v718, 504
        %s782 = smul.u32 %s30, 512
        %v783 = vstv %s782
        %v784 = vadd.s32 %v783, %v718
        %v785 = vadd.s32 %v783, %v719
        %v786 = vadd.s32 %v783, %v720
        %v787 = vadd.s32 %v783, %v721
        %v788 = vadd.s32 %v783, %v722
        %v789 = vadd.s32 %v783, %v723
        %v790 = vadd.s32 %v783, %v724
        %v791 = vadd.s32 %v783, %v725
        %v792 = vadd.s32 %v783, %v726
        %v793 = vadd.s32 %v783, %v727
        %v794 = vadd.s32 %v783, %v728
        %v795 = vadd.s32 %v783, %v729
        %v796 = vadd.s32 %v783, %v730
        %v797 = vadd.s32 %v783, %v731
        %v798 = vadd.s32 %v783, %v732
        %v799 = vadd.s32 %v783, %v733
        %v800 = vadd.s32 %v783, %v734
        %v801 = vadd.s32 %v783, %v735
        %v802 = vadd.s32 %v783, %v736
        %v803 = vadd.s32 %v783, %v737
        %v804 = vadd.s32 %v783, %v738
        %v805 = vadd.s32 %v783, %v739
        %v806 = vadd.s32 %v783, %v740
        %v807 = vadd.s32 %v783, %v741
        %v808 = vadd.s32 %v783, %v742
        %v809 = vadd.s32 %v783, %v743
        %v810 = vadd.s32 %v783, %v744
        %v811 = vadd.s32 %v783, %v745
        %v812 = vadd.s32 %v783, %v746
        %v813 = vadd.s32 %v783, %v747
        %v814 = vadd.s32 %v783, %v748
        %v815 = vadd.s32 %v783, %v749
        %v816 = vadd.s32 %v783, %v750
        %v817 = vadd.s32 %v783, %v751
        %v818 = vadd.s32 %v783, %v752
        %v819 = vadd.s32 %v783, %v753
        %v820 = vadd.s32 %v783, %v754
        %v821 = vadd.s32 %v783, %v755
        %v822 = vadd.s32 %v783, %v756
        %v823 = vadd.s32 %v783, %v757
        %v824 = vadd.s32 %v783, %v758
        %v825 = vadd.s32 %v783, %v759
        %v826 = vadd.s32 %v783, %v760
        %v827 = vadd.s32 %v783, %v761
        %v828 = vadd.s32 %v783, %v762
        %v829 = vadd.s32 %v783, %v763
        %v830 = vadd.s32 %v783, %v764
        %v831 = vadd.s32 %v783, %v765
        %v832 = vadd.s32 %v783, %v766
        %v833 = vadd.s32 %v783, %v767
        %v834 = vadd.s32 %v783, %v768
        %v835 = vadd.s32 %v783, %v769
        %v836 = vadd.s32 %v783, %v770
        %v837 = vadd.s32 %v783, %v771
        %v838 = vadd.s32 %v783, %v772
        %v839 = vadd.s32 %v783, %v773
        %v840 = vadd.s32 %v783, %v774
        %v841 = vadd.s32 %v783, %v775
        %v842 = vadd.s32 %v783, %v776
        %v843 = vadd.s32 %v783, %v777
        %v844 = vadd.s32 %v783, %v778
        %v845 = vadd.s32 %v783, %v779
        %v846 = vadd.s32 %v783, %v780
        %v847 = vadd.s32 %v783, %v781
        %vm848 = vcmp.lt.s32.totalorder %v784, 1200
        %vm849 = vcmp.lt.s32.totalorder %v785, 1200
        %vm850 = vcmp.lt.s32.totalorder %v786, 1200
        %vm851 = vcmp.lt.s32.totalorder %v787, 1200
        %vm852 = vcmp.lt.s32.totalorder %v788, 1200
        %vm853 = vcmp.lt.s32.totalorder %v789, 1200
        %vm854 = vcmp.lt.s32.totalorder %v790, 1200
        %vm855 = vcmp.lt.s32.totalorder %v791, 1200
        %vm856 = vcmp.lt.s32.totalorder %v792, 1200
        %vm857 = vcmp.lt.s32.totalorder %v793, 1200
        %vm858 = vcmp.lt.s32.totalorder %v794, 1200
        %vm859 = vcmp.lt.s32.totalorder %v795, 1200
        %vm860 = vcmp.lt.s32.totalorder %v796, 1200
        %vm861 = vcmp.lt.s32.totalorder %v797, 1200
        %vm862 = vcmp.lt.s32.totalorder %v798, 1200
        %vm863 = vcmp.lt.s32.totalorder %v799, 1200
        %vm864 = vcmp.lt.s32.totalorder %v800, 1200
        %vm865 = vcmp.lt.s32.totalorder %v801, 1200
        %vm866 = vcmp.lt.s32.totalorder %v802, 1200
        %vm867 = vcmp.lt.s32.totalorder %v803, 1200
        %vm868 = vcmp.lt.s32.totalorder %v804, 1200
        %vm869 = vcmp.lt.s32.totalorder %v805, 1200
        %vm870 = vcmp.lt.s32.totalorder %v806, 1200
        %vm871 = vcmp.lt.s32.totalorder %v807, 1200
        %vm872 = vcmp.lt.s32.totalorder %v808, 1200
        %vm873 = vcmp.lt.s32.totalorder %v809, 1200
        %vm874 = vcmp.lt.s32.totalorder %v810, 1200
        %vm875 = vcmp.lt.s32.totalorder %v811, 1200
        %vm876 = vcmp.lt.s32.totalorder %v812, 1200
        %vm877 = vcmp.lt.s32.totalorder %v813, 1200
        %vm878 = vcmp.lt.s32.totalorder %v814, 1200
        %vm879 = vcmp.lt.s32.totalorder %v815, 1200
        %vm880 = vcmp.lt.s32.totalorder %v816, 1200
        %vm881 = vcmp.lt.s32.totalorder %v817, 1200
        %vm882 = vcmp.lt.s32.totalorder %v818, 1200
        %vm883 = vcmp.lt.s32.totalorder %v819, 1200
        %vm884 = vcmp.lt.s32.totalorder %v820, 1200
        %vm885 = vcmp.lt.s32.totalorder %v821, 1200
        %vm886 = vcmp.lt.s32.totalorder %v822, 1200
        %vm887 = vcmp.lt.s32.totalorder %v823, 1200
        %vm888 = vcmp.lt.s32.totalorder %v824, 1200
        %vm889 = vcmp.lt.s32.totalorder %v825, 1200
        %vm890 = vcmp.lt.s32.totalorder %v826, 1200
        %vm891 = vcmp.lt.s32.totalorder %v827, 1200
        %vm892 = vcmp.lt.s32.totalorder %v828, 1200
        %vm893 = vcmp.lt.s32.totalorder %v829, 1200
        %vm894 = vcmp.lt.s32.totalorder %v830, 1200
        %vm895 = vcmp.lt.s32.totalorder %v831, 1200
        %vm896 = vcmp.lt.s32.totalorder %v832, 1200
        %vm897 = vcmp.lt.s32.totalorder %v833, 1200
        %vm898 = vcmp.lt.s32.totalorder %v834, 1200
        %vm899 = vcmp.lt.s32.totalorder %v835, 1200
        %vm900 = vcmp.lt.s32.totalorder %v836, 1200
        %vm901 = vcmp.lt.s32.totalorder %v837, 1200
        %vm902 = vcmp.lt.s32.totalorder %v838, 1200
        %vm903 = vcmp.lt.s32.totalorder %v839, 1200
        %vm904 = vcmp.lt.s32.totalorder %v840, 1200
        %vm905 = vcmp.lt.s32.totalorder %v841, 1200
        %vm906 = vcmp.lt.s32.totalorder %v842, 1200
        %vm907 = vcmp.lt.s32.totalorder %v843, 1200
        %vm908 = vcmp.lt.s32.totalorder %v844, 1200
        %vm909 = vcmp.lt.s32.totalorder %v845, 1200
        %vm910 = vcmp.lt.s32.totalorder %v846, 1200
        %vm911 = vcmp.lt.s32.totalorder %v847, 1200
        %v912 = vsel %vm848, 1, 0
        %v913 = vsel %vm849, 1, 0
        %v914 = vsel %vm850, 1, 0
        %v915 = vsel %vm851, 1, 0
        %v916 = vsel %vm852, 1, 0
        %v917 = vsel %vm853, 1, 0
        %v918 = vsel %vm854, 1, 0
        %v919 = vsel %vm855, 1, 0
        %v920 = vsel %vm856, 1, 0
        %v921 = vsel %vm857, 1, 0
        %v922 = vsel %vm858, 1, 0
        %v923 = vsel %vm859, 1, 0
        %v924 = vsel %vm860, 1, 0
        %v925 = vsel %vm861, 1, 0
        %v926 = vsel %vm862, 1, 0
        %v927 = vsel %vm863, 1, 0
        %v928 = vsel %vm864, 1, 0
        %v929 = vsel %vm865, 1, 0
        %v930 = vsel %vm866, 1, 0
        %v931 = vsel %vm867, 1, 0
        %v932 = vsel %vm868, 1, 0
        %v933 = vsel %vm869, 1, 0
        %v934 = vsel %vm870, 1, 0
        %v935 = vsel %vm871, 1, 0
        %v936 = vsel %vm872, 1, 0
        %v937 = vsel %vm873, 1, 0
        %v938 = vsel %vm874, 1, 0
        %v939 = vsel %vm875, 1, 0
        %v940 = vsel %vm876, 1, 0
        %v941 = vsel %vm877, 1, 0
        %v942 = vsel %vm878, 1, 0
        %v943 = vsel %vm879, 1, 0
        %v944 = vsel %vm880, 1, 0
        %v945 = vsel %vm881, 1, 0
        %v946 = vsel %vm882, 1, 0
        %v947 = vsel %vm883, 1, 0
        %v948 = vsel %vm884, 1, 0
        %v949 = vsel %vm885, 1, 0
        %v950 = vsel %vm886, 1, 0
        %v951 = vsel %vm887, 1, 0
        %v952 = vsel %vm888, 1, 0
        %v953 = vsel %vm889, 1, 0
        %v954 = vsel %vm890, 1, 0
        %v955 = vsel %vm891, 1, 0
        %v956 = vsel %vm892, 1, 0
        %v957 = vsel %vm893, 1, 0
        %v958 = vsel %vm894, 1, 0
        %v959 = vsel %vm895, 1, 0
        %v960 = vsel %vm896, 1, 0
        %v961 = vsel %vm897, 1, 0
        %v962 = vsel %vm898, 1, 0
        %v963 = vsel %vm899, 1, 0
        %v964 = vsel %vm900, 1, 0
        %v965 = vsel %vm901, 1, 0
        %v966 = vsel %vm902, 1, 0
        %v967 = vsel %vm903, 1, 0
        %v968 = vsel %vm904, 1, 0
        %v969 = vsel %vm905, 1, 0
        %v970 = vsel %vm906, 1, 0
        %v971 = vsel %vm907, 1, 0
        %v972 = vsel %vm908, 1, 0
        %v973 = vsel %vm909, 1, 0
        %v974 = vsel %vm910, 1, 0
        %v975 = vsel %vm911, 1, 0
        %vm976 = vcmp.eq.s32.totalorder %v912, 1
        %vm977 = vcmp.eq.s32.totalorder %v913, 1
        %vm978 = vcmp.eq.s32.totalorder %v914, 1
        %vm979 = vcmp.eq.s32.totalorder %v915, 1
        %vm980 = vcmp.eq.s32.totalorder %v916, 1
        %vm981 = vcmp.eq.s32.totalorder %v917, 1
        %vm982 = vcmp.eq.s32.totalorder %v918, 1
        %vm983 = vcmp.eq.s32.totalorder %v919, 1
        %vm984 = vcmp.eq.s32.totalorder %v920, 1
        %vm985 = vcmp.eq.s32.totalorder %v921, 1
        %vm986 = vcmp.eq.s32.totalorder %v922, 1
        %vm987 = vcmp.eq.s32.totalorder %v923, 1
        %vm988 = vcmp.eq.s32.totalorder %v924, 1
        %vm989 = vcmp.eq.s32.totalorder %v925, 1
        %vm990 = vcmp.eq.s32.totalorder %v926, 1
        %vm991 = vcmp.eq.s32.totalorder %v927, 1
        %vm992 = vcmp.eq.s32.totalorder %v928, 1
        %vm993 = vcmp.eq.s32.totalorder %v929, 1
        %vm994 = vcmp.eq.s32.totalorder %v930, 1
        %vm995 = vcmp.eq.s32.totalorder %v931, 1
        %vm996 = vcmp.eq.s32.totalorder %v932, 1
        %vm997 = vcmp.eq.s32.totalorder %v933, 1
        %vm998 = vcmp.eq.s32.totalorder %v934, 1
        %vm999 = vcmp.eq.s32.totalorder %v935, 1
        %vm1000 = vcmp.eq.s32.totalorder %v936, 1
        %vm1001 = vcmp.eq.s32.totalorder %v937, 1
        %vm1002 = vcmp.eq.s32.totalorder %v938, 1
        %vm1003 = vcmp.eq.s32.totalorder %v939, 1
        %vm1004 = vcmp.eq.s32.totalorder %v940, 1
        %vm1005 = vcmp.eq.s32.totalorder %v941, 1
        %vm1006 = vcmp.eq.s32.totalorder %v942, 1
        %vm1007 = vcmp.eq.s32.totalorder %v943, 1
        %vm1008 = vcmp.eq.s32.totalorder %v944, 1
        %vm1009 = vcmp.eq.s32.totalorder %v945, 1
        %vm1010 = vcmp.eq.s32.totalorder %v946, 1
        %vm1011 = vcmp.eq.s32.totalorder %v947, 1
        %vm1012 = vcmp.eq.s32.totalorder %v948, 1
        %vm1013 = vcmp.eq.s32.totalorder %v949, 1
        %vm1014 = vcmp.eq.s32.totalorder %v950, 1
        %vm1015 = vcmp.eq.s32.totalorder %v951, 1
        %vm1016 = vcmp.eq.s32.totalorder %v952, 1
        %vm1017 = vcmp.eq.s32.totalorder %v953, 1
        %vm1018 = vcmp.eq.s32.totalorder %v954, 1
        %vm1019 = vcmp.eq.s32.totalorder %v955, 1
        %vm1020 = vcmp.eq.s32.totalorder %v956, 1
        %vm1021 = vcmp.eq.s32.totalorder %v957, 1
        %vm1022 = vcmp.eq.s32.totalorder %v958, 1
        %vm1023 = vcmp.eq.s32.totalorder %v959, 1
        %vm1024 = vcmp.eq.s32.totalorder %v960, 1
        %vm1025 = vcmp.eq.s32.totalorder %v961, 1
        %vm1026 = vcmp.eq.s32.totalorder %v962, 1
        %vm1027 = vcmp.eq.s32.totalorder %v963, 1
        %vm1028 = vcmp.eq.s32.totalorder %v964, 1
        %vm1029 = vcmp.eq.s32.totalorder %v965, 1
        %vm1030 = vcmp.eq.s32.totalorder %v966, 1
        %vm1031 = vcmp.eq.s32.totalorder %v967, 1
        %vm1032 = vcmp.eq.s32.totalorder %v968, 1
        %vm1033 = vcmp.eq.s32.totalorder %v969, 1
        %vm1034 = vcmp.eq.s32.totalorder %v970, 1
        %vm1035 = vcmp.eq.s32.totalorder %v971, 1
        %vm1036 = vcmp.eq.s32.totalorder %v972, 1
        %vm1037 = vcmp.eq.s32.totalorder %v973, 1
        %vm1038 = vcmp.eq.s32.totalorder %v974, 1
        %vm1039 = vcmp.eq.s32.totalorder %v975, 1
        %vm1040 = vmpackc.low %vm976, %vm976
        %vm1041 = vmpackc.low %vm977, %vm977
        %vm1042 = vmpackc.low %vm978, %vm978
        %vm1043 = vmpackc.low %vm979, %vm979
        %vm1044 = vmpackc.low %vm980, %vm980
        %vm1045 = vmpackc.low %vm981, %vm981
        %vm1046 = vmpackc.low %vm982, %vm982
        %vm1047 = vmpackc.low %vm983, %vm983
        %vm1048 = vmpackc.low %vm984, %vm984
        %vm1049 = vmpackc.low %vm985, %vm985
        %vm1050 = vmpackc.low %vm986, %vm986
        %vm1051 = vmpackc.low %vm987, %vm987
        %vm1052 = vmpackc.low %vm988, %vm988
        %vm1053 = vmpackc.low %vm989, %vm989
        %vm1054 = vmpackc.low %vm990, %vm990
        %vm1055 = vmpackc.low %vm991, %vm991
        %vm1056 = vmpackc.low %vm992, %vm992
        %vm1057 = vmpackc.low %vm993, %vm993
        %vm1058 = vmpackc.low %vm994, %vm994
        %vm1059 = vmpackc.low %vm995, %vm995
        %vm1060 = vmpackc.low %vm996, %vm996
        %vm1061 = vmpackc.low %vm997, %vm997
        %vm1062 = vmpackc.low %vm998, %vm998
        %vm1063 = vmpackc.low %vm999, %vm999
        %vm1064 = vmpackc.low %vm1000, %vm1000
        %vm1065 = vmpackc.low %vm1001, %vm1001
        %vm1066 = vmpackc.low %vm1002, %vm1002
        %vm1067 = vmpackc.low %vm1003, %vm1003
        %vm1068 = vmpackc.low %vm1004, %vm1004
        %vm1069 = vmpackc.low %vm1005, %vm1005
        %vm1070 = vmpackc.low %vm1006, %vm1006
        %vm1071 = vmpackc.low %vm1007, %vm1007
        %vm1072 = vmpackc.low %vm1008, %vm1008
        %vm1073 = vmpackc.low %vm1009, %vm1009
        %vm1074 = vmpackc.low %vm1010, %vm1010
        %vm1075 = vmpackc.low %vm1011, %vm1011
        %vm1076 = vmpackc.low %vm1012, %vm1012
        %vm1077 = vmpackc.low %vm1013, %vm1013
        %vm1078 = vmpackc.low %vm1014, %vm1014
        %vm1079 = vmpackc.low %vm1015, %vm1015
        %vm1080 = vmpackc.low %vm1016, %vm1016
        %vm1081 = vmpackc.low %vm1017, %vm1017
        %vm1082 = vmpackc.low %vm1018, %vm1018
        %vm1083 = vmpackc.low %vm1019, %vm1019
        %vm1084 = vmpackc.low %vm1020, %vm1020
        %vm1085 = vmpackc.low %vm1021, %vm1021
        %vm1086 = vmpackc.low %vm1022, %vm1022
        %vm1087 = vmpackc.low %vm1023, %vm1023
        %vm1088 = vmpackc.low %vm1024, %vm1024
        %vm1089 = vmpackc.low %vm1025, %vm1025
        %vm1090 = vmpackc.low %vm1026, %vm1026
        %vm1091 = vmpackc.low %vm1027, %vm1027
        %vm1092 = vmpackc.low %vm1028, %vm1028
        %vm1093 = vmpackc.low %vm1029, %vm1029
        %vm1094 = vmpackc.low %vm1030, %vm1030
        %vm1095 = vmpackc.low %vm1031, %vm1031
        %vm1096 = vmpackc.low %vm1032, %vm1032
        %vm1097 = vmpackc.low %vm1033, %vm1033
        %vm1098 = vmpackc.low %vm1034, %vm1034
        %vm1099 = vmpackc.low %vm1035, %vm1035
        %vm1100 = vmpackc.low %vm1036, %vm1036
        %vm1101 = vmpackc.low %vm1037, %vm1037
        %vm1102 = vmpackc.low %vm1038, %vm1038
        %vm1103 = vmpackc.low %vm1039, %vm1039
        %v1104 = vsel %vm1040, 65537, 0
        %v1105 = vsel %vm1041, 65537, 0
        %v1106 = vsel %vm1042, 65537, 0
        %v1107 = vsel %vm1043, 65537, 0
        %v1108 = vsel %vm1044, 65537, 0
        %v1109 = vsel %vm1045, 65537, 0
        %v1110 = vsel %vm1046, 65537, 0
        %v1111 = vsel %vm1047, 65537, 0
        %v1112 = vsel %vm1048, 65537, 0
        %v1113 = vsel %vm1049, 65537, 0
        %v1114 = vsel %vm1050, 65537, 0
        %v1115 = vsel %vm1051, 65537, 0
        %v1116 = vsel %vm1052, 65537, 0
        %v1117 = vsel %vm1053, 65537, 0
        %v1118 = vsel %vm1054, 65537, 0
        %v1119 = vsel %vm1055, 65537, 0
        %v1120 = vsel %vm1056, 65537, 0
        %v1121 = vsel %vm1057, 65537, 0
        %v1122 = vsel %vm1058, 65537, 0
        %v1123 = vsel %vm1059, 65537, 0
        %v1124 = vsel %vm1060, 65537, 0
        %v1125 = vsel %vm1061, 65537, 0
        %v1126 = vsel %vm1062, 65537, 0
        %v1127 = vsel %vm1063, 65537, 0
        %v1128 = vsel %vm1064, 65537, 0
        %v1129 = vsel %vm1065, 65537, 0
        %v1130 = vsel %vm1066, 65537, 0
        %v1131 = vsel %vm1067, 65537, 0
        %v1132 = vsel %vm1068, 65537, 0
        %v1133 = vsel %vm1069, 65537, 0
        %v1134 = vsel %vm1070, 65537, 0
        %v1135 = vsel %vm1071, 65537, 0
        %v1136 = vsel %vm1072, 65537, 0
        %v1137 = vsel %vm1073, 65537, 0
        %v1138 = vsel %vm1074, 65537, 0
        %v1139 = vsel %vm1075, 65537, 0
        %v1140 = vsel %vm1076, 65537, 0
        %v1141 = vsel %vm1077, 65537, 0
        %v1142 = vsel %vm1078, 65537, 0
        %v1143 = vsel %vm1079, 65537, 0
        %v1144 = vsel %vm1080, 65537, 0
        %v1145 = vsel %vm1081, 65537, 0
        %v1146 = vsel %vm1082, 65537, 0
        %v1147 = vsel %vm1083, 65537, 0
        %v1148 = vsel %vm1084, 65537, 0
        %v1149 = vsel %vm1085, 65537, 0
        %v1150 = vsel %vm1086, 65537, 0
        %v1151 = vsel %vm1087, 65537, 0
        %v1152 = vsel %vm1088, 65537, 0
        %v1153 = vsel %vm1089, 65537, 0
        %v1154 = vsel %vm1090, 65537, 0
        %v1155 = vsel %vm1091, 65537, 0
        %v1156 = vsel %vm1092, 65537, 0
        %v1157 = vsel %vm1093, 65537, 0
        %v1158 = vsel %vm1094, 65537, 0
        %v1159 = vsel %vm1095, 65537, 0
        %v1160 = vsel %vm1096, 65537, 0
        %v1161 = vsel %vm1097, 65537, 0
        %v1162 = vsel %vm1098, 65537, 0
        %v1163 = vsel %vm1099, 65537, 0
        %v1164 = vsel %vm1100, 65537, 0
        %v1165 = vsel %vm1101, 65537, 0
        %v1166 = vsel %vm1102, 65537, 0
        %v1167 = vsel %vm1103, 65537, 0
        %v1168 = vunpack.c.l.b16 %v1104
        %v1169 = vunpack.c.l.b16 %v1105
        %v1170 = vunpack.c.l.b16 %v1106
        %v1171 = vunpack.c.l.b16 %v1107
        %v1172 = vunpack.c.l.b16 %v1108
        %v1173 = vunpack.c.l.b16 %v1109
        %v1174 = vunpack.c.l.b16 %v1110
        %v1175 = vunpack.c.l.b16 %v1111
        %v1176 = vunpack.c.l.b16 %v1112
        %v1177 = vunpack.c.l.b16 %v1113
        %v1178 = vunpack.c.l.b16 %v1114
        %v1179 = vunpack.c.l.b16 %v1115
        %v1180 = vunpack.c.l.b16 %v1116
        %v1181 = vunpack.c.l.b16 %v1117
        %v1182 = vunpack.c.l.b16 %v1118
        %v1183 = vunpack.c.l.b16 %v1119
        %v1184 = vunpack.c.l.b16 %v1120
        %v1185 = vunpack.c.l.b16 %v1121
        %v1186 = vunpack.c.l.b16 %v1122
        %v1187 = vunpack.c.l.b16 %v1123
        %v1188 = vunpack.c.l.b16 %v1124
        %v1189 = vunpack.c.l.b16 %v1125
        %v1190 = vunpack.c.l.b16 %v1126
        %v1191 = vunpack.c.l.b16 %v1127
        %v1192 = vunpack.c.l.b16 %v1128
        %v1193 = vunpack.c.l.b16 %v1129
        %v1194 = vunpack.c.l.b16 %v1130
        %v1195 = vunpack.c.l.b16 %v1131
        %v1196 = vunpack.c.l.b16 %v1132
        %v1197 = vunpack.c.l.b16 %v1133
        %v1198 = vunpack.c.l.b16 %v1134
        %v1199 = vunpack.c.l.b16 %v1135
        %v1200 = vunpack.c.l.b16 %v1136
        %v1201 = vunpack.c.l.b16 %v1137
        %v1202 = vunpack.c.l.b16 %v1138
        %v1203 = vunpack.c.l.b16 %v1139
        %v1204 = vunpack.c.l.b16 %v1140
        %v1205 = vunpack.c.l.b16 %v1141
        %v1206 = vunpack.c.l.b16 %v1142
        %v1207 = vunpack.c.l.b16 %v1143
        %v1208 = vunpack.c.l.b16 %v1144
        %v1209 = vunpack.c.l.b16 %v1145
        %v1210 = vunpack.c.l.b16 %v1146
        %v1211 = vunpack.c.l.b16 %v1147
        %v1212 = vunpack.c.l.b16 %v1148
        %v1213 = vunpack.c.l.b16 %v1149
        %v1214 = vunpack.c.l.b16 %v1150
        %v1215 = vunpack.c.l.b16 %v1151
        %v1216 = vunpack.c.l.b16 %v1152
        %v1217 = vunpack.c.l.b16 %v1153
        %v1218 = vunpack.c.l.b16 %v1154
        %v1219 = vunpack.c.l.b16 %v1155
        %v1220 = vunpack.c.l.b16 %v1156
        %v1221 = vunpack.c.l.b16 %v1157
        %v1222 = vunpack.c.l.b16 %v1158
        %v1223 = vunpack.c.l.b16 %v1159
        %v1224 = vunpack.c.l.b16 %v1160
        %v1225 = vunpack.c.l.b16 %v1161
        %v1226 = vunpack.c.l.b16 %v1162
        %v1227 = vunpack.c.l.b16 %v1163
        %v1228 = vunpack.c.l.b16 %v1164
        %v1229 = vunpack.c.l.b16 %v1165
        %v1230 = vunpack.c.l.b16 %v1166
        %v1231 = vunpack.c.l.b16 %v1167
        %v1232 = vpack.c.b16 %v1169, %v1168
        %v1233 = vpack.c.b16 %v1171, %v1170
        %v1234 = vpack.c.b16 %v1173, %v1172
        %v1235 = vpack.c.b16 %v1175, %v1174
        %v1236 = vpack.c.b16 %v1177, %v1176
        %v1237 = vpack.c.b16 %v1179, %v1178
        %v1238 = vpack.c.b16 %v1181, %v1180
        %v1239 = vpack.c.b16 %v1183, %v1182
        %v1240 = vpack.c.b16 %v1185, %v1184
        %v1241 = vpack.c.b16 %v1187, %v1186
        %v1242 = vpack.c.b16 %v1189, %v1188
        %v1243 = vpack.c.b16 %v1191, %v1190
        %v1244 = vpack.c.b16 %v1193, %v1192
        %v1245 = vpack.c.b16 %v1195, %v1194
        %v1246 = vpack.c.b16 %v1197, %v1196
        %v1247 = vpack.c.b16 %v1199, %v1198
        %v1248 = vpack.c.b16 %v1201, %v1200
        %v1249 = vpack.c.b16 %v1203, %v1202
        %v1250 = vpack.c.b16 %v1205, %v1204
        %v1251 = vpack.c.b16 %v1207, %v1206
        %v1252 = vpack.c.b16 %v1209, %v1208
        %v1253 = vpack.c.b16 %v1211, %v1210
        %v1254 = vpack.c.b16 %v1213, %v1212
        %v1255 = vpack.c.b16 %v1215, %v1214
        %v1256 = vpack.c.b16 %v1217, %v1216
        %v1257 = vpack.c.b16 %v1219, %v1218
        %v1258 = vpack.c.b16 %v1221, %v1220
        %v1259 = vpack.c.b16 %v1223, %v1222
        %v1260 = vpack.c.b16 %v1225, %v1224
        %v1261 = vpack.c.b16 %v1227, %v1226
        %v1262 = vpack.c.b16 %v1229, %v1228
        %v1263 = vpack.c.b16 %v1231, %v1230
        %vm1264 = vcmp.ne.s16.totalorder %v1232, 0
        %vm1265 = vcmp.ne.s16.totalorder %v1233, 0
        %vm1266 = vcmp.ne.s16.totalorder %v1234, 0
        %vm1267 = vcmp.ne.s16.totalorder %v1235, 0
        %vm1268 = vcmp.ne.s16.totalorder %v1236, 0
        %vm1269 = vcmp.ne.s16.totalorder %v1237, 0
        %vm1270 = vcmp.ne.s16.totalorder %v1238, 0
        %vm1271 = vcmp.ne.s16.totalorder %v1239, 0
        %vm1272 = vcmp.ne.s16.totalorder %v1240, 0
        %vm1273 = vcmp.ne.s16.totalorder %v1241, 0
        %vm1274 = vcmp.ne.s16.totalorder %v1242, 0
        %vm1275 = vcmp.ne.s16.totalorder %v1243, 0
        %vm1276 = vcmp.ne.s16.totalorder %v1244, 0
        %vm1277 = vcmp.ne.s16.totalorder %v1245, 0
        %vm1278 = vcmp.ne.s16.totalorder %v1246, 0
        %vm1279 = vcmp.ne.s16.totalorder %v1247, 0
        %vm1280 = vcmp.ne.s16.totalorder %v1248, 0
        %vm1281 = vcmp.ne.s16.totalorder %v1249, 0
        %vm1282 = vcmp.ne.s16.totalorder %v1250, 0
        %vm1283 = vcmp.ne.s16.totalorder %v1251, 0
        %vm1284 = vcmp.ne.s16.totalorder %v1252, 0
        %vm1285 = vcmp.ne.s16.totalorder %v1253, 0
        %vm1286 = vcmp.ne.s16.totalorder %v1254, 0
        %vm1287 = vcmp.ne.s16.totalorder %v1255, 0
        %vm1288 = vcmp.ne.s16.totalorder %v1256, 0
        %vm1289 = vcmp.ne.s16.totalorder %v1257, 0
        %vm1290 = vcmp.ne.s16.totalorder %v1258, 0
        %vm1291 = vcmp.ne.s16.totalorder %v1259, 0
        %vm1292 = vcmp.ne.s16.totalorder %v1260, 0
        %vm1293 = vcmp.ne.s16.totalorder %v1261, 0
        %vm1294 = vcmp.ne.s16.totalorder %v1262, 0
        %vm1295 = vcmp.ne.s16.totalorder %v1263, 0
        %v1296 = vsel %vm1264, %v621, 0
        %v1297 = vsel %vm1264, %v622, 0
        %v1298 = vsel %vm1264, %v623, 0
        %v1299 = vsel %vm1265, %v624, 0
        %v1300 = vsel %vm1265, %v625, 0
        %v1301 = vsel %vm1265, %v626, 0
        %v1302 = vsel %vm1266, %v627, 0
        %v1303 = vsel %vm1266, %v628, 0
        %v1304 = vsel %vm1266, %v629, 0
        %v1305 = vsel %vm1267, %v630, 0
        %v1306 = vsel %vm1267, %v631, 0
        %v1307 = vsel %vm1267, %v632, 0
        %v1308 = vsel %vm1268, %v633, 0
        %v1309 = vsel %vm1268, %v634, 0
        %v1310 = vsel %vm1268, %v635, 0
        %v1311 = vsel %vm1269, %v636, 0
        %v1312 = vsel %vm1269, %v637, 0
        %v1313 = vsel %vm1269, %v638, 0
        %v1314 = vsel %vm1270, %v639, 0
        %v1315 = vsel %vm1270, %v640, 0
        %v1316 = vsel %vm1270, %v641, 0
        %v1317 = vsel %vm1271, %v642, 0
        %v1318 = vsel %vm1271, %v643, 0
        %v1319 = vsel %vm1271, %v644, 0
        %v1320 = vsel %vm1272, %v645, 0
        %v1321 = vsel %vm1272, %v646, 0
        %v1322 = vsel %vm1272, %v647, 0
        %v1323 = vsel %vm1273, %v648, 0
        %v1324 = vsel %vm1273, %v649, 0
        %v1325 = vsel %vm1273, %v650, 0
        %v1326 = vsel %vm1274, %v651, 0
        %v1327 = vsel %vm1274, %v652, 0
        %v1328 = vsel %vm1274, %v653, 0
        %v1329 = vsel %vm1275, %v654, 0
        %v1330 = vsel %vm1275, %v655, 0
        %v1331 = vsel %vm1275, %v656, 0
        %v1332 = vsel %vm1276, %v657, 0
        %v1333 = vsel %vm1276, %v658, 0
        %v1334 = vsel %vm1276, %v659, 0
        %v1335 = vsel %vm1277, %v660, 0
        %v1336 = vsel %vm1277, %v661, 0
        %v1337 = vsel %vm1277, %v662, 0
        %v1338 = vsel %vm1278, %v663, 0
        %v1339 = vsel %vm1278, %v664, 0
        %v1340 = vsel %vm1278, %v665, 0
        %v1341 = vsel %vm1279, %v666, 0
        %v1342 = vsel %vm1279, %v667, 0
        %v1343 = vsel %vm1279, %v668, 0
        %v1344 = vsel %vm1280, %v669, 0
        %v1345 = vsel %vm1280, %v670, 0
        %v1346 = vsel %vm1280, %v671, 0
        %v1347 = vsel %vm1281, %v672, 0
        %v1348 = vsel %vm1281, %v673, 0
        %v1349 = vsel %vm1281, %v674, 0
        %v1350 = vsel %vm1282, %v675, 0
        %v1351 = vsel %vm1282, %v676, 0
        %v1352 = vsel %vm1282, %v677, 0
        %v1353 = vsel %vm1283, %v678, 0
        %v1354 = vsel %vm1283, %v679, 0
        %v1355 = vsel %vm1283, %v680, 0
        %v1356 = vsel %vm1284, %v681, 0
        %v1357 = vsel %vm1284, %v682, 0
        %v1358 = vsel %vm1284, %v683, 0
        %v1359 = vsel %vm1285, %v684, 0
        %v1360 = vsel %vm1285, %v685, 0
        %v1361 = vsel %vm1285, %v686, 0
        %v1362 = vsel %vm1286, %v687, 0
        %v1363 = vsel %vm1286, %v688, 0
        %v1364 = vsel %vm1286, %v689, 0
        %v1365 = vsel %vm1287, %v690, 0
        %v1366 = vsel %vm1287, %v691, 0
        %v1367 = vsel %vm1287, %v692, 0
        %v1368 = vsel %vm1288, %v693, 0
        %v1369 = vsel %vm1288, %v694, 0
        %v1370 = vsel %vm1288, %v695, 0
        %v1371 = vsel %vm1289, %v696, 0
        %v1372 = vsel %vm1289, %v697, 0
        %v1373 = vsel %vm1289, %v698, 0
        %v1374 = vsel %vm1290, %v699, 0
        %v1375 = vsel %vm1290, %v700, 0
        %v1376 = vsel %vm1290, %v701, 0
        %v1377 = vsel %vm1291, %v702, 0
        %v1378 = vsel %vm1291, %v703, 0
        %v1379 = vsel %vm1291, %v704, 0
        %v1380 = vsel %vm1292, %v705, 0
        %v1381 = vsel %vm1292, %v706, 0
        %v1382 = vsel %vm1292, %v707, 0
        %v1383 = vsel %vm1293, %v708, 0
        %v1384 = vsel %vm1293, %v709, 0
        %v1385 = vsel %vm1293, %v710, 0
        %v1386 = vsel %vm1294, %v711, 0
        %v1387 = vsel %vm1294, %v712, 0
        %v1388 = vsel %vm1294, %v713, 0
        %v1389 = vsel %vm1295, %v714, 0
        %v1390 = vsel %vm1295, %v715, 0
        %v1391 = vsel %vm1295, %v716, 0
        %v1392 = vld [vmem:[#allocation10] sm:$0xf]
        %v1393 = vld [vmem:[#allocation10 + $0x4] sm:$0xf]
        %v1394 = vld [vmem:[#allocation10 + $0x8] sm:$0xf]
        %v1395 = vld [vmem:[#allocation10 + $0xc] sm:$0xf]
        %v1396 = vld [vmem:[#allocation10 + $0x10] sm:$0xf]
        %v1397 = vld [vmem:[#allocation10 + $0x14] sm:$0xf]
        %v1398 = vld [vmem:[#allocation10 + $0x18] sm:$0xf]
        %v1399 = vld [vmem:[#allocation10 + $0x1c] sm:$0xf]
        %v1400 = vld [vmem:[#allocation10 + $0x20] sm:$0xf]
        %v1401 = vld [vmem:[#allocation10 + $0x24] sm:$0xf]
        %v1402 = vld [vmem:[#allocation10 + $0x28] sm:$0xf]
        %v1403 = vld [vmem:[#allocation10 + $0x2c] sm:$0xf]
        %v1404 = vld [vmem:[#allocation10 + $0x30] sm:$0xf]
        %v1405 = vld [vmem:[#allocation10 + $0x34] sm:$0xf]
        %v1406 = vld [vmem:[#allocation10 + $0x38] sm:$0xf]
        %v1407 = vld [vmem:[#allocation10 + $0x3c] sm:$0xf]
        %v1408 = vld [vmem:[#allocation10 + $0x40] sm:$0xf]
        %v1409 = vld [vmem:[#allocation10 + $0x44] sm:$0xf]
        %v1410 = vld [vmem:[#allocation10 + $0x48] sm:$0xf]
        %v1411 = vld [vmem:[#allocation10 + $0x4c] sm:$0xf]
        %v1412 = vld [vmem:[#allocation10 + $0x50] sm:$0xf]
        %v1413 = vld [vmem:[#allocation10 + $0x54] sm:$0xf]
        %v1414 = vld [vmem:[#allocation10 + $0x58] sm:$0xf]
        %v1415 = vld [vmem:[#allocation10 + $0x5c] sm:$0xf]
        %v1416 = vld [vmem:[#allocation10 + $0x60] sm:$0xf]
        %v1417 = vld [vmem:[#allocation10 + $0x64] sm:$0xf]
        %v1418 = vld [vmem:[#allocation10 + $0x68] sm:$0xf]
        %v1419 = vld [vmem:[#allocation10 + $0x6c] sm:$0xf]
        %v1420 = vld [vmem:[#allocation10 + $0x70] sm:$0xf]
        %v1421 = vld [vmem:[#allocation10 + $0x74] sm:$0xf]
        %v1422 = vld [vmem:[#allocation10 + $0x78] sm:$0xf]
        %v1423 = vld [vmem:[#allocation10 + $0x7c] sm:$0xf]
        %v1424 = vld [vmem:[#allocation10 + $0x80] sm:$0xf]
        %v1425 = vld [vmem:[#allocation10 + $0x84] sm:$0xf]
        %v1426 = vld [vmem:[#allocation10 + $0x88] sm:$0xf]
        %v1427 = vld [vmem:[#allocation10 + $0x8c] sm:$0xf]
        %v1428 = vld [vmem:[#allocation10 + $0x90] sm:$0xf]
        %v1429 = vld [vmem:[#allocation10 + $0x94] sm:$0xf]
        %v1430 = vld [vmem:[#allocation10 + $0x98] sm:$0xf]
        %v1431 = vld [vmem:[#allocation10 + $0x9c] sm:$0xf]
        %v1432 = vld [vmem:[#allocation10 + $0xa0] sm:$0xf]
        %v1433 = vld [vmem:[#allocation10 + $0xa4] sm:$0xf]
        %v1434 = vld [vmem:[#allocation10 + $0xa8] sm:$0xf]
        %v1435 = vld [vmem:[#allocation10 + $0xac] sm:$0xf]
        %v1436 = vld [vmem:[#allocation10 + $0xb0] sm:$0xf]
        %v1437 = vld [vmem:[#allocation10 + $0xb4] sm:$0xf]
        %v1438 = vld [vmem:[#allocation10 + $0xb8] sm:$0xf]
        %v1439 = vld [vmem:[#allocation10 + $0xbc] sm:$0xf]
        %v1440 = vld [vmem:[#allocation12] sm:$0x1]
        %v1442 = vlaneseq
        %v1443 = vshrl.u32 %v1442, 7
        %v1444 = vsub.s32 0, %v1443
        %v1445 = vrot.slane %v1440, %v1444
        %v1495 = vunpack.c.l.b16 %v1392
        %v1496 = vunpack.c.l.b16 %v1393
        %v1497 = vunpack.c.l.b16 %v1394
        %v1498 = vunpack.c.l.b16 %v1395
        %v1499 = vunpack.c.l.b16 %v1396
        %v1500 = vunpack.c.l.b16 %v1397
        %v1501 = vunpack.c.l.b16 %v1398
        %v1502 = vunpack.c.l.b16 %v1399
        %v1503 = vunpack.c.l.b16 %v1400
        %v1504 = vunpack.c.l.b16 %v1401
        %v1505 = vunpack.c.l.b16 %v1402
        %v1506 = vunpack.c.l.b16 %v1403
        %v1507 = vunpack.c.l.b16 %v1404
        %v1508 = vunpack.c.l.b16 %v1405
        %v1509 = vunpack.c.l.b16 %v1406
        %v1510 = vunpack.c.l.b16 %v1407
        %v1511 = vunpack.c.l.b16 %v1408
        %v1512 = vunpack.c.l.b16 %v1409
        %v1513 = vunpack.c.l.b16 %v1410
        %v1514 = vunpack.c.l.b16 %v1411
        %v1515 = vunpack.c.l.b16 %v1412
        %v1516 = vunpack.c.l.b16 %v1413
        %v1517 = vunpack.c.l.b16 %v1414
        %v1518 = vunpack.c.l.b16 %v1415
        %v1519 = vunpack.c.l.b16 %v1416
        %v1520 = vunpack.c.l.b16 %v1417
        %v1521 = vunpack.c.l.b16 %v1418
        %v1522 = vunpack.c.l.b16 %v1419
        %v1523 = vunpack.c.l.b16 %v1420
        %v1524 = vunpack.c.l.b16 %v1421
        %v1525 = vunpack.c.l.b16 %v1422
        %v1526 = vunpack.c.l.b16 %v1423
        %v1527 = vunpack.c.l.b16 %v1424
        %v1528 = vunpack.c.l.b16 %v1425
        %v1529 = vunpack.c.l.b16 %v1426
        %v1530 = vunpack.c.l.b16 %v1427
        %v1531 = vunpack.c.l.b16 %v1428
        %v1532 = vunpack.c.l.b16 %v1429
        %v1533 = vunpack.c.l.b16 %v1430
        %v1534 = vunpack.c.l.b16 %v1431
        %v1535 = vunpack.c.l.b16 %v1432
        %v1536 = vunpack.c.l.b16 %v1433
        %v1537 = vunpack.c.l.b16 %v1434
        %v1538 = vunpack.c.l.b16 %v1435
        %v1539 = vunpack.c.l.b16 %v1436
        %v1540 = vunpack.c.l.b16 %v1437
        %v1541 = vunpack.c.l.b16 %v1438
        %v1542 = vunpack.c.l.b16 %v1439
        %v1543 = vpack.c.b16 %v1496, %v1495
        %v1544 = vpack.c.b16 %v1498, %v1497
        %v1545 = vpack.c.b16 %v1500, %v1499
        %v1546 = vpack.c.b16 %v1502, %v1501
        %v1547 = vpack.c.b16 %v1504, %v1503
        %v1548 = vpack.c.b16 %v1506, %v1505
        %v1549 = vpack.c.b16 %v1508, %v1507
        %v1550 = vpack.c.b16 %v1510, %v1509
        %v1551 = vpack.c.b16 %v1512, %v1511
        %v1552 = vpack.c.b16 %v1514, %v1513
        %v1553 = vpack.c.b16 %v1516, %v1515
        %v1554 = vpack.c.b16 %v1518, %v1517
        %v1555 = vpack.c.b16 %v1520, %v1519
        %v1556 = vpack.c.b16 %v1522, %v1521
        %v1557 = vpack.c.b16 %v1524, %v1523
        %v1558 = vpack.c.b16 %v1526, %v1525
        %v1559 = vpack.c.b16 %v1528, %v1527
        %v1560 = vpack.c.b16 %v1530, %v1529
        %v1561 = vpack.c.b16 %v1532, %v1531
        %v1562 = vpack.c.b16 %v1534, %v1533
        %v1563 = vpack.c.b16 %v1536, %v1535
        %v1564 = vpack.c.b16 %v1538, %v1537
        %v1565 = vpack.c.b16 %v1540, %v1539
        %v1566 = vpack.c.b16 %v1542, %v1541
        %1591 = vmatprep.subr.bf16.mxu0 0
        %1592 = vmatpush1.bf16.msra.mxu0 %v1550
        %1593 = vmatprep.subr.bf16.mxu0 0
        %1594 = vmatpush1.bf16.msra.mxu0 %v1549
        %1595 = vmatprep.subr.bf16.mxu0 0
        %1596 = vmatpush1.bf16.msra.mxu0 %v1548
        %1597 = vmatprep.subr.bf16.mxu0 0
        %1598 = vmatpush1.bf16.msra.mxu0 %v1547
        %1599 = vmatprep.subr.bf16.mxu0 0
        %1600 = vmatpush1.bf16.msra.mxu0 %v1546
        %1601 = vmatprep.subr.bf16.mxu0 0
        %1602 = vmatpush1.bf16.msra.mxu0 %v1545
        %1603 = vmatprep.subr.bf16.mxu0 0
        %1604 = vmatpush1.bf16.msra.mxu0 %v1544
        %1605 = vmatprep.subr.bf16.mxu0 0
        %1606 = vmatpush1.bf16.msra.mxu0 %v1543
        %1607 = vmatprep.subr.bf16.mxu0 0
        %1608 = vmatpush2.bf16.msra.mxu0 %v1558
        %1609 = vmatprep.subr.bf16.mxu0 0
        %1610 = vmatpush2.bf16.msra.mxu0 %v1557
        %1611 = vmatprep.subr.bf16.mxu0 0
        %1612 = vmatpush2.bf16.msra.mxu0 %v1556
        %1613 = vmatprep.subr.bf16.mxu0 0
        %1614 = vmatpush2.bf16.msra.mxu0 %v1555
        %1615 = vmatprep.subr.bf16.mxu0 0
        %1616 = vmatpush2.bf16.msra.mxu0 %v1554
        %1617 = vmatprep.subr.bf16.mxu0 0
        %1618 = vmatpush2.bf16.msra.mxu0 %v1553
        %1619 = vmatprep.subr.bf16.mxu0 0
        %1620 = vmatpush2.bf16.msra.mxu0 %v1552
        %1621 = vmatprep.subr.bf16.mxu0 0
        %1622 = vmatpush2.bf16.msra.mxu0 %v1551
        %1623 = vmatprep.mubr.bf16.mxu0 %v1297
        %1624 = vmatmul.mubr.bf16.gmra.mxu0 %v1296
        %v1625 = vpop.f32.mrf.mxu0
        %v1626 = vadd.f32 %v1445, %v1625
        %v1627 = vpop.f32.mrf.mxu0
        %v1628 = vpop.f32.mrf.mxu0
        %v1629 = vadd.f32 %v1445, %v1628
        %v1630 = vpop.f32.mrf.mxu0
        %1631 = vmatprep.mubr.bf16.mxu0 %v1300
        %1632 = vmatmul.mubr.bf16.gmra.mxu0 %v1299
        %v1633 = vpop.f32.mrf.mxu0
        %v1634 = vadd.f32 %v1445, %v1633
        %v1635 = vpop.f32.mrf.mxu0
        %v1636 = vpop.f32.mrf.mxu0
        %v1637 = vadd.f32 %v1445, %v1636
        %v1638 = vpop.f32.mrf.mxu0
        %1639 = vmatprep.mubr.bf16.mxu0 %v1303
        %1640 = vmatmul.mubr.bf16.gmra.mxu0 %v1302
        %v1641 = vpop.f32.mrf.mxu0
        %v1642 = vadd.f32 %v1445, %v1641
        %v1643 = vpop.f32.mrf.mxu0
        %v1644 = vpop.f32.mrf.mxu0
        %v1645 = vadd.f32 %v1445, %v1644
        %v1646 = vpop.f32.mrf.mxu0
        %1647 = vmatprep.mubr.bf16.mxu0 %v1306
        %1648 = vmatmul.mubr.bf16.gmra.mxu0 %v1305
        %v1649 = vpop.f32.mrf.mxu0
        %v1650 = vadd.f32 %v1445, %v1649
        %v1651 = vpop.f32.mrf.mxu0
        %v1652 = vpop.f32.mrf.mxu0
        %v1653 = vadd.f32 %v1445, %v1652
        %v1654 = vpop.f32.mrf.mxu0
        %1655 = vmatprep.mubr.bf16.mxu0 %v1309
        %1656 = vmatmul.mubr.bf16.gmra.mxu0 %v1308
        %v1657 = vpop.f32.mrf.mxu0
        %v1658 = vadd.f32 %v1445, %v1657
        %v1659 = vpop.f32.mrf.mxu0
        %v1660 = vpop.f32.mrf.mxu0
        %v1661 = vadd.f32 %v1445, %v1660
        %v1662 = vpop.f32.mrf.mxu0
        %1663 = vmatprep.mubr.bf16.mxu0 %v1312
        %1664 = vmatmul.mubr.bf16.gmra.mxu0 %v1311
        %v1665 = vpop.f32.mrf.mxu0
        %v1666 = vadd.f32 %v1445, %v1665
        %v1667 = vpop.f32.mrf.mxu0
        %v1668 = vpop.f32.mrf.mxu0
        %v1669 = vadd.f32 %v1445, %v1668
        %v1670 = vpop.f32.mrf.mxu0
        %1671 = vmatprep.mubr.bf16.mxu0 %v1315
        %1672 = vmatmul.mubr.bf16.gmra.mxu0 %v1314
        %v1673 = vpop.f32.mrf.mxu0
        %v1674 = vadd.f32 %v1445, %v1673
        %v1675 = vpop.f32.mrf.mxu0
        %v1676 = vpop.f32.mrf.mxu0
        %v1677 = vadd.f32 %v1445, %v1676
        %v1678 = vpop.f32.mrf.mxu0
        %1679 = vmatprep.mubr.bf16.mxu0 %v1318
        %1680 = vmatmul.mubr.bf16.gmra.mxu0 %v1317
        %v1681 = vpop.f32.mrf.mxu0
        %v1682 = vadd.f32 %v1445, %v1681
        %v1683 = vpop.f32.mrf.mxu0
        %v1684 = vpop.f32.mrf.mxu0
        %v1685 = vadd.f32 %v1445, %v1684
        %v1686 = vpop.f32.mrf.mxu0
        %1687 = vmatprep.mubr.bf16.mxu0 %v1321
        %1688 = vmatmul.mubr.bf16.gmra.mxu0 %v1320
        %v1689 = vpop.f32.mrf.mxu0
        %v1690 = vadd.f32 %v1445, %v1689
        %v1691 = vpop.f32.mrf.mxu0
        %v1692 = vpop.f32.mrf.mxu0
        %v1693 = vadd.f32 %v1445, %v1692
        %v1694 = vpop.f32.mrf.mxu0
        %1695 = vmatprep.mubr.bf16.mxu0 %v1324
        %1696 = vmatmul.mubr.bf16.gmra.mxu0 %v1323
        %v1697 = vpop.f32.mrf.mxu0
        %v1698 = vadd.f32 %v1445, %v1697
        %v1699 = vpop.f32.mrf.mxu0
        %v1700 = vpop.f32.mrf.mxu0
        %v1701 = vadd.f32 %v1445, %v1700
        %v1702 = vpop.f32.mrf.mxu0
        %1703 = vmatprep.mubr.bf16.mxu0 %v1327
        %1704 = vmatmul.mubr.bf16.gmra.mxu0 %v1326
        %v1705 = vpop.f32.mrf.mxu0
        %v1706 = vadd.f32 %v1445, %v1705
        %v1707 = vpop.f32.mrf.mxu0
        %v1708 = vpop.f32.mrf.mxu0
        %v1709 = vadd.f32 %v1445, %v1708
        %v1710 = vpop.f32.mrf.mxu0
        %1711 = vmatprep.mubr.bf16.mxu0 %v1330
        %1712 = vmatmul.mubr.bf16.gmra.mxu0 %v1329
        %v1713 = vpop.f32.mrf.mxu0
        %v1714 = vadd.f32 %v1445, %v1713
        %v1715 = vpop.f32.mrf.mxu0
        %v1716 = vpop.f32.mrf.mxu0
        %v1717 = vadd.f32 %v1445, %v1716
        %v1718 = vpop.f32.mrf.mxu0
        %1719 = vmatprep.mubr.bf16.mxu0 %v1333
        %1720 = vmatmul.mubr.bf16.gmra.mxu0 %v1332
        %v1721 = vpop.f32.mrf.mxu0
        %v1722 = vadd.f32 %v1445, %v1721
        %v1723 = vpop.f32.mrf.mxu0
        %v1724 = vpop.f32.mrf.mxu0
        %v1725 = vadd.f32 %v1445, %v1724
        %v1726 = vpop.f32.mrf.mxu0
        %1727 = vmatprep.mubr.bf16.mxu0 %v1336
        %1728 = vmatmul.mubr.bf16.gmra.mxu0 %v1335
        %v1729 = vpop.f32.mrf.mxu0
        %v1730 = vadd.f32 %v1445, %v1729
        %v1731 = vpop.f32.mrf.mxu0
        %v1732 = vpop.f32.mrf.mxu0
        %v1733 = vadd.f32 %v1445, %v1732
        %v1734 = vpop.f32.mrf.mxu0
        %1735 = vmatprep.mubr.bf16.mxu0 %v1339
        %1736 = vmatmul.mubr.bf16.gmra.mxu0 %v1338
        %v1737 = vpop.f32.mrf.mxu0
        %v1738 = vadd.f32 %v1445, %v1737
        %v1739 = vpop.f32.mrf.mxu0
        %v1740 = vpop.f32.mrf.mxu0
        %v1741 = vadd.f32 %v1445, %v1740
        %v1742 = vpop.f32.mrf.mxu0
        %1743 = vmatprep.mubr.bf16.mxu0 %v1342
        %1744 = vmatmul.mubr.bf16.gmra.mxu0 %v1341
        %v1745 = vpop.f32.mrf.mxu0
        %v1746 = vadd.f32 %v1445, %v1745
        %v1747 = vpop.f32.mrf.mxu0
        %v1748 = vpop.f32.mrf.mxu0
        %v1749 = vadd.f32 %v1445, %v1748
        %v1750 = vpop.f32.mrf.mxu0
        %1751 = vmatprep.mubr.bf16.mxu0 %v1345
        %1752 = vmatmul.mubr.bf16.gmra.mxu0 %v1344
        %v1753 = vpop.f32.mrf.mxu0
        %v1754 = vadd.f32 %v1445, %v1753
        %v1755 = vpop.f32.mrf.mxu0
        %v1756 = vpop.f32.mrf.mxu0
        %v1757 = vadd.f32 %v1445, %v1756
        %v1758 = vpop.f32.mrf.mxu0
        %1759 = vmatprep.mubr.bf16.mxu0 %v1348
        %1760 = vmatmul.mubr.bf16.gmra.mxu0 %v1347
        %v1761 = vpop.f32.mrf.mxu0
        %v1762 = vadd.f32 %v1445, %v1761
        %v1763 = vpop.f32.mrf.mxu0
        %v1764 = vpop.f32.mrf.mxu0
        %v1765 = vadd.f32 %v1445, %v1764
        %v1766 = vpop.f32.mrf.mxu0
        %1767 = vmatprep.mubr.bf16.mxu0 %v1351
        %1768 = vmatmul.mubr.bf16.gmra.mxu0 %v1350
        %v1769 = vpop.f32.mrf.mxu0
        %v1770 = vadd.f32 %v1445, %v1769
        %v1771 = vpop.f32.mrf.mxu0
        %v1772 = vpop.f32.mrf.mxu0
        %v1773 = vadd.f32 %v1445, %v1772
        %v1774 = vpop.f32.mrf.mxu0
        %1775 = vmatprep.mubr.bf16.mxu0 %v1354
        %1776 = vmatmul.mubr.bf16.gmra.mxu0 %v1353
        %v1777 = vpop.f32.mrf.mxu0
        %v1778 = vadd.f32 %v1445, %v1777
        %v1779 = vpop.f32.mrf.mxu0
        %v1780 = vpop.f32.mrf.mxu0
        %v1781 = vadd.f32 %v1445, %v1780
        %v1782 = vpop.f32.mrf.mxu0
        %1783 = vmatprep.mubr.bf16.mxu0 %v1357
        %1784 = vmatmul.mubr.bf16.gmra.mxu0 %v1356
        %v1785 = vpop.f32.mrf.mxu0
        %v1786 = vadd.f32 %v1445, %v1785
        %v1787 = vpop.f32.mrf.mxu0
        %v1788 = vpop.f32.mrf.mxu0
        %v1789 = vadd.f32 %v1445, %v1788
        %v1790 = vpop.f32.mrf.mxu0
        %1791 = vmatprep.mubr.bf16.mxu0 %v1360
        %1792 = vmatmul.mubr.bf16.gmra.mxu0 %v1359
        %v1793 = vpop.f32.mrf.mxu0
        %v1794 = vadd.f32 %v1445, %v1793
        %v1795 = vpop.f32.mrf.mxu0
        %v1796 = vpop.f32.mrf.mxu0
        %v1797 = vadd.f32 %v1445, %v1796
        %v1798 = vpop.f32.mrf.mxu0
        %1799 = vmatprep.mubr.bf16.mxu0 %v1363
        %1800 = vmatmul.mubr.bf16.gmra.mxu0 %v1362
        %v1801 = vpop.f32.mrf.mxu0
        %v1802 = vadd.f32 %v1445, %v1801
        %v1803 = vpop.f32.mrf.mxu0
        %v1804 = vpop.f32.mrf.mxu0
        %v1805 = vadd.f32 %v1445, %v1804
        %v1806 = vpop.f32.mrf.mxu0
        %1807 = vmatprep.mubr.bf16.mxu0 %v1366
        %1808 = vmatmul.mubr.bf16.gmra.mxu0 %v1365
        %v1809 = vpop.f32.mrf.mxu0
        %v1810 = vadd.f32 %v1445, %v1809
        %v1811 = vpop.f32.mrf.mxu0
        %v1812 = vpop.f32.mrf.mxu0
        %v1813 = vadd.f32 %v1445, %v1812
        %v1814 = vpop.f32.mrf.mxu0
        %1815 = vmatprep.mubr.bf16.mxu0 %v1369
        %1816 = vmatmul.mubr.bf16.gmra.mxu0 %v1368
        %v1817 = vpop.f32.mrf.mxu0
        %v1818 = vadd.f32 %v1445, %v1817
        %v1819 = vpop.f32.mrf.mxu0
        %v1820 = vpop.f32.mrf.mxu0
        %v1821 = vadd.f32 %v1445, %v1820
        %v1822 = vpop.f32.mrf.mxu0
        %1823 = vmatprep.mubr.bf16.mxu0 %v1372
        %1824 = vmatmul.mubr.bf16.gmra.mxu0 %v1371
        %v1825 = vpop.f32.mrf.mxu0
        %v1826 = vadd.f32 %v1445, %v1825
        %v1827 = vpop.f32.mrf.mxu0
        %v1828 = vpop.f32.mrf.mxu0
        %v1829 = vadd.f32 %v1445, %v1828
        %v1830 = vpop.f32.mrf.mxu0
        %1831 = vmatprep.mubr.bf16.mxu0 %v1375
        %1832 = vmatmul.mubr.bf16.gmra.mxu0 %v1374
        %v1833 = vpop.f32.mrf.mxu0
        %v1834 = vadd.f32 %v1445, %v1833
        %v1835 = vpop.f32.mrf.mxu0
        %v1836 = vpop.f32.mrf.mxu0
        %v1837 = vadd.f32 %v1445, %v1836
        %v1838 = vpop.f32.mrf.mxu0
        %1839 = vmatprep.mubr.bf16.mxu0 %v1378
        %1840 = vmatmul.mubr.bf16.gmra.mxu0 %v1377
        %v1841 = vpop.f32.mrf.mxu0
        %v1842 = vadd.f32 %v1445, %v1841
        %v1843 = vpop.f32.mrf.mxu0
        %v1844 = vpop.f32.mrf.mxu0
        %v1845 = vadd.f32 %v1445, %v1844
        %v1846 = vpop.f32.mrf.mxu0
        %1847 = vmatprep.mubr.bf16.mxu0 %v1381
        %1848 = vmatmul.mubr.bf16.gmra.mxu0 %v1380
        %v1849 = vpop.f32.mrf.mxu0
        %v1850 = vadd.f32 %v1445, %v1849
        %v1851 = vpop.f32.mrf.mxu0
        %v1852 = vpop.f32.mrf.mxu0
        %v1853 = vadd.f32 %v1445, %v1852
        %v1854 = vpop.f32.mrf.mxu0
        %1855 = vmatprep.mubr.bf16.mxu0 %v1384
        %1856 = vmatmul.mubr.bf16.gmra.mxu0 %v1383
        %v1857 = vpop.f32.mrf.mxu0
        %v1858 = vadd.f32 %v1445, %v1857
        %v1859 = vpop.f32.mrf.mxu0
        %v1860 = vpop.f32.mrf.mxu0
        %v1861 = vadd.f32 %v1445, %v1860
        %v1862 = vpop.f32.mrf.mxu0
        %1863 = vmatprep.mubr.bf16.mxu0 %v1387
        %1864 = vmatmul.mubr.bf16.gmra.mxu0 %v1386
        %v1865 = vpop.f32.mrf.mxu0
        %v1866 = vadd.f32 %v1445, %v1865
        %v1867 = vpop.f32.mrf.mxu0
        %v1868 = vpop.f32.mrf.mxu0
        %v1869 = vadd.f32 %v1445, %v1868
        %v1870 = vpop.f32.mrf.mxu0
        %1871 = vmatprep.mubr.bf16.mxu0 %v1390
        %1872 = vmatmul.mubr.bf16.gmra.mxu0 %v1389
        %v1873 = vpop.f32.mrf.mxu0
        %v1874 = vadd.f32 %v1445, %v1873
        %v1875 = vpop.f32.mrf.mxu0
        %v1876 = vpop.f32.mrf.mxu0
        %v1877 = vadd.f32 %v1445, %v1876
        %v1878 = vpop.f32.mrf.mxu0
        %1879 = vdwg.mxu0
        %1880 = vmatprep.subr.bf16.mxu0 0
        %1881 = vmatpush1.bf16.msra.mxu0 %v1566
        %1882 = vmatprep.subr.bf16.mxu0 0
        %1883 = vmatpush1.bf16.msra.mxu0 %v1565
        %1884 = vmatprep.subr.bf16.mxu0 0
        %1885 = vmatpush1.bf16.msra.mxu0 %v1564
        %1886 = vmatprep.subr.bf16.mxu0 0
        %1887 = vmatpush1.bf16.msra.mxu0 %v1563
        %1888 = vmatprep.subr.bf16.mxu0 0
        %1889 = vmatpush1.bf16.msra.mxu0 %v1562
        %1890 = vmatprep.subr.bf16.mxu0 0
        %1891 = vmatpush1.bf16.msra.mxu0 %v1561
        %1892 = vmatprep.subr.bf16.mxu0 0
        %1893 = vmatpush1.bf16.msra.mxu0 %v1560
        %1894 = vmatprep.subr.bf16.mxu0 0
        %1895 = vmatpush1.bf16.msra.mxu0 %v1559
        %1896 = vmatprep.subr.bf16.mxu0 0
        %1897 = vmatpush2.bf16.msra.mxu0 0
        %1898 = vmatprep.subr.bf16.mxu0 0
        %1899 = vmatpush2.bf16.msra.mxu0 0
        %1900 = vmatprep.subr.bf16.mxu0 0
        %1901 = vmatpush2.bf16.msra.mxu0 0
        %1902 = vmatprep.subr.bf16.mxu0 0
        %1903 = vmatpush2.bf16.msra.mxu0 0
        %1904 = vmatprep.subr.bf16.mxu0 0
        %1905 = vmatpush2.bf16.msra.mxu0 0
        %1906 = vmatprep.subr.bf16.mxu0 0
        %1907 = vmatpush2.bf16.msra.mxu0 0
        %1908 = vmatprep.subr.bf16.mxu0 0
        %1909 = vmatpush2.bf16.msra.mxu0 0
        %1910 = vmatprep.subr.bf16.mxu0 0
        %1911 = vmatpush2.bf16.msra.mxu0 0
        %1912 = vmatprep.mubr.bf16.mxu0 0
        %1913 = vmatmul.mubr.bf16.gmra.mxu0 %v1298
        %v1914 = vpop.f32.mrf.mxu0
        %v1915 = vadd.f32 %v1626, %v1914
        %v1916 = vpop.f32.mrf.mxu0
        %v1917 = vpop.f32.mrf.mxu0
        %v1918 = vadd.f32 %v1629, %v1917
        %v1919 = vpop.f32.mrf.mxu0
        %1920 = vmatprep.mubr.bf16.mxu0 0
        %1921 = vmatmul.mubr.bf16.gmra.mxu0 %v1301
        %v1922 = vpop.f32.mrf.mxu0
        %v1923 = vadd.f32 %v1634, %v1922
        %v1924 = vpop.f32.mrf.mxu0
        %v1925 = vpop.f32.mrf.mxu0
        %v1926 = vadd.f32 %v1637, %v1925
        %v1927 = vpop.f32.mrf.mxu0
        %1928 = vmatprep.mubr.bf16.mxu0 0
        %1929 = vmatmul.mubr.bf16.gmra.mxu0 %v1304
        %v1930 = vpop.f32.mrf.mxu0
        %v1931 = vadd.f32 %v1642, %v1930
        %v1932 = vpop.f32.mrf.mxu0
        %v1933 = vpop.f32.mrf.mxu0
        %v1934 = vadd.f32 %v1645, %v1933
        %v1935 = vpop.f32.mrf.mxu0
        %1936 = vmatprep.mubr.bf16.mxu0 0
        %1937 = vmatmul.mubr.bf16.gmra.mxu0 %v1307
        %v1938 = vpop.f32.mrf.mxu0
        %v1939 = vadd.f32 %v1650, %v1938
        %v1940 = vpop.f32.mrf.mxu0
        %v1941 = vpop.f32.mrf.mxu0
        %v1942 = vadd.f32 %v1653, %v1941
        %v1943 = vpop.f32.mrf.mxu0
        %1944 = vmatprep.mubr.bf16.mxu0 0
        %1945 = vmatmul.mubr.bf16.gmra.mxu0 %v1310
        %v1946 = vpop.f32.mrf.mxu0
        %v1947 = vadd.f32 %v1658, %v1946
        %v1948 = vpop.f32.mrf.mxu0
        %v1949 = vpop.f32.mrf.mxu0
        %v1950 = vadd.f32 %v1661, %v1949
        %v1951 = vpop.f32.mrf.mxu0
        %1952 = vmatprep.mubr.bf16.mxu0 0
        %1953 = vmatmul.mubr.bf16.gmra.mxu0 %v1313
        %v1954 = vpop.f32.mrf.mxu0
        %v1955 = vadd.f32 %v1666, %v1954
        %v1956 = vpop.f32.mrf.mxu0
        %v1957 = vpop.f32.mrf.mxu0
        %v1958 = vadd.f32 %v1669, %v1957
        %v1959 = vpop.f32.mrf.mxu0
        %1960 = vmatprep.mubr.bf16.mxu0 0
        %1961 = vmatmul.mubr.bf16.gmra.mxu0 %v1316
        %v1962 = vpop.f32.mrf.mxu0
        %v1963 = vadd.f32 %v1674, %v1962
        %v1964 = vpop.f32.mrf.mxu0
        %v1965 = vpop.f32.mrf.mxu0
        %v1966 = vadd.f32 %v1677, %v1965
        %v1967 = vpop.f32.mrf.mxu0
        %1968 = vmatprep.mubr.bf16.mxu0 0
        %1969 = vmatmul.mubr.bf16.gmra.mxu0 %v1319
        %v1970 = vpop.f32.mrf.mxu0
        %v1971 = vadd.f32 %v1682, %v1970
        %v1972 = vpop.f32.mrf.mxu0
        %v1973 = vpop.f32.mrf.mxu0
        %v1974 = vadd.f32 %v1685, %v1973
        %v1975 = vpop.f32.mrf.mxu0
        %1976 = vmatprep.mubr.bf16.mxu0 0
        %1977 = vmatmul.mubr.bf16.gmra.mxu0 %v1322
        %v1978 = vpop.f32.mrf.mxu0
        %v1979 = vadd.f32 %v1690, %v1978
        %v1980 = vpop.f32.mrf.mxu0
        %v1981 = vpop.f32.mrf.mxu0
        %v1982 = vadd.f32 %v1693, %v1981
        %v1983 = vpop.f32.mrf.mxu0
        %1984 = vmatprep.mubr.bf16.mxu0 0
        %1985 = vmatmul.mubr.bf16.gmra.mxu0 %v1325
        %v1986 = vpop.f32.mrf.mxu0
        %v1987 = vadd.f32 %v1698, %v1986
        %v1988 = vpop.f32.mrf.mxu0
        %v1989 = vpop.f32.mrf.mxu0
        %v1990 = vadd.f32 %v1701, %v1989
        %v1991 = vpop.f32.mrf.mxu0
        %1992 = vmatprep.mubr.bf16.mxu0 0
        %1993 = vmatmul.mubr.bf16.gmra.mxu0 %v1328
        %v1994 = vpop.f32.mrf.mxu0
        %v1995 = vadd.f32 %v1706, %v1994
        %v1996 = vpop.f32.mrf.mxu0
        %v1997 = vpop.f32.mrf.mxu0
        %v1998 = vadd.f32 %v1709, %v1997
        %v1999 = vpop.f32.mrf.mxu0
        %2000 = vmatprep.mubr.bf16.mxu0 0
        %2001 = vmatmul.mubr.bf16.gmra.mxu0 %v1331
        %v2002 = vpop.f32.mrf.mxu0
        %v2003 = vadd.f32 %v1714, %v2002
        %v2004 = vpop.f32.mrf.mxu0
        %v2005 = vpop.f32.mrf.mxu0
        %v2006 = vadd.f32 %v1717, %v2005
        %v2007 = vpop.f32.mrf.mxu0
        %2008 = vmatprep.mubr.bf16.mxu0 0
        %2009 = vmatmul.mubr.bf16.gmra.mxu0 %v1334
        %v2010 = vpop.f32.mrf.mxu0
        %v2011 = vadd.f32 %v1722, %v2010
        %v2012 = vpop.f32.mrf.mxu0
        %v2013 = vpop.f32.mrf.mxu0
        %v2014 = vadd.f32 %v1725, %v2013
        %v2015 = vpop.f32.mrf.mxu0
        %2016 = vmatprep.mubr.bf16.mxu0 0
        %2017 = vmatmul.mubr.bf16.gmra.mxu0 %v1337
        %v2018 = vpop.f32.mrf.mxu0
        %v2019 = vadd.f32 %v1730, %v2018
        %v2020 = vpop.f32.mrf.mxu0
        %v2021 = vpop.f32.mrf.mxu0
        %v2022 = vadd.f32 %v1733, %v2021
        %v2023 = vpop.f32.mrf.mxu0
        %2024 = vmatprep.mubr.bf16.mxu0 0
        %2025 = vmatmul.mubr.bf16.gmra.mxu0 %v1340
        %v2026 = vpop.f32.mrf.mxu0
        %v2027 = vadd.f32 %v1738, %v2026
        %v2028 = vpop.f32.mrf.mxu0
        %v2029 = vpop.f32.mrf.mxu0
        %v2030 = vadd.f32 %v1741, %v2029
        %v2031 = vpop.f32.mrf.mxu0
        %2032 = vmatprep.mubr.bf16.mxu0 0
        %2033 = vmatmul.mubr.bf16.gmra.mxu0 %v1343
        %v2034 = vpop.f32.mrf.mxu0
        %v2035 = vadd.f32 %v1746, %v2034
        %v2036 = vpop.f32.mrf.mxu0
        %v2037 = vpop.f32.mrf.mxu0
        %v2038 = vadd.f32 %v1749, %v2037
        %v2039 = vpop.f32.mrf.mxu0
        %2040 = vmatprep.mubr.bf16.mxu0 0
        %2041 = vmatmul.mubr.bf16.gmra.mxu0 %v1346
        %v2042 = vpop.f32.mrf.mxu0
        %v2043 = vadd.f32 %v1754, %v2042
        %v2044 = vpop.f32.mrf.mxu0
        %v2045 = vpop.f32.mrf.mxu0
        %v2046 = vadd.f32 %v1757, %v2045
        %v2047 = vpop.f32.mrf.mxu0
        %2048 = vmatprep.mubr.bf16.mxu0 0
        %2049 = vmatmul.mubr.bf16.gmra.mxu0 %v1349
        %v2050 = vpop.f32.mrf.mxu0
        %v2051 = vadd.f32 %v1762, %v2050
        %v2052 = vpop.f32.mrf.mxu0
        %v2053 = vpop.f32.mrf.mxu0
        %v2054 = vadd.f32 %v1765, %v2053
        %v2055 = vpop.f32.mrf.mxu0
        %2056 = vmatprep.mubr.bf16.mxu0 0
        %2057 = vmatmul.mubr.bf16.gmra.mxu0 %v1352
        %v2058 = vpop.f32.mrf.mxu0
        %v2059 = vadd.f32 %v1770, %v2058
        %v2060 = vpop.f32.mrf.mxu0
        %v2061 = vpop.f32.mrf.mxu0
        %v2062 = vadd.f32 %v1773, %v2061
        %v2063 = vpop.f32.mrf.mxu0
        %2064 = vmatprep.mubr.bf16.mxu0 0
        %2065 = vmatmul.mubr.bf16.gmra.mxu0 %v1355
        %v2066 = vpop.f32.mrf.mxu0
        %v2067 = vadd.f32 %v1778, %v2066
        %v2068 = vpop.f32.mrf.mxu0
        %v2069 = vpop.f32.mrf.mxu0
        %v2070 = vadd.f32 %v1781, %v2069
        %v2071 = vpop.f32.mrf.mxu0
        %2072 = vmatprep.mubr.bf16.mxu0 0
        %2073 = vmatmul.mubr.bf16.gmra.mxu0 %v1358
        %v2074 = vpop.f32.mrf.mxu0
        %v2075 = vadd.f32 %v1786, %v2074
        %v2076 = vpop.f32.mrf.mxu0
        %v2077 = vpop.f32.mrf.mxu0
        %v2078 = vadd.f32 %v1789, %v2077
        %v2079 = vpop.f32.mrf.mxu0
        %2080 = vmatprep.mubr.bf16.mxu0 0
        %2081 = vmatmul.mubr.bf16.gmra.mxu0 %v1361
        %v2082 = vpop.f32.mrf.mxu0
        %v2083 = vadd.f32 %v1794, %v2082
        %v2084 = vpop.f32.mrf.mxu0
        %v2085 = vpop.f32.mrf.mxu0
        %v2086 = vadd.f32 %v1797, %v2085
        %v2087 = vpop.f32.mrf.mxu0
        %2088 = vmatprep.mubr.bf16.mxu0 0
        %2089 = vmatmul.mubr.bf16.gmra.mxu0 %v1364
        %v2090 = vpop.f32.mrf.mxu0
        %v2091 = vadd.f32 %v1802, %v2090
        %v2092 = vpop.f32.mrf.mxu0
        %v2093 = vpop.f32.mrf.mxu0
        %v2094 = vadd.f32 %v1805, %v2093
        %v2095 = vpop.f32.mrf.mxu0
        %2096 = vmatprep.mubr.bf16.mxu0 0
        %2097 = vmatmul.mubr.bf16.gmra.mxu0 %v1367
        %v2098 = vpop.f32.mrf.mxu0
        %v2099 = vadd.f32 %v1810, %v2098
        %v2100 = vpop.f32.mrf.mxu0
        %v2101 = vpop.f32.mrf.mxu0
        %v2102 = vadd.f32 %v1813, %v2101
        %v2103 = vpop.f32.mrf.mxu0
        %2104 = vmatprep.mubr.bf16.mxu0 0
        %2105 = vmatmul.mubr.bf16.gmra.mxu0 %v1370
        %v2106 = vpop.f32.mrf.mxu0
        %v2107 = vadd.f32 %v1818, %v2106
        %v2108 = vpop.f32.mrf.mxu0
        %v2109 = vpop.f32.mrf.mxu0
        %v2110 = vadd.f32 %v1821, %v2109
        %v2111 = vpop.f32.mrf.mxu0
        %2112 = vmatprep.mubr.bf16.mxu0 0
        %2113 = vmatmul.mubr.bf16.gmra.mxu0 %v1373
        %v2114 = vpop.f32.mrf.mxu0
        %v2115 = vadd.f32 %v1826, %v2114
        %v2116 = vpop.f32.mrf.mxu0
        %v2117 = vpop.f32.mrf.mxu0
        %v2118 = vadd.f32 %v1829, %v2117
        %v2119 = vpop.f32.mrf.mxu0
        %2120 = vmatprep.mubr.bf16.mxu0 0
        %2121 = vmatmul.mubr.bf16.gmra.mxu0 %v1376
        %v2122 = vpop.f32.mrf.mxu0
        %v2123 = vadd.f32 %v1834, %v2122
        %v2124 = vpop.f32.mrf.mxu0
        %v2125 = vpop.f32.mrf.mxu0
        %v2126 = vadd.f32 %v1837, %v2125
        %v2127 = vpop.f32.mrf.mxu0
        %2128 = vmatprep.mubr.bf16.mxu0 0
        %2129 = vmatmul.mubr.bf16.gmra.mxu0 %v1379
        %v2130 = vpop.f32.mrf.mxu0
        %v2131 = vadd.f32 %v1842, %v2130
        %v2132 = vpop.f32.mrf.mxu0
        %v2133 = vpop.f32.mrf.mxu0
        %v2134 = vadd.f32 %v1845, %v2133
        %v2135 = vpop.f32.mrf.mxu0
        %2136 = vmatprep.mubr.bf16.mxu0 0
        %2137 = vmatmul.mubr.bf16.gmra.mxu0 %v1382
        %v2138 = vpop.f32.mrf.mxu0
        %v2139 = vadd.f32 %v1850, %v2138
        %v2140 = vpop.f32.mrf.mxu0
        %v2141 = vpop.f32.mrf.mxu0
        %v2142 = vadd.f32 %v1853, %v2141
        %v2143 = vpop.f32.mrf.mxu0
        %2144 = vmatprep.mubr.bf16.mxu0 0
        %2145 = vmatmul.mubr.bf16.gmra.mxu0 %v1385
        %v2146 = vpop.f32.mrf.mxu0
        %v2147 = vadd.f32 %v1858, %v2146
        %v2148 = vpop.f32.mrf.mxu0
        %v2149 = vpop.f32.mrf.mxu0
        %v2150 = vadd.f32 %v1861, %v2149
        %v2151 = vpop.f32.mrf.mxu0
        %2152 = vmatprep.mubr.bf16.mxu0 0
        %2153 = vmatmul.mubr.bf16.gmra.mxu0 %v1388
        %v2154 = vpop.f32.mrf.mxu0
        %v2155 = vadd.f32 %v1866, %v2154
        %v2156 = vpop.f32.mrf.mxu0
        %v2157 = vpop.f32.mrf.mxu0
        %v2158 = vadd.f32 %v1869, %v2157
        %v2159 = vpop.f32.mrf.mxu0
        %2160 = vmatprep.mubr.bf16.mxu0 0
        %2161 = vmatmul.mubr.bf16.gmra.mxu0 %v1391
        %v2162 = vpop.f32.mrf.mxu0
        %v2163 = vadd.f32 %v1874, %v2162
        %v2164 = vpop.f32.mrf.mxu0
        %v2165 = vpop.f32.mrf.mxu0
        %v2166 = vadd.f32 %v1877, %v2165
        %v2167 = vpop.f32.mrf.mxu0
        %2168 = vdwg.mxu0
        %v2169 = vtanh.pop %v1915
        %v2170 = vtanh.pop %v1918
        %v2171 = vtanh.pop %v1923
        %v2172 = vtanh.pop %v1926
        %v2173 = vtanh.pop %v1931
        %v2174 = vtanh.pop %v1934
        %v2175 = vtanh.pop %v1939
        %v2176 = vtanh.pop %v1942
        %v2177 = vtanh.pop %v1947
        %v2178 = vtanh.pop %v1950
        %v2179 = vtanh.pop %v1955
        %v2180 = vtanh.pop %v1958
        %v2181 = vtanh.pop %v1963
        %v2182 = vtanh.pop %v1966
        %v2183 = vtanh.pop %v1971
        %v2184 = vtanh.pop %v1974
        %v2185 = vtanh.pop %v1979
        %v2186 = vtanh.pop %v1982
        %v2187 = vtanh.pop %v1987
        %v2188 = vtanh.pop %v1990
        %v2189 = vtanh.pop %v1995
        %v2190 = vtanh.pop %v1998
        %v2191 = vtanh.pop %v2003
        %v2192 = vtanh.pop %v2006
        %v2193 = vtanh.pop %v2011
        %v2194 = vtanh.pop %v2014
        %v2195 = vtanh.pop %v2019
        %v2196 = vtanh.pop %v2022
        %v2197 = vtanh.pop %v2027
        %v2198 = vtanh.pop %v2030
        %v2199 = vtanh.pop %v2035
        %v2200 = vtanh.pop %v2038
        %v2201 = vtanh.pop %v2043
        %v2202 = vtanh.pop %v2046
        %v2203 = vtanh.pop %v2051
        %v2204 = vtanh.pop %v2054
        %v2205 = vtanh.pop %v2059
        %v2206 = vtanh.pop %v2062
        %v2207 = vtanh.pop %v2067
        %v2208 = vtanh.pop %v2070
        %v2209 = vtanh.pop %v2075
        %v2210 = vtanh.pop %v2078
        %v2211 = vtanh.pop %v2083
        %v2212 = vtanh.pop %v2086
        %v2213 = vtanh.pop %v2091
        %v2214 = vtanh.pop %v2094
        %v2215 = vtanh.pop %v2099
        %v2216 = vtanh.pop %v2102
        %v2217 = vtanh.pop %v2107
        %v2218 = vtanh.pop %v2110
        %v2219 = vtanh.pop %v2115
        %v2220 = vtanh.pop %v2118
        %v2221 = vtanh.pop %v2123
        %v2222 = vtanh.pop %v2126
        %v2223 = vtanh.pop %v2131
        %v2224 = vtanh.pop %v2134
        %v2225 = vtanh.pop %v2139
        %v2226 = vtanh.pop %v2142
        %v2227 = vtanh.pop %v2147
        %v2228 = vtanh.pop %v2150
        %v2229 = vtanh.pop %v2155
        %v2230 = vtanh.pop %v2158
        %v2231 = vtanh.pop %v2163
        %v2232 = vtanh.pop %v2166
        %v2233 = vld [vmem:[#allocation13] sm:$0x1]
        %v2234 = vpack.c.bf16 %v2170, %v2169
        %v2235 = vpack.c.bf16 %v2172, %v2171
        %v2236 = vpack.c.bf16 %v2174, %v2173
        %v2237 = vpack.c.bf16 %v2176, %v2175
        %v2238 = vpack.c.bf16 %v2178, %v2177
        %v2239 = vpack.c.bf16 %v2180, %v2179
        %v2240 = vpack.c.bf16 %v2182, %v2181
        %v2241 = vpack.c.bf16 %v2184, %v2183
        %v2242 = vpack.c.bf16 %v2186, %v2185
        %v2243 = vpack.c.bf16 %v2188, %v2187
        %v2244 = vpack.c.bf16 %v2190, %v2189
        %v2245 = vpack.c.bf16 %v2192, %v2191
        %v2246 = vpack.c.bf16 %v2194, %v2193
        %v2247 = vpack.c.bf16 %v2196, %v2195
        %v2248 = vpack.c.bf16 %v2198, %v2197
        %v2249 = vpack.c.bf16 %v2200, %v2199
        %v2250 = vpack.c.bf16 %v2202, %v2201
        %v2251 = vpack.c.bf16 %v2204, %v2203
        %v2252 = vpack.c.bf16 %v2206, %v2205
        %v2253 = vpack.c.bf16 %v2208, %v2207
        %v2254 = vpack.c.bf16 %v2210, %v2209
        %v2255 = vpack.c.bf16 %v2212, %v2211
        %v2256 = vpack.c.bf16 %v2214, %v2213
        %v2257 = vpack.c.bf16 %v2216, %v2215
        %v2258 = vpack.c.bf16 %v2218, %v2217
        %v2259 = vpack.c.bf16 %v2220, %v2219
        %v2260 = vpack.c.bf16 %v2222, %v2221
        %v2261 = vpack.c.bf16 %v2224, %v2223
        %v2262 = vpack.c.bf16 %v2226, %v2225
        %v2263 = vpack.c.bf16 %v2228, %v2227
        %v2264 = vpack.c.bf16 %v2230, %v2229
        %v2265 = vpack.c.bf16 %v2232, %v2231
        %s2266 = sld [smem:[#allocation5]]
        %v2267 = vstv %s2266
        %2268 = vmatprep.subr.bf16.mxu0 0
        %2269 = vmatpush1.bf16.xpose.msra.mxu0 %v2241
        %2270 = vmatprep.subr.bf16.mxu0 0
        %2271 = vmatpush1.bf16.xpose.msra.mxu0 %v2240
        %2272 = vmatprep.subr.bf16.mxu0 0
        %2273 = vmatpush1.bf16.xpose.msra.mxu0 %v2239
        %2274 = vmatprep.subr.bf16.mxu0 0
        %2275 = vmatpush1.bf16.xpose.msra.mxu0 %v2238
        %2276 = vmatprep.subr.bf16.mxu0 0
        %2277 = vmatpush1.bf16.xpose.msra.mxu0 %v2237
        %2278 = vmatprep.subr.bf16.mxu0 0
        %2279 = vmatpush1.bf16.xpose.msra.mxu0 %v2236
        %2280 = vmatprep.subr.bf16.mxu0 0
        %2281 = vmatpush1.bf16.xpose.msra.mxu0 %v2235
        %2282 = vmatprep.subr.bf16.mxu0 0
        %2283 = vmatpush1.bf16.xpose.msra.mxu0 %v2234
        %2284 = vmatprep.subr.bf16.mxu0 0
        %2285 = vmatpush2.bf16.xpose.msra.mxu0 %v2249
        %2286 = vmatprep.subr.bf16.mxu0 0
        %2287 = vmatpush2.bf16.xpose.msra.mxu0 %v2248
        %2288 = vmatprep.subr.bf16.mxu0 0
        %2289 = vmatpush2.bf16.xpose.msra.mxu0 %v2247
        %2290 = vmatprep.subr.bf16.mxu0 0
        %2291 = vmatpush2.bf16.xpose.msra.mxu0 %v2246
        %2292 = vmatprep.subr.bf16.mxu0 0
        %2293 = vmatpush2.bf16.xpose.msra.mxu0 %v2245
        %2294 = vmatprep.subr.bf16.mxu0 0
        %2295 = vmatpush2.bf16.xpose.msra.mxu0 %v2244
        %2296 = vmatprep.subr.bf16.mxu0 0
        %2297 = vmatpush2.bf16.xpose.msra.mxu0 %v2243
        %2298 = vmatprep.subr.bf16.mxu0 0
        %2299 = vmatpush2.bf16.xpose.msra.mxu0 %v2242
        %2300 = vmatprep.mubr.bf16.mxu0 0
        %2301 = vmatmul.mubr.bf16.gmra.mxu0 %v2233
        %v2302 = vpop.f32.mrf.mxu0
        %v2303 = vadd.f32 %v2267, %v2302
        %v2304 = vpop.f32.mrf.mxu0
        %v2305 = vadd.f32 %v2267, %v2304
        %v2306 = vpop.f32.mrf.mxu0
        %v2307 = vpop.f32.mrf.mxu0
        %2308 = vdwg.mxu0
        %2309 = vmatprep.subr.bf16.mxu0 0
        %2310 = vmatpush1.bf16.xpose.msra.mxu0 %v2257
        %2311 = vmatprep.subr.bf16.mxu0 0
        %2312 = vmatpush1.bf16.xpose.msra.mxu0 %v2256
        %2313 = vmatprep.subr.bf16.mxu0 0
        %2314 = vmatpush1.bf16.xpose.msra.mxu0 %v2255
        %2315 = vmatprep.subr.bf16.mxu0 0
        %2316 = vmatpush1.bf16.xpose.msra.mxu0 %v2254
        %2317 = vmatprep.subr.bf16.mxu0 0
        %2318 = vmatpush1.bf16.xpose.msra.mxu0 %v2253
        %2319 = vmatprep.subr.bf16.mxu0 0
        %2320 = vmatpush1.bf16.xpose.msra.mxu0 %v2252
        %2321 = vmatprep.subr.bf16.mxu0 0
        %2322 = vmatpush1.bf16.xpose.msra.mxu0 %v2251
        %2323 = vmatprep.subr.bf16.mxu0 0
        %2324 = vmatpush1.bf16.xpose.msra.mxu0 %v2250
        %2325 = vmatprep.subr.bf16.mxu0 0
        %2326 = vmatpush2.bf16.xpose.msra.mxu0 %v2265
        %2327 = vmatprep.subr.bf16.mxu0 0
        %2328 = vmatpush2.bf16.xpose.msra.mxu0 %v2264
        %2329 = vmatprep.subr.bf16.mxu0 0
        %2330 = vmatpush2.bf16.xpose.msra.mxu0 %v2263
        %2331 = vmatprep.subr.bf16.mxu0 0
        %2332 = vmatpush2.bf16.xpose.msra.mxu0 %v2262
        %2333 = vmatprep.subr.bf16.mxu0 0
        %2334 = vmatpush2.bf16.xpose.msra.mxu0 %v2261
        %2335 = vmatprep.subr.bf16.mxu0 0
        %2336 = vmatpush2.bf16.xpose.msra.mxu0 %v2260
        %2337 = vmatprep.subr.bf16.mxu0 0
        %2338 = vmatpush2.bf16.xpose.msra.mxu0 %v2259
        %2339 = vmatprep.subr.bf16.mxu0 0
        %2340 = vmatpush2.bf16.xpose.msra.mxu0 %v2258
        %2341 = vmatprep.mubr.bf16.mxu0 0
        %2342 = vmatmul.mubr.bf16.gmra.mxu0 %v2233
        %v2343 = vpop.f32.mrf.mxu0
        %v2344 = vadd.f32 %v2267, %v2343
        %v2345 = vpop.f32.mrf.mxu0
        %v2346 = vadd.f32 %v2267, %v2345
        %v2347 = vpop.f32.mrf.mxu0
        %v2348 = vpop.f32.mrf.mxu0
        %2349 = vdwg.mxu0
        %v2350 = vlaneseq
        %v2351 = vand.u32 %v2350, 127
        %v2352 = vadd.s32 %v2351, 128
        %v2353 = vadd.s32 %v2351, 256
        %v2354 = vadd.s32 %v2351, 384
        %v2355 = vadd.s32 %v783, %v2351
        %v2356 = vadd.s32 %v783, %v2352
        %v2357 = vadd.s32 %v783, %v2353
        %v2358 = vadd.s32 %v783, %v2354
        %vm2359 = vcmp.lt.s32.totalorder %v2355, 1200
        %vm2360 = vcmp.lt.s32.totalorder %v2356, 1200
        %vm2361 = vcmp.lt.s32.totalorder %v2357, 1200
        %vm2362 = vcmp.lt.s32.totalorder %v2358, 1200
        %v2363 = vsel %vm2359, %v2303, -1e+30
        %v2364 = vsel %vm2360, %v2305, -1e+30
        %v2365 = vsel %vm2361, %v2344, -1e+30
        %v2366 = vsel %vm2362, %v2346, -1e+30
        %v2371 = vcombine.low %v2363, %v2364
        %v2372 = vcombine.low %v2365, %v2366
        %v2374 = vunpack.c.l.s4 1966171168
        %v2375 = vunpack.c.0.s8 %v2374
        %v2376 = vlaneseq
        %v2377 = vshrl.u32 %v2376, 7
        %v2378 = vsub.s32 %v2375, %v2377
        %v2379 = vrot.slane %v2371, %v2378
        %v2381 = vunpack.c.l.s4 1966171168
        %v2382 = vunpack.c.0.s8 %v2381
        %v2383 = vlaneseq
        %v2384 = vshrl.u32 %v2383, 7
        %v2385 = vsub.s32 %v2382, %v2384
        %v2386 = vrot.slane %v2372, %v2385
        %v2387 = vcombine.low %v2379, %v2386
        %v2389 = vunpack.c.l.s4 1966171168
        %v2390 = vunpack.c.0.s8 %v2389
        %v2391 = vlaneseq
        %v2392 = vshrl.u32 %v2391, 7
        %v2393 = vsub.s32 %v2390, %v2392
        %v2394 = vrot.slane %v2387, %v2393
        %v2396 = vlaneseq
        %vm2397 = vcmp.ge.s32.totalorder %v2396, 0
        %vm2398 = vcmp.lt.s32.totalorder %v2396, 512
        %vm2399 = vmand %vm2397, %vm2398
        %2400 = vst.msk [vmem:[%s406] sm:$0xf] %vm2399, %v2394
        %v2401 = vld [vmem:[#allocation2] sm:$0x1]
        %vm2402 = vcmask 1040384
        %v2403 = vsel %vm2402, %v2363, -inf
        %v2404 = vsel %vm2402, %v2364, -inf
        %v2405 = vsel %vm2402, %v2365, -inf
        %v2406 = vsel %vm2402, %v2366, -inf
        %v2407 = vmax.f32 %v2403, %v2404
        %v2408 = vmax.f32 %v2405, %v2406
        %v2409 = vmax.f32 %v2407, %v2408
        %2410 = vmax.xlane.f32.xlu0 %v2409
        %v2411 = vpop.xlane.xlu0 %2410
        %v2412 = vmax.f32 %v2401, %v2411
        %v2413 = vsub.f32 %v2401, %v2412
        %v2414 = vmul.f32 %v2413, 1.442695
        %v2415 = vpow.pop %v2414
        %2417 = vset.pattern.permute.xlu0 0
        %2418 = vperm.xlu0 %2417, %v2412
        %v2419 = vpop.permute.xlu0 %2418
        %v2421 = vlaneseq
        %v2422 = vshrl.u32 %v2421, 7
        %v2423 = vsub.s32 0, %v2422
        %v2424 = vrot.slane %v2419, %v2423
        %v2425 = vsub.f32 %v2363, %v2424
        %v2426 = vsub.f32 %v2364, %v2424
        %v2427 = vsub.f32 %v2365, %v2424
        %v2428 = vsub.f32 %v2366, %v2424
        %v2429 = vmul.f32 %v2425, 1.442695
        %v2430 = vpow.pop %v2429
        %v2431 = vmul.f32 %v2426, 1.442695
        %v2432 = vpow.pop %v2431
        %v2433 = vmul.f32 %v2427, 1.442695
        %v2434 = vpow.pop %v2433
        %v2435 = vmul.f32 %v2428, 1.442695
        %v2436 = vpow.pop %v2435
        %v2437 = vld [vmem:[#allocation3] sm:$0x1]
        %v2438 = vmul.f32 %v2415, %v2437
        %v2439 = vsel %vm2402, %v2430, 0.0
        %v2440 = vsel %vm2402, %v2432, 0.0
        %v2441 = vadd.f32 %v2439, %v2440
        %v2442 = vsel %vm2402, %v2434, 0.0
        %v2443 = vadd.f32 %v2441, %v2442
        %v2444 = vsel %vm2402, %v2436, 0.0
        %v2445 = vadd.f32 %v2443, %v2444
        %2446 = vadd.xlane.f32.xlu0 %v2445
        %v2447 = vpop.xlane.xlu0 %2446
        %v2448 = vadd.f32 %v2438, %v2447
        %vm2449 = vcmask 0
        %2450 = vst.msk [vmem:[#allocation3] sm:$0x1] %vm2449, %v2448
        %v2451 = vpack.c.bf16 %v2430, %v2430
        %v2452 = vpack.c.bf16 %v2432, %v2432
        %v2453 = vpack.c.bf16 %v2434, %v2434
        %v2454 = vpack.c.bf16 %v2436, %v2436
        %v2455 = vunpack.c.l.bf16 %v2451
        %v2456 = vunpack.c.l.bf16 %v2452
        %v2457 = vunpack.c.l.bf16 %v2453
        %v2458 = vunpack.c.l.bf16 %v2454
        %v2459 = vsub.f32 %v2430, %v2455
        %v2460 = vsub.f32 %v2432, %v2456
        %v2461 = vsub.f32 %v2434, %v2457
        %v2462 = vsub.f32 %v2436, %v2458
        %v2463 = vpack.c.bf16 %v2459, %v2459
        %v2464 = vpack.c.bf16 %v2460, %v2460
        %v2465 = vpack.c.bf16 %v2461, %v2461
        %v2466 = vpack.c.bf16 %v2462, %v2462
        %2467 = vmatprep.subr.bf16.mxu0 %v1318
        %2468 = vmatpush1.bf16.msra.mxu0 %v1317
        %2469 = vmatprep.subr.bf16.mxu0 %v1315
        %2470 = vmatpush1.bf16.msra.mxu0 %v1314
        %2471 = vmatprep.subr.bf16.mxu0 %v1312
        %2472 = vmatpush1.bf16.msra.mxu0 %v1311
        %2473 = vmatprep.subr.bf16.mxu0 %v1309
        %2474 = vmatpush1.bf16.msra.mxu0 %v1308
        %2475 = vmatprep.subr.bf16.mxu0 %v1306
        %2476 = vmatpush1.bf16.msra.mxu0 %v1305
        %2477 = vmatprep.subr.bf16.mxu0 %v1303
        %2478 = vmatpush1.bf16.msra.mxu0 %v1302
        %2479 = vmatprep.subr.bf16.mxu0 %v1300
        %2480 = vmatpush1.bf16.msra.mxu0 %v1299
        %2481 = vmatprep.subr.bf16.mxu0 %v1297
        %2482 = vmatpush1.bf16.msra.mxu0 %v1296
        %2483 = vmatprep.subr.bf16.mxu0 %v1342
        %2484 = vmatpush2.bf16.msra.mxu0 %v1341
        %2485 = vmatprep.subr.bf16.mxu0 %v1339
        %2486 = vmatpush2.bf16.msra.mxu0 %v1338
        %2487 = vmatprep.subr.bf16.mxu0 %v1336
        %2488 = vmatpush2.bf16.msra.mxu0 %v1335
        %2489 = vmatprep.subr.bf16.mxu0 %v1333
        %2490 = vmatpush2.bf16.msra.mxu0 %v1332
        %2491 = vmatprep.subr.bf16.mxu0 %v1330
        %2492 = vmatpush2.bf16.msra.mxu0 %v1329
        %2493 = vmatprep.subr.bf16.mxu0 %v1327
        %2494 = vmatpush2.bf16.msra.mxu0 %v1326
        %2495 = vmatprep.subr.bf16.mxu0 %v1324
        %2496 = vmatpush2.bf16.msra.mxu0 %v1323
        %2497 = vmatprep.subr.bf16.mxu0 %v1321
        %2498 = vmatpush2.bf16.msra.mxu0 %v1320
        %2499 = vmatprep.mubr.bf16.mxu0 %v2464
        %2500 = vmatmul.mubr.bf16.gmra.mxu0 %v2463
        %v2501 = vpop.f32.mrf.mxu0
        %v2502 = vadd.f32 0.0, %v2501
        %v2503 = vpop.f32.mrf.mxu0
        %v2504 = vadd.f32 0.0, %v2503
        %v2505 = vpop.f32.mrf.mxu0
        %v2506 = vpop.f32.mrf.mxu0
        %2507 = vdwg.mxu0
        %2508 = vmatprep.subr.bf16.mxu0 %v1366
        %2509 = vmatpush1.bf16.msra.mxu0 %v1365
        %2510 = vmatprep.subr.bf16.mxu0 %v1363
        %2511 = vmatpush1.bf16.msra.mxu0 %v1362
        %2512 = vmatprep.subr.bf16.mxu0 %v1360
        %2513 = vmatpush1.bf16.msra.mxu0 %v1359
        %2514 = vmatprep.subr.bf16.mxu0 %v1357
        %2515 = vmatpush1.bf16.msra.mxu0 %v1356
        %2516 = vmatprep.subr.bf16.mxu0 %v1354
        %2517 = vmatpush1.bf16.msra.mxu0 %v1353
        %2518 = vmatprep.subr.bf16.mxu0 %v1351
        %2519 = vmatpush1.bf16.msra.mxu0 %v1350
        %2520 = vmatprep.subr.bf16.mxu0 %v1348
        %2521 = vmatpush1.bf16.msra.mxu0 %v1347
        %2522 = vmatprep.subr.bf16.mxu0 %v1345
        %2523 = vmatpush1.bf16.msra.mxu0 %v1344
        %2524 = vmatprep.subr.bf16.mxu0 %v1390
        %2525 = vmatpush2.bf16.msra.mxu0 %v1389
        %2526 = vmatprep.subr.bf16.mxu0 %v1387
        %2527 = vmatpush2.bf16.msra.mxu0 %v1386
        %2528 = vmatprep.subr.bf16.mxu0 %v1384
        %2529 = vmatpush2.bf16.msra.mxu0 %v1383
        %2530 = vmatprep.subr.bf16.mxu0 %v1381
        %2531 = vmatpush2.bf16.msra.mxu0 %v1380
        %2532 = vmatprep.subr.bf16.mxu0 %v1378
        %2533 = vmatpush2.bf16.msra.mxu0 %v1377
        %2534 = vmatprep.subr.bf16.mxu0 %v1375
        %2535 = vmatpush2.bf16.msra.mxu0 %v1374
        %2536 = vmatprep.subr.bf16.mxu0 %v1372
        %2537 = vmatpush2.bf16.msra.mxu0 %v1371
        %2538 = vmatprep.subr.bf16.mxu0 %v1369
        %2539 = vmatpush2.bf16.msra.mxu0 %v1368
        %2540 = vmatprep.mubr.bf16.mxu0 %v2466
        %2541 = vmatmul.mubr.bf16.gmra.mxu0 %v2465
        %v2542 = vpop.f32.mrf.mxu0
        %v2543 = vadd.f32 %v2502, %v2542
        %v2544 = vpop.f32.mrf.mxu0
        %v2545 = vadd.f32 %v2504, %v2544
        %v2546 = vpop.f32.mrf.mxu0
        %v2547 = vpop.f32.mrf.mxu0
        %2548 = vdwg.mxu0
        %2549 = vmatprep.subr.bf16.mxu0 0
        %2550 = vmatpush1.bf16.msra.mxu0 %v1319
        %2551 = vmatprep.subr.bf16.mxu0 0
        %2552 = vmatpush1.bf16.msra.mxu0 %v1316
        %2553 = vmatprep.subr.bf16.mxu0 0
        %2554 = vmatpush1.bf16.msra.mxu0 %v1313
        %2555 = vmatprep.subr.bf16.mxu0 0
        %2556 = vmatpush1.bf16.msra.mxu0 %v1310
        %2557 = vmatprep.subr.bf16.mxu0 0
        %2558 = vmatpush1.bf16.msra.mxu0 %v1307
        %2559 = vmatprep.subr.bf16.mxu0 0
        %2560 = vmatpush1.bf16.msra.mxu0 %v1304
        %2561 = vmatprep.subr.bf16.mxu0 0
        %2562 = vmatpush1.bf16.msra.mxu0 %v1301
        %2563 = vmatprep.subr.bf16.mxu0 0
        %2564 = vmatpush1.bf16.msra.mxu0 %v1298
        %2565 = vmatprep.subr.bf16.mxu0 0
        %2566 = vmatpush2.bf16.msra.mxu0 %v1343
        %2567 = vmatprep.subr.bf16.mxu0 0
        %2568 = vmatpush2.bf16.msra.mxu0 %v1340
        %2569 = vmatprep.subr.bf16.mxu0 0
        %2570 = vmatpush2.bf16.msra.mxu0 %v1337
        %2571 = vmatprep.subr.bf16.mxu0 0
        %2572 = vmatpush2.bf16.msra.mxu0 %v1334
        %2573 = vmatprep.subr.bf16.mxu0 0
        %2574 = vmatpush2.bf16.msra.mxu0 %v1331
        %2575 = vmatprep.subr.bf16.mxu0 0
        %2576 = vmatpush2.bf16.msra.mxu0 %v1328
        %2577 = vmatprep.subr.bf16.mxu0 0
        %2578 = vmatpush2.bf16.msra.mxu0 %v1325
        %2579 = vmatprep.subr.bf16.mxu0 0
        %2580 = vmatpush2.bf16.msra.mxu0 %v1322
        %2581 = vmatprep.mubr.bf16.mxu0 %v2464
        %2582 = vmatmul.mubr.bf16.gmra.mxu0 %v2463
        %v2583 = vpop.f32.mrf.mxu0
        %v2584 = vadd.f32 0.0, %v2583
        %v2585 = vpop.f32.mrf.mxu0
        %v2586 = vpop.f32.mrf.mxu0
        %v2587 = vpop.f32.mrf.mxu0
        %2588 = vdwg.mxu0
        %2589 = vmatprep.subr.bf16.mxu0 0
        %2590 = vmatpush1.bf16.msra.mxu0 %v1367
        %2591 = vmatprep.subr.bf16.mxu0 0
        %2592 = vmatpush1.bf16.msra.mxu0 %v1364
        %2593 = vmatprep.subr.bf16.mxu0 0
        %2594 = vmatpush1.bf16.msra.mxu0 %v1361
        %2595 = vmatprep.subr.bf16.mxu0 0
        %2596 = vmatpush1.bf16.msra.mxu0 %v1358
        %2597 = vmatprep.subr.bf16.mxu0 0
        %2598 = vmatpush1.bf16.msra.mxu0 %v1355
        %2599 = vmatprep.subr.bf16.mxu0 0
        %2600 = vmatpush1.bf16.msra.mxu0 %v1352
        %2601 = vmatprep.subr.bf16.mxu0 0
        %2602 = vmatpush1.bf16.msra.mxu0 %v1349
        %2603 = vmatprep.subr.bf16.mxu0 0
        %2604 = vmatpush1.bf16.msra.mxu0 %v1346
        %2605 = vmatprep.subr.bf16.mxu0 0
        %2606 = vmatpush2.bf16.msra.mxu0 %v1391
        %2607 = vmatprep.subr.bf16.mxu0 0
        %2608 = vmatpush2.bf16.msra.mxu0 %v1388
        %2609 = vmatprep.subr.bf16.mxu0 0
        %2610 = vmatpush2.bf16.msra.mxu0 %v1385
        %2611 = vmatprep.subr.bf16.mxu0 0
        %2612 = vmatpush2.bf16.msra.mxu0 %v1382
        %2613 = vmatprep.subr.bf16.mxu0 0
        %2614 = vmatpush2.bf16.msra.mxu0 %v1379
        %2615 = vmatprep.subr.bf16.mxu0 0
        %2616 = vmatpush2.bf16.msra.mxu0 %v1376
        %2617 = vmatprep.subr.bf16.mxu0 0
        %2618 = vmatpush2.bf16.msra.mxu0 %v1373
        %2619 = vmatprep.subr.bf16.mxu0 0
        %2620 = vmatpush2.bf16.msra.mxu0 %v1370
        %2621 = vmatprep.mubr.bf16.mxu0 %v2466
        %2622 = vmatmul.mubr.bf16.gmra.mxu0 %v2465
        %v2623 = vpop.f32.mrf.mxu0
        %v2624 = vadd.f32 %v2584, %v2623
        %v2625 = vpop.f32.mrf.mxu0
        %v2626 = vpop.f32.mrf.mxu0
        %v2627 = vpop.f32.mrf.mxu0
        %2628 = vdwg.mxu0
        %2629 = vmatprep.subr.bf16.mxu0 %v1318
        %2630 = vmatpush1.bf16.msra.mxu0 %v1317
        %2631 = vmatprep.subr.bf16.mxu0 %v1315
        %2632 = vmatpush1.bf16.msra.mxu0 %v1314
        %2633 = vmatprep.subr.bf16.mxu0 %v1312
        %2634 = vmatpush1.bf16.msra.mxu0 %v1311
        %2635 = vmatprep.subr.bf16.mxu0 %v1309
        %2636 = vmatpush1.bf16.msra.mxu0 %v1308
        %2637 = vmatprep.subr.bf16.mxu0 %v1306
        %2638 = vmatpush1.bf16.msra.mxu0 %v1305
        %2639 = vmatprep.subr.bf16.mxu0 %v1303
        %2640 = vmatpush1.bf16.msra.mxu0 %v1302
        %2641 = vmatprep.subr.bf16.mxu0 %v1300
        %2642 = vmatpush1.bf16.msra.mxu0 %v1299
        %2643 = vmatprep.subr.bf16.mxu0 %v1297
        %2644 = vmatpush1.bf16.msra.mxu0 %v1296
        %2645 = vmatprep.subr.bf16.mxu0 %v1342
        %2646 = vmatpush2.bf16.msra.mxu0 %v1341
        %2647 = vmatprep.subr.bf16.mxu0 %v1339
        %2648 = vmatpush2.bf16.msra.mxu0 %v1338
        %2649 = vmatprep.subr.bf16.mxu0 %v1336
        %2650 = vmatpush2.bf16.msra.mxu0 %v1335
        %2651 = vmatprep.subr.bf16.mxu0 %v1333
        %2652 = vmatpush2.bf16.msra.mxu0 %v1332
        %2653 = vmatprep.subr.bf16.mxu0 %v1330
        %2654 = vmatpush2.bf16.msra.mxu0 %v1329
        %2655 = vmatprep.subr.bf16.mxu0 %v1327
        %2656 = vmatpush2.bf16.msra.mxu0 %v1326
        %2657 = vmatprep.subr.bf16.mxu0 %v1324
        %2658 = vmatpush2.bf16.msra.mxu0 %v1323
        %2659 = vmatprep.subr.bf16.mxu0 %v1321
        %2660 = vmatpush2.bf16.msra.mxu0 %v1320
        %2661 = vmatprep.mubr.bf16.mxu0 %v2452
        %2662 = vmatmul.mubr.bf16.gmra.mxu0 %v2451
        %v2663 = vpop.f32.mrf.mxu0
        %v2664 = vadd.f32 %v2543, %v2663
        %v2665 = vpop.f32.mrf.mxu0
        %v2666 = vadd.f32 %v2545, %v2665
        %v2667 = vpop.f32.mrf.mxu0
        %v2668 = vpop.f32.mrf.mxu0
        %2669 = vdwg.mxu0
        %2670 = vmatprep.subr.bf16.mxu0 %v1366
        %2671 = vmatpush1.bf16.msra.mxu0 %v1365
        %2672 = vmatprep.subr.bf16.mxu0 %v1363
        %2673 = vmatpush1.bf16.msra.mxu0 %v1362
        %2674 = vmatprep.subr.bf16.mxu0 %v1360
        %2675 = vmatpush1.bf16.msra.mxu0 %v1359
        %2676 = vmatprep.subr.bf16.mxu0 %v1357
        %2677 = vmatpush1.bf16.msra.mxu0 %v1356
        %2678 = vmatprep.subr.bf16.mxu0 %v1354
        %2679 = vmatpush1.bf16.msra.mxu0 %v1353
        %2680 = vmatprep.subr.bf16.mxu0 %v1351
        %2681 = vmatpush1.bf16.msra.mxu0 %v1350
        %2682 = vmatprep.subr.bf16.mxu0 %v1348
        %2683 = vmatpush1.bf16.msra.mxu0 %v1347
        %2684 = vmatprep.subr.bf16.mxu0 %v1345
        %2685 = vmatpush1.bf16.msra.mxu0 %v1344
        %2686 = vmatprep.subr.bf16.mxu0 %v1390
        %2687 = vmatpush2.bf16.msra.mxu0 %v1389
        %2688 = vmatprep.subr.bf16.mxu0 %v1387
        %2689 = vmatpush2.bf16.msra.mxu0 %v1386
        %2690 = vmatprep.subr.bf16.mxu0 %v1384
        %2691 = vmatpush2.bf16.msra.mxu0 %v1383
        %2692 = vmatprep.subr.bf16.mxu0 %v1381
        %2693 = vmatpush2.bf16.msra.mxu0 %v1380
        %2694 = vmatprep.subr.bf16.mxu0 %v1378
        %2695 = vmatpush2.bf16.msra.mxu0 %v1377
        %2696 = vmatprep.subr.bf16.mxu0 %v1375
        %2697 = vmatpush2.bf16.msra.mxu0 %v1374
        %2698 = vmatprep.subr.bf16.mxu0 %v1372
        %2699 = vmatpush2.bf16.msra.mxu0 %v1371
        %2700 = vmatprep.subr.bf16.mxu0 %v1369
        %2701 = vmatpush2.bf16.msra.mxu0 %v1368
        %2702 = vmatprep.mubr.bf16.mxu0 %v2454
        %2703 = vmatmul.mubr.bf16.gmra.mxu0 %v2453
        %v2704 = vpop.f32.mrf.mxu0
        %v2705 = vadd.f32 %v2664, %v2704
        %v2706 = vpop.f32.mrf.mxu0
        %v2707 = vadd.f32 %v2666, %v2706
        %v2708 = vpop.f32.mrf.mxu0
        %v2709 = vpop.f32.mrf.mxu0
        %2710 = vdwg.mxu0
        %2711 = vmatprep.subr.bf16.mxu0 0
        %2712 = vmatpush1.bf16.msra.mxu0 %v1319
        %2713 = vmatprep.subr.bf16.mxu0 0
        %2714 = vmatpush1.bf16.msra.mxu0 %v1316
        %2715 = vmatprep.subr.bf16.mxu0 0
        %2716 = vmatpush1.bf16.msra.mxu0 %v1313
        %2717 = vmatprep.subr.bf16.mxu0 0
        %2718 = vmatpush1.bf16.msra.mxu0 %v1310
        %2719 = vmatprep.subr.bf16.mxu0 0
        %2720 = vmatpush1.bf16.msra.mxu0 %v1307
        %2721 = vmatprep.subr.bf16.mxu0 0
        %2722 = vmatpush1.bf16.msra.mxu0 %v1304
        %2723 = vmatprep.subr.bf16.mxu0 0
        %2724 = vmatpush1.bf16.msra.mxu0 %v1301
        %2725 = vmatprep.subr.bf16.mxu0 0
        %2726 = vmatpush1.bf16.msra.mxu0 %v1298
        %2727 = vmatprep.subr.bf16.mxu0 0
        %2728 = vmatpush2.bf16.msra.mxu0 %v1343
        %2729 = vmatprep.subr.bf16.mxu0 0
        %2730 = vmatpush2.bf16.msra.mxu0 %v1340
        %2731 = vmatprep.subr.bf16.mxu0 0
        %2732 = vmatpush2.bf16.msra.mxu0 %v1337
        %2733 = vmatprep.subr.bf16.mxu0 0
        %2734 = vmatpush2.bf16.msra.mxu0 %v1334
        %2735 = vmatprep.subr.bf16.mxu0 0
        %2736 = vmatpush2.bf16.msra.mxu0 %v1331
        %2737 = vmatprep.subr.bf16.mxu0 0
        %2738 = vmatpush2.bf16.msra.mxu0 %v1328
        %2739 = vmatprep.subr.bf16.mxu0 0
        %2740 = vmatpush2.bf16.msra.mxu0 %v1325
        %2741 = vmatprep.subr.bf16.mxu0 0
        %2742 = vmatpush2.bf16.msra.mxu0 %v1322
        %2743 = vmatprep.mubr.bf16.mxu0 %v2452
        %2744 = vmatmul.mubr.bf16.gmra.mxu0 %v2451
        %v2745 = vpop.f32.mrf.mxu0
        %v2746 = vadd.f32 %v2624, %v2745
        %v2747 = vpop.f32.mrf.mxu0
        %v2748 = vpop.f32.mrf.mxu0
        %v2749 = vpop.f32.mrf.mxu0
        %2750 = vdwg.mxu0
        %2751 = vmatprep.subr.bf16.mxu0 0
        %2752 = vmatpush1.bf16.msra.mxu0 %v1367
        %2753 = vmatprep.subr.bf16.mxu0 0
        %2754 = vmatpush1.bf16.msra.mxu0 %v1364
        %2755 = vmatprep.subr.bf16.mxu0 0
        %2756 = vmatpush1.bf16.msra.mxu0 %v1361
        %2757 = vmatprep.subr.bf16.mxu0 0
        %2758 = vmatpush1.bf16.msra.mxu0 %v1358
        %2759 = vmatprep.subr.bf16.mxu0 0
        %2760 = vmatpush1.bf16.msra.mxu0 %v1355
        %2761 = vmatprep.subr.bf16.mxu0 0
        %2762 = vmatpush1.bf16.msra.mxu0 %v1352
        %2763 = vmatprep.subr.bf16.mxu0 0
        %2764 = vmatpush1.bf16.msra.mxu0 %v1349
        %2765 = vmatprep.subr.bf16.mxu0 0
        %2766 = vmatpush1.bf16.msra.mxu0 %v1346
        %2767 = vmatprep.subr.bf16.mxu0 0
        %2768 = vmatpush2.bf16.msra.mxu0 %v1391
        %2769 = vmatprep.subr.bf16.mxu0 0
        %2770 = vmatpush2.bf16.msra.mxu0 %v1388
        %2771 = vmatprep.subr.bf16.mxu0 0
        %2772 = vmatpush2.bf16.msra.mxu0 %v1385
        %2773 = vmatprep.subr.bf16.mxu0 0
        %2774 = vmatpush2.bf16.msra.mxu0 %v1382
        %2775 = vmatprep.subr.bf16.mxu0 0
        %2776 = vmatpush2.bf16.msra.mxu0 %v1379
        %2777 = vmatprep.subr.bf16.mxu0 0
        %2778 = vmatpush2.bf16.msra.mxu0 %v1376
        %2779 = vmatprep.subr.bf16.mxu0 0
        %2780 = vmatpush2.bf16.msra.mxu0 %v1373
        %2781 = vmatprep.subr.bf16.mxu0 0
        %2782 = vmatpush2.bf16.msra.mxu0 %v1370
        %2783 = vmatprep.mubr.bf16.mxu0 %v2454
        %2784 = vmatmul.mubr.bf16.gmra.mxu0 %v2453
        %v2785 = vpop.f32.mrf.mxu0
        %v2786 = vadd.f32 %v2746, %v2785
        %v2787 = vpop.f32.mrf.mxu0
        %v2788 = vpop.f32.mrf.mxu0
        %v2789 = vpop.f32.mrf.mxu0
        %2790 = vdwg.mxu0
        %v2791 = vld [vmem:[#allocation4] sm:$0x7]
        %2793 = vset.pattern.permute.xlu0 0
        %2794 = vperm.xlu0 %2793, %v2415
        %v2795 = vpop.permute.xlu0 %2794
        %v2797 = vlaneseq
        %v2798 = vshrl.u32 %v2797, 7
        %v2799 = vsub.s32 0, %v2798
        %v2800 = vrot.slane %v2795, %v2799
        %v2801 = vmul.f32 %v2800, %v2791
        %v2805 = vcombine.low %v2705, %v2707
        %v2807 = vunpack.c.l.s4 1966171168
        %v2808 = vunpack.c.0.s8 %v2807
        %v2809 = vlaneseq
        %v2810 = vshrl.u32 %v2809, 7
        %v2811 = vsub.s32 %v2808, %v2810
        %v2812 = vrot.slane %v2805, %v2811
        %v2814 = vunpack.c.l.s4 1966171168
        %v2815 = vunpack.c.0.s8 %v2814
        %v2816 = vlaneseq
        %v2817 = vshrl.u32 %v2816, 7
        %v2818 = vsub.s32 %v2815, %v2817
        %v2819 = vrot.slane %v2786, %v2818
        %v2820 = vcombine.low %v2812, %v2819
        %v2822 = vunpack.c.l.s4 1966171168
        %v2823 = vunpack.c.0.s8 %v2822
        %v2824 = vlaneseq
        %v2825 = vshrl.u32 %v2824, 7
        %v2826 = vsub.s32 %v2823, %v2825
        %v2827 = vrot.slane %v2820, %v2826
        %v2829 = vadd.f32 %v2801, %v2827
        %vm2830 = vcmp.lt.s32.totalorder %v2396, 384
        %vm2831 = vmand %vm2397, %vm2830
        %2832 = vst.msk [vmem:[#allocation4] sm:$0x7] %vm2831, %v2829
        %2833 = vst.msk [vmem:[#allocation2] sm:$0x1] %vm2449, %v2412
        %p2834 = scmp.eq.s32.totalorder %s30, 2
        // Predicated region
        $region73: #{tpu_custom_call.1} parent=47 // pred_check
          %p2835 = pneg %p2834
        $region74: #{tpu_custom_call.1} parent=47 // pred_check_branch
          %2837 = sbr.rel (%p2835) target = $region76
        $region75: #{tpu_custom_call.1} parent=47 // pred_region
          %v2838 = vld [vmem:[#allocation4] sm:$0x7]
          %v2839 = vld [vmem:[#allocation3] sm:$0x1]
          %2841 = vset.pattern.permute.xlu0 0
          %2842 = vperm.xlu0 %2841, %v2839
          %v2843 = vpop.permute.xlu0 %2842
          %v2845 = vlaneseq
          %v2846 = vshrl.u32 %v2845, 7
          %v2847 = vsub.s32 0, %v2846
          %v2848 = vrot.slane %v2843, %v2847
          %v2849 = vrcp.pop %v2848
          %v2850 = vmul.f32 %v2838, %v2849
          %v2851 = vld [vmem:[#allocation15] sm:$0x7]
          %v2852 = vmul.f32 %v2850, %v2851
          %v2854 = vlaneseq
          %v2855 = vshrl.u32 %v2854, 7
          %v2856 = vsub.s32 0, %v2855
          %v2857 = vrot.slane %v2852, %v2856
          %v2858 = vlaneseq
          %v2859 = vshrl.u32 %v2858, 7
          %v2860 = vsub.s32 1, %v2859
          %v2861 = vrot.slane %v2852, %v2860
          %v2862 = vlaneseq
          %v2863 = vshrl.u32 %v2862, 7
          %v2864 = vsub.s32 2, %v2863
          %v2865 = vrot.slane %v2852, %v2864
          %v2869 = vsel %vm2402, %v2857, 0.0
          %v2870 = vsel %vm2402, %v2861, 0.0
          %v2871 = vadd.f32 %v2869, %v2870
          %v2872 = vsel %vm2402, %v2865, 0.0
          %v2873 = vadd.f32 %v2871, %v2872
          %2874 = vadd.xlane.f32.xlu0 %v2873
          %v2875 = vpop.xlane.xlu0 %2874
          %s2876 = sld [smem:[#allocation6]]
          %v2877 = vstv %s2876
          %v2878 = vadd.f32 %v2875, %v2877
          %2879 = vst.msk [vmem:[#allocation16] sm:$0x1] %vm2449, %v2878
          %vm2880 = vcmp.ge.f32.partialorder %v2878, 0.0
          %v2881 = vsel %vm2880, 1, 0
          %v2882 = vcvt.s32.f32 %v2881
          %2883 = vst.msk [vmem:[#allocation17] sm:$0x1] %vm2449, %v2882
        $region76: #{tpu_custom_call.1} parent=47 // pred_fallthru
          _
        %s2884 = sand.u32 %s30, 1
        %s2885 = scalar_lea.sflag [#allocation9], %s2884
        %s2886 = sand.u32 %s232, 1
        %s2887 = smul.addr %s2886, 4
        %s2888 = scalar_lea.vmem [#allocation19], %s2887
        // Predicated region
        $region77: #{tpu_custom_call.1} parent=47 // pred_check
          %p2889 = pneg %p195
        $region78: #{tpu_custom_call.1} parent=47 // pred_check_branch
          %2891 = sbr.rel (%p2889) target = $region80
        $region79: #{tpu_custom_call.1} parent=47 // pred_region
          %s2893 = ssub.s32 16, 16
          %2894 = vsyncadd [#allocation9], %s2893
          %s2896 = sshll.u32 [#allocation16], 4
          %s2897 = int_to_ptr.vmem [resolvable:$true] %s2896
          %2899 = dma.vmem_to_hbm [thread:$0]  %s2897, 16, %s7, [#allocation9]
        $region80: #{tpu_custom_call.1} parent=47 // pred_fallthru
          _
        // Predicated region
        $region81: #{tpu_custom_call.1} parent=47 // pred_check
          %p2900 = pneg %p216
        $region82: #{tpu_custom_call.1} parent=47 // pred_check_branch
          %2902 = sbr.rel (%p2900) target = $region84
        $region83: #{tpu_custom_call.1} parent=47 // pred_region
          %s2904 = ssub.s32 16, 16
          %2905 = vsyncadd [#allocation18], %s2904
          %s2907 = sshll.u32 [#allocation17], 4
          %s2908 = int_to_ptr.vmem [resolvable:$true] %s2907
          %2910 = dma.vmem_to_hbm [thread:$0]  %s2908, 16, %s8, [#allocation18]
        $region84: #{tpu_custom_call.1} parent=47 // pred_fallthru
          _
        // Predicated region
        $region85: #{tpu_custom_call.1} parent=47 // pred_check
          %p2911 = pneg %p242
        $region86: #{tpu_custom_call.1} parent=47 // pred_check_branch
          %2913 = sbr.rel (%p2911) target = $region88
        $region87: #{tpu_custom_call.1} parent=47 // pred_region
          %s2914 = smul.u32 4, %s30
          %s2916 = ssub.s32 64, 64
          %2917 = vsyncadd %s2885, %s2916
          %s2918 = smul.addr %s2914, 16
          %s2919 = scalar_lea.hbm %s9, %s2918
          %s2921 = sshll.u32 %s2888, 4
          %s2922 = int_to_ptr.vmem [resolvable:$true] %s2921
          %2924 = dma.vmem_to_hbm [thread:$0]  %s2922, 64, %s2919, %s2885
        $region88: #{tpu_custom_call.1} parent=47 // pred_fallthru
          _
        // Predicated region
        $region89: #{tpu_custom_call.1} parent=47 // pred_check
          %p2925 = pneg %p195
        $region90: #{tpu_custom_call.1} parent=47 // pred_check_branch
          %2927 = sbr.rel (%p2925) target = $region92
        $region91: #{tpu_custom_call.1} parent=47 // pred_region
          %2928 = dma.done [#allocation9], 16
        $region92: #{tpu_custom_call.1} parent=47 // pred_fallthru
          _
        // Predicated region
        $region93: #{tpu_custom_call.1} parent=47 // pred_check
          %p2929 = pneg %p216
        $region94: #{tpu_custom_call.1} parent=47 // pred_check_branch
          %2931 = sbr.rel (%p2929) target = $region96
        $region95: #{tpu_custom_call.1} parent=47 // pred_region
          %2932 = dma.done [#allocation18], 16
        $region96: #{tpu_custom_call.1} parent=47 // pred_fallthru
          _
      $region48: #{tpu_custom_call.1} parent=5 // pred_fallthru
        _
      %p2933 = scmp.le.s32.totalorder 2, %s25
      // Predicated region
      $region97: #{tpu_custom_call.1} parent=5 // pred_check
        %p2934 = pneg %p2933
      $region98: #{tpu_custom_call.1} parent=5 // pred_check_branch
        %2936 = sbr.rel (%p2934) target = $region100
      $region99: #{tpu_custom_call.1} parent=5 // pred_region
        %s2937 = ssub.s32 %s25, 2
        // Predicated region
        $region101: #{tpu_custom_call.1} parent=99 // pred_check
          %p2938 = pneg %p248
        $region102: #{tpu_custom_call.1} parent=99 // pred_check_branch
          %2940 = sbr.rel (%p2938) target = $region104
        $region103: #{tpu_custom_call.1} parent=99 // pred_region
          %s2941 = sand.u32 %s31, 1
          %s2942 = scalar_lea.sflag [#allocation9], %s2941
          %s2943 = sand.u32 %s233, 1
          %s2944 = smul.addr %s2943, 4
          %s2945 = scalar_lea.vmem [#allocation19], %s2944
          %2946 = dma.done %s2942, 64
        $region104: #{tpu_custom_call.1} parent=99 // pred_fallthru
          _
      $region100: #{tpu_custom_call.1} parent=5 // pred_fallthru
        _
    $region6: #{tpu_custom_call.1} parent=1 // loop_footer
      %s29 = sadd.s32 1, %s25
    $region7: #{tpu_custom_call.1} parent=1 // loop_footer_branch
      %24 = sbr.rel target = $region3
    $region8: #{tpu_custom_call.1} parent=1 // loop_exit
      _
    %2947 = vsyncpa [#allocation8], 1
    %s2948 = scalar_lea.sflag [#allocation8], 1
    %2949 = vsyncpa %s2948, 1
    %2950 = vsyncpa [#allocation11], 1
    %2951 = vsyncpa [#allocation14], 1
    %2952 = vsyncpa [#allocation9], 1
    %s2953 = scalar_lea.sflag [#allocation9], 1
    %2954 = vsyncpa %s2953, 1
    %2955 = vsyncpa [#allocation18], 1

</llo_original>
